<compile_context>
chip_gen: v7x
topology: tpu7x:2x2x1
jax: 0.10.0
libtpu: 0.0.40
codegen_flags: <defaults>
</compile_context>

<pallas_src>
import numpy as np
import jax
import jax.numpy as jnp
from jax.experimental import pallas as pl
from jax.experimental.pallas import tpu as pltpu


def _layernorm(y, eps=1e-5):
    # nn.LayerNorm(d_model) freshly constructed each forward -> weight=1, bias=0,
    # biased variance, eps=1e-5.
    mu = jnp.mean(y, axis=-1, keepdims=True)
    var = jnp.mean((y - mu) ** 2, axis=-1, keepdims=True)
    return (y - mu) * jax.lax.rsqrt(var + eps)


def _encoder_layer_kernel(x_ref, mask_ref, wq_ref, wk_ref, wv_ref, wo_ref,
                          w1_ref, w2_ref, out_ref, attn_ref):
    B, S, D = x_ref.shape
    H, _, dk = wq_ref.shape
    BH = B * H
    BS = B * S

    x3 = x_ref[...].astype(jnp.float32)            # (B, S, D)
    x2 = x3.reshape(BS, D)                         # leading-dim merge only

    # ---- Multi-head attention: one batched contraction per step over a fused
    # (batch*head) axis.  Broadcasts / leading-dim reshapes only (no relayouts).
    xb = jnp.broadcast_to(x3[:, None], (B, H, S, D)).reshape(BH, S, D)

    def _bh(w):                                    # (H, ...) -> (B*H, ...)
        return jnp.broadcast_to(w[None], (B,) + w.shape).reshape((BH,) + w.shape[1:])

    wq = _bh(wq_ref[...])                          # (BH, D, dk)
    wk = _bh(wk_ref[...])
    wv = _bh(wv_ref[...])
    wo = _bh(wo_ref[...])                          # (BH, dk, D)

    q = jnp.einsum('bsd,bdk->bsk', xb, wq, preferred_element_type=jnp.float32)  # (BH,S,dk)
    k = jnp.einsum('bsd,bdk->bsk', xb, wk, preferred_element_type=jnp.float32)
    v = jnp.einsum('bsd,bdk->bsk', xb, wv, preferred_element_type=jnp.float32)

    scale = jnp.float32(1.0 / np.sqrt(dk))
    scores = jnp.einsum('bqd,bkd->bqk', q, k,
                        preferred_element_type=jnp.float32) * scale             # (BH,S,S)

    mask = mask_ref[...].astype(jnp.int32)                                       # (B,S,S)
    maskb = jnp.broadcast_to(mask[:, None], (B, H, S, S)).reshape(BH, S, S)
    scores = jnp.where(maskb != 0, jnp.float32(-1e9), scores)

    # Numerically stable softmax over keys (exact reciprocal -- see header note).
    scores = scores - jnp.max(scores, axis=-1, keepdims=True)
    e = jnp.exp(scores)
    attn = e * pl.reciprocal(jnp.sum(e, axis=-1, keepdims=True), approx=False)

    attn_ref[...] = attn.reshape(B, H, S, S)       # single store of the attention map

    ctx = jnp.einsum('bqk,bkd->bqd', attn, v, preferred_element_type=jnp.float32)   # (BH,S,dk)
    # Per-head output projection, then sum over heads == concat(ctx) @ W_O.
    proj = jnp.einsum('bsd,bdk->bsk', ctx, wo, preferred_element_type=jnp.float32)  # (BH,S,D)
    attn_out = jnp.sum(proj.reshape(B, H, S, D), axis=1).reshape(BS, D)              # (BS,D)

    # Residual + LayerNorm (attention sub-layer), on (B*S, D) rows.
    y1 = _layernorm(attn_out + x2)

    # ---- Position-wise FFN: Linear -> ReLU -> Linear (no bias), batch folded
    # into the MXU rows.
    h1 = jnp.maximum(jnp.dot(y1, w1_ref[...], preferred_element_type=jnp.float32), 0.0)
    ffn = jnp.dot(h1, w2_ref[...], preferred_element_type=jnp.float32)

    # Residual + LayerNorm (FFN sub-layer).
    out_ref[...] = _layernorm(ffn + y1).reshape(B, S, D).astype(out_ref.dtype)


def encoder_layer(x, attn_mask, wq, wk, wv, wo, w1, w2, *, n_heads, d_k):
    """x: (B, S, d_model) f32; attn_mask: (B, S, S) bool (True == masked)."""
    B, S, D = x.shape
    d_ff = w1.shape[1]
    H = n_heads

    # Per-head weight layouts, built in plain XLA (free) so the kernel never
    # has to transpose / relayout.
    wq_h = wq.reshape(D, H, d_k).transpose(1, 0, 2)    # (H, D, d_k)
    wk_h = wk.reshape(D, H, d_k).transpose(1, 0, 2)
    wv_h = wv.reshape(D, H, d_k).transpose(1, 0, 2)
    wo_h = wo.reshape(H, d_k, D)                       # (H, d_k, D)

    mask_i8 = attn_mask.astype(jnp.int8)               # 4x less HBM traffic than f32

    out_shape = (
        jax.ShapeDtypeStruct((B, S, D), jnp.float32),            # enc_outputs
        jax.ShapeDtypeStruct((B, H, S, S), jnp.float32),         # attn (module returns it)
    )
    grid_spec = pltpu.PrefetchScalarGridSpec(
        num_scalar_prefetch=0,
        grid=(1,),                                     # whole batch in one step
        in_specs=[
            pl.BlockSpec((B, S, D), lambda i: (0, 0, 0)),        # x
            pl.BlockSpec((B, S, S), lambda i: (0, 0, 0)),        # mask (int8)
            pl.BlockSpec((H, D, d_k), lambda i: (0, 0, 0)),      # W_Q per head
            pl.BlockSpec((H, D, d_k), lambda i: (0, 0, 0)),      # W_K per head
            pl.BlockSpec((H, D, d_k), lambda i: (0, 0, 0)),      # W_V per head
            pl.BlockSpec((H, d_k, D), lambda i: (0, 0, 0)),      # fc (output proj) per head
            pl.BlockSpec((D, d_ff), lambda i: (0, 0)),           # ffn W1
            pl.BlockSpec((d_ff, D), lambda i: (0, 0)),           # ffn W2
        ],
        out_specs=[
            pl.BlockSpec((B, S, D), lambda i: (0, 0, 0)),
            pl.BlockSpec((B, H, S, S), lambda i: (0, 0, 0, 0)),
        ],
    )
    return pl.pallas_call(
        _encoder_layer_kernel,
        out_shape=out_shape,
        grid_spec=grid_spec,
        compiler_params=pltpu.CompilerParams(dimension_semantics=("arbitrary",)),
    )(x, mask_i8, wq_h, wk_h, wv_h, wo_h, w1, w2)


def _reference(x, attn_mask, wq, wk, wv, wo, w1, w2, *, n_heads, d_k):
    """Plain-JAX replica of the PyTorch forward for verification."""
    B, S, D = x.shape
    q = (x @ wq).reshape(B, S, n_heads, d_k).transpose(0, 2, 1, 3)
    k = (x @ wk).reshape(B, S, n_heads, d_k).transpose(0, 2, 1, 3)
    v = (x @ wv).reshape(B, S, n_heads, d_k).transpose(0, 2, 1, 3)
    scores = jnp.einsum("bhqd,bhkd->bhqk", q, k) / np.sqrt(d_k)
    scores = jnp.where(attn_mask[:, None, :, :], -1e9, scores)
    attn = jax.nn.softmax(scores, axis=-1)
    ctx = jnp.einsum("bhqk,bhkd->bhqd", attn, v)
    ctx = ctx.transpose(0, 2, 1, 3).reshape(B, S, n_heads * d_k)
    y1 = _layernorm(ctx @ wo + x)
    ffn = jnp.maximum(y1 @ w1, 0.0) @ w2
    return _layernorm(ffn + y1), attn


if __name__ == "__main__":
    B, S = 2, 8
    d_model, d_ff, d_k, n_heads = 32, 64, 8, 4

    key = jax.random.PRNGKey(0)
    kx, kq, kk, kv, ko, k1, k2 = jax.random.split(key, 7)

    def _linear_w(k, fan_in, fan_out):
        # nn.Linear default init (kaiming uniform), stored as (in, out) so y = x @ W.
        bound = 1.0 / np.sqrt(fan_in)
        return jax.random.uniform(k, (fan_in, fan_out), jnp.float32, -bound, bound)

    x = jax.random.normal(kx, (B, S, d_model), jnp.float32)
    wq = _linear_w(kq, d_model, n_heads * d_k)
    wk = _linear_w(kk, d_model, n_heads * d_k)
    wv = _linear_w(kv, d_model, n_heads * d_k)
    wo = _linear_w(ko, n_heads * d_k, d_model)
    w1 = _linear_w(k1, d_model, d_ff)
    w2 = _linear_w(k2, d_ff, d_model)

    # Padding-style mask: last two key positions of batch 1 are masked.
    mask = np.zeros((B, S, S), dtype=bool)
    mask[1, :, S - 2:] = True
    mask = jnp.asarray(mask)

    enc_out, attn = encoder_layer(x, mask, wq, wk, wv, wo, w1, w2,
                                  n_heads=n_heads, d_k=d_k)
    enc_out = jax.block_until_ready(enc_out)
    attn = jax.block_until_ready(attn)

    ref_out, ref_attn = _reference(x, mask, wq, wk, wv, wo, w1, w2,
                                   n_heads=n_heads, d_k=d_k)
    assert enc_out.shape == (B, S, d_model)
    assert attn.shape == (B, n_heads, S, S)
    np.testing.assert_allclose(np.asarray(enc_out), np.asarray(ref_out),
                               rtol=1e-4, atol=1e-4)
    np.testing.assert_allclose(np.asarray(attn), np.asarray(ref_attn),
                               rtol=1e-4, atol=1e-4)
    print("KERNEL_OK")
</pallas_src>

<mosaic_0001>
module attributes {stable_mosaic.version = 11 : i64} {
  func.func @_encoder_layer_kernel(%arg0: i32, %arg1: memref<2x8x32xf32, #tpu.memory_space<vmem>>, %arg2: memref<2x8x8xi8, #tpu.memory_space<vmem>>, %arg3: memref<4x32x8xf32, #tpu.memory_space<vmem>>, %arg4: memref<4x32x8xf32, #tpu.memory_space<vmem>>, %arg5: memref<4x32x8xf32, #tpu.memory_space<vmem>>, %arg6: memref<4x8x32xf32, #tpu.memory_space<vmem>>, %arg7: memref<32x64xf32, #tpu.memory_space<vmem>>, %arg8: memref<64x32xf32, #tpu.memory_space<vmem>>, %arg9: memref<2x8x32xf32, #tpu.memory_space<vmem>>, %arg10: memref<2x4x8x8xf32, #tpu.memory_space<vmem>>) attributes {dimension_semantics = [#tpu.dimension_semantics<arbitrary>], iteration_bounds = array<i64: 1>, scalar_prefetch = 0 : i64, scratch_operands = 0 : i64, tpu.core_type = #tpu.core_type<tc>, window_params = [{pipeline_mode = #tpu.pipeline_mode<synchronous>, transform_indices = @transform_0, window_bounds = array<i64: 2, 8, 32>}, {pipeline_mode = #tpu.pipeline_mode<synchronous>, transform_indices = @transform_1, window_bounds = array<i64: 2, 8, 8>}, {pipeline_mode = #tpu.pipeline_mode<synchronous>, transform_indices = @transform_2, window_bounds = array<i64: 4, 32, 8>}, {pipeline_mode = #tpu.pipeline_mode<synchronous>, transform_indices = @transform_3, window_bounds = array<i64: 4, 32, 8>}, {pipeline_mode = #tpu.pipeline_mode<synchronous>, transform_indices = @transform_4, window_bounds = array<i64: 4, 32, 8>}, {pipeline_mode = #tpu.pipeline_mode<synchronous>, transform_indices = @transform_5, window_bounds = array<i64: 4, 8, 32>}, {pipeline_mode = #tpu.pipeline_mode<synchronous>, transform_indices = @transform_6, window_bounds = array<i64: 32, 64>}, {pipeline_mode = #tpu.pipeline_mode<synchronous>, transform_indices = @transform_7, window_bounds = array<i64: 64, 32>}, {pipeline_mode = #tpu.pipeline_mode<synchronous>, transform_indices = @transform_8, window_bounds = array<i64: 2, 8, 32>}, {pipeline_mode = #tpu.pipeline_mode<synchronous>, transform_indices = @transform_9, window_bounds = array<i64: 2, 4, 8, 8>}]} {
    %c0 = arith.constant 0 : index
    %c0_0 = arith.constant 0 : index
    %c0_1 = arith.constant 0 : index
    %0 = vector.load %arg1[%c0, %c0_0, %c0_1] : memref<2x8x32xf32, #tpu.memory_space<vmem>>, vector<2x8x32xf32>
    %1 = vector.shape_cast %0 : vector<2x8x32xf32> to vector<16x32xf32>
    %2 = vector.shape_cast %0 : vector<2x8x32xf32> to vector<2x1x8x32xf32>
    %3 = vector.shape_cast %2 : vector<2x1x8x32xf32> to vector<2x1x8x32xf32>
    %4 = vector.broadcast %3 : vector<2x1x8x32xf32> to vector<2x4x8x32xf32>
    %5 = vector.shape_cast %4 : vector<2x4x8x32xf32> to vector<8x8x32xf32>
    %c0_2 = arith.constant 0 : index
    %c0_3 = arith.constant 0 : index
    %c0_4 = arith.constant 0 : index
    %6 = vector.load %arg3[%c0_2, %c0_3, %c0_4] : memref<4x32x8xf32, #tpu.memory_space<vmem>>, vector<4x32x8xf32>
    %7 = vector.shape_cast %6 : vector<4x32x8xf32> to vector<1x4x32x8xf32>
    %8 = vector.shape_cast %7 : vector<1x4x32x8xf32> to vector<1x4x32x8xf32>
    %9 = vector.broadcast %8 : vector<1x4x32x8xf32> to vector<2x4x32x8xf32>
    %10 = vector.shape_cast %9 : vector<2x4x32x8xf32> to vector<8x32x8xf32>
    %c0_5 = arith.constant 0 : index
    %c0_6 = arith.constant 0 : index
    %c0_7 = arith.constant 0 : index
    %11 = vector.load %arg4[%c0_5, %c0_6, %c0_7] : memref<4x32x8xf32, #tpu.memory_space<vmem>>, vector<4x32x8xf32>
    %12 = vector.shape_cast %11 : vector<4x32x8xf32> to vector<1x4x32x8xf32>
    %13 = vector.shape_cast %12 : vector<1x4x32x8xf32> to vector<1x4x32x8xf32>
    %14 = vector.broadcast %13 : vector<1x4x32x8xf32> to vector<2x4x32x8xf32>
    %15 = vector.shape_cast %14 : vector<2x4x32x8xf32> to vector<8x32x8xf32>
    %c0_8 = arith.constant 0 : index
    %c0_9 = arith.constant 0 : index
    %c0_10 = arith.constant 0 : index
    %16 = vector.load %arg5[%c0_8, %c0_9, %c0_10] : memref<4x32x8xf32, #tpu.memory_space<vmem>>, vector<4x32x8xf32>
    %17 = vector.shape_cast %16 : vector<4x32x8xf32> to vector<1x4x32x8xf32>
    %18 = vector.shape_cast %17 : vector<1x4x32x8xf32> to vector<1x4x32x8xf32>
    %19 = vector.broadcast %18 : vector<1x4x32x8xf32> to vector<2x4x32x8xf32>
    %20 = vector.shape_cast %19 : vector<2x4x32x8xf32> to vector<8x32x8xf32>
    %c0_11 = arith.constant 0 : index
    %c0_12 = arith.constant 0 : index
    %c0_13 = arith.constant 0 : index
    %21 = vector.load %arg6[%c0_11, %c0_12, %c0_13] : memref<4x8x32xf32, #tpu.memory_space<vmem>>, vector<4x8x32xf32>
    %22 = vector.shape_cast %21 : vector<4x8x32xf32> to vector<1x4x8x32xf32>
    %23 = vector.shape_cast %22 : vector<1x4x8x32xf32> to vector<1x4x8x32xf32>
    %24 = vector.broadcast %23 : vector<1x4x8x32xf32> to vector<2x4x8x32xf32>
    %25 = vector.shape_cast %24 : vector<2x4x8x32xf32> to vector<8x8x32xf32>
    "tpu.trace_start"() <{level = 10 : i32, message = "bsd,bdk->bsk"}> : () -> ()
    %cst = arith.constant dense<0.000000e+00> : vector<8x8x8xf32>
    %26 = tpu.matmul %5, %10, %cst {dimension_numbers = #tpu.dot_dimension_numbers<[2], [1], [1], [2], [0, 0, 0, 1, 1, 2], [0], [0]>} : vector<8x8x32xf32>, vector<8x32x8xf32>, vector<8x8x8xf32> -> vector<8x8x8xf32>
    %cst_14 = arith.constant dense<0.000000e+00> : vector<8x8x8xf32>
    %27 = tpu.matmul %5, %15, %cst_14 {dimension_numbers = #tpu.dot_dimension_numbers<[2], [1], [1], [2], [0, 0, 0, 1, 1, 2], [0], [0]>} : vector<8x8x32xf32>, vector<8x32x8xf32>, vector<8x8x8xf32> -> vector<8x8x8xf32>
    %cst_15 = arith.constant dense<0.000000e+00> : vector<8x8x8xf32>
    %28 = tpu.matmul %5, %20, %cst_15 {dimension_numbers = #tpu.dot_dimension_numbers<[2], [1], [1], [2], [0, 0, 0, 1, 1, 2], [0], [0]>} : vector<8x8x32xf32>, vector<8x32x8xf32>, vector<8x8x8xf32> -> vector<8x8x8xf32>
    "tpu.trace_stop"() : () -> ()
    "tpu.trace_start"() <{level = 10 : i32, message = "bqd,bkd->bqk"}> : () -> ()
    %cst_16 = arith.constant dense<0.000000e+00> : vector<8x8x8xf32>
    %29 = tpu.matmul %26, %27, %cst_16 {dimension_numbers = #tpu.dot_dimension_numbers<[2], [2], [1], [1], [0, 0, 0, 1, 1, 1], [0], [0]>} : vector<8x8x8xf32>, vector<8x8x8xf32>, vector<8x8x8xf32> -> vector<8x8x8xf32>
    "tpu.trace_stop"() : () -> ()
    %cst_17 = arith.constant 0.353553385 : f32
    %30 = vector.broadcast %cst_17 : f32 to vector<8x8x8xf32>
    %31 = arith.mulf %29, %30 : vector<8x8x8xf32>
    %c0_18 = arith.constant 0 : index
    %c0_19 = arith.constant 0 : index
    %c0_20 = arith.constant 0 : index
    %32 = vector.load %arg2[%c0_18, %c0_19, %c0_20] : memref<2x8x8xi8, #tpu.memory_space<vmem>>, vector<2x8x8xi8>
    %33 = arith.extsi %32 : vector<2x8x8xi8> to vector<2x8x8xi32>
    %34 = vector.shape_cast %33 : vector<2x8x8xi32> to vector<2x1x8x8xi32>
    %35 = vector.shape_cast %34 : vector<2x1x8x8xi32> to vector<2x1x8x8xi32>
    %36 = vector.broadcast %35 : vector<2x1x8x8xi32> to vector<2x4x8x8xi32>
    %37 = vector.shape_cast %36 : vector<2x4x8x8xi32> to vector<8x8x8xi32>
    %c0_i32 = arith.constant 0 : i32
    %38 = vector.broadcast %c0_i32 : i32 to vector<8x8x8xi32>
    %39 = arith.cmpi ne, %37, %38 : vector<8x8x8xi32>
    %cst_21 = arith.constant -1.000000e+09 : f32
    %40 = vector.broadcast %cst_21 : f32 to vector<8x8x8xf32>
    %41 = arith.select %39, %40, %31 : vector<8x8x8xi1>, vector<8x8x8xf32>
    %cst_22 = arith.constant dense<0xFF800000> : vector<8x8xf32>
    %42 = vector.multi_reduction <maximumf>, %41, %cst_22 [2] : vector<8x8x8xf32> to vector<8x8xf32>
    %43 = vector.shape_cast %42 : vector<8x8xf32> to vector<8x8x1xf32>
    %44 = vector.broadcast %43 : vector<8x8x1xf32> to vector<8x8x8xf32>
    %45 = arith.subf %41, %44 : vector<8x8x8xf32>
    %46 = math.exp %45 : vector<8x8x8xf32>
    %cst_23 = arith.constant dense<0.000000e+00> : vector<8x8xf32>
    %47 = vector.multi_reduction <add>, %46, %cst_23 [2] : vector<8x8x8xf32> to vector<8x8xf32>
    %48 = vector.shape_cast %47 : vector<8x8xf32> to vector<8x8x1xf32>
    %49 = tpu.reciprocal %48 : vector<8x8x1xf32> -> vector<8x8x1xf32>
    %50 = vector.broadcast %49 : vector<8x8x1xf32> to vector<8x8x8xf32>
    %51 = arith.mulf %46, %50 : vector<8x8x8xf32>
    %52 = vector.shape_cast %51 : vector<8x8x8xf32> to vector<2x4x8x8xf32>
    %c0_24 = arith.constant 0 : index
    %c0_25 = arith.constant 0 : index
    %c0_26 = arith.constant 0 : index
    %c0_27 = arith.constant 0 : index
    %53 = vector.load %arg10[%c0_24, %c0_25, %c0_26, %c0_27] : memref<2x4x8x8xf32, #tpu.memory_space<vmem>>, vector<2x4x8x8xf32>
    tpu.vector_store %arg10[%c0_24, %c0_25, %c0_26, %c0_27], %52 {strides = array<i32>} : memref<2x4x8x8xf32, #tpu.memory_space<vmem>>, vector<2x4x8x8xf32>,
    "tpu.trace_start"() <{level = 10 : i32, message = "bqk,bkd->bqd"}> : () -> ()
    %cst_28 = arith.constant dense<0.000000e+00> : vector<8x8x8xf32>
    %54 = tpu.matmul %51, %28, %cst_28 {dimension_numbers = #tpu.dot_dimension_numbers<[2], [1], [1], [2], [0, 0, 0, 1, 1, 2], [0], [0]>} : vector<8x8x8xf32>, vector<8x8x8xf32>, vector<8x8x8xf32> -> vector<8x8x8xf32>
    "tpu.trace_stop"() : () -> ()
    "tpu.trace_start"() <{level = 10 : i32, message = "bsd,bdk->bsk"}> : () -> ()
    %cst_29 = arith.constant dense<0.000000e+00> : vector<8x8x32xf32>
    %55 = tpu.matmul %54, %25, %cst_29 {dimension_numbers = #tpu.dot_dimension_numbers<[2], [1], [1], [2], [0, 0, 0, 1, 1, 2], [0], [0]>} : vector<8x8x8xf32>, vector<8x8x32xf32>, vector<8x8x32xf32> -> vector<8x8x32xf32>
    "tpu.trace_stop"() : () -> ()
    %56 = vector.shape_cast %55 : vector<8x8x32xf32> to vector<2x4x8x32xf32>
    %cst_30 = arith.constant dense<0.000000e+00> : vector<2x8x32xf32>
    %57 = vector.multi_reduction <add>, %56, %cst_30 [1] : vector<2x4x8x32xf32> to vector<2x8x32xf32>
    %58 = vector.shape_cast %57 : vector<2x8x32xf32> to vector<16x32xf32>
    %59 = arith.addf %58, %1 : vector<16x32xf32>
    %cst_31 = arith.constant dense<0.000000e+00> : vector<16xf32>
    %60 = vector.multi_reduction <add>, %59, %cst_31 [1] : vector<16x32xf32> to vector<16xf32>
    %61 = vector.shape_cast %60 : vector<16xf32> to vector<16x1xf32>
    %cst_32 = arith.constant 3.200000e+01 : f32
    %62 = vector.broadcast %cst_32 : f32 to vector<16x1xf32>
    %63 = arith.divf %61, %62 : vector<16x1xf32>
    %64 = vector.broadcast %63 : vector<16x1xf32> to vector<16x32xf32>
    %65 = arith.subf %59, %64 : vector<16x32xf32>
    %66 = arith.mulf %65, %65 : vector<16x32xf32>
    %cst_33 = arith.constant dense<0.000000e+00> : vector<16xf32>
    %67 = vector.multi_reduction <add>, %66, %cst_33 [1] : vector<16x32xf32> to vector<16xf32>
    %68 = vector.shape_cast %67 : vector<16xf32> to vector<16x1xf32>
    %cst_34 = arith.constant 3.200000e+01 : f32
    %69 = vector.broadcast %cst_34 : f32 to vector<16x1xf32>
    %70 = arith.divf %68, %69 : vector<16x1xf32>
    %71 = vector.broadcast %63 : vector<16x1xf32> to vector<16x32xf32>
    %72 = arith.subf %59, %71 : vector<16x32xf32>
    %cst_35 = arith.constant 9.99999974E-6 : f32
    %73 = vector.broadcast %cst_35 : f32 to vector<16x1xf32>
    %74 = arith.addf %70, %73 : vector<16x1xf32>
    %75 = math.rsqrt %74 : vector<16x1xf32>
    %76 = vector.broadcast %75 : vector<16x1xf32> to vector<16x32xf32>
    %77 = arith.mulf %72, %76 : vector<16x32xf32>
    %c0_36 = arith.constant 0 : index
    %c0_37 = arith.constant 0 : index
    %78 = vector.load %arg7[%c0_36, %c0_37] : memref<32x64xf32, #tpu.memory_space<vmem>>, vector<32x64xf32>
    %cst_38 = arith.constant dense<0.000000e+00> : vector<16x64xf32>
    %79 = tpu.matmul %77, %78, %cst_38 {dimension_numbers = #tpu.dot_dimension_numbers<[1], [0], [0], [1], [0, 0, 1, 1], [], []>} : vector<16x32xf32>, vector<32x64xf32>, vector<16x64xf32> -> vector<16x64xf32>
    %cst_39 = arith.constant 0.000000e+00 : f32
    %80 = vector.broadcast %cst_39 : f32 to vector<16x64xf32>
    %81 = arith.maximumf %79, %80 : vector<16x64xf32>
    %c0_40 = arith.constant 0 : index
    %c0_41 = arith.constant 0 : index
    %82 = vector.load %arg8[%c0_40, %c0_41] : memref<64x32xf32, #tpu.memory_space<vmem>>, vector<64x32xf32>
    %cst_42 = arith.constant dense<0.000000e+00> : vector<16x32xf32>
    %83 = tpu.matmul %81, %82, %cst_42 {dimension_numbers = #tpu.dot_dimension_numbers<[1], [0], [0], [1], [0, 0, 1, 1], [], []>} : vector<16x64xf32>, vector<64x32xf32>, vector<16x32xf32> -> vector<16x32xf32>
    %84 = arith.addf %83, %77 : vector<16x32xf32>
    %cst_43 = arith.constant dense<0.000000e+00> : vector<16xf32>
    %85 = vector.multi_reduction <add>, %84, %cst_43 [1] : vector<16x32xf32> to vector<16xf32>
    %86 = vector.shape_cast %85 : vector<16xf32> to vector<16x1xf32>
    %cst_44 = arith.constant 3.200000e+01 : f32
    %87 = vector.broadcast %cst_44 : f32 to vector<16x1xf32>
    %88 = arith.divf %86, %87 : vector<16x1xf32>
    %89 = vector.broadcast %88 : vector<16x1xf32> to vector<16x32xf32>
    %90 = arith.subf %84, %89 : vector<16x32xf32>
    %91 = arith.mulf %90, %90 : vector<16x32xf32>
    %cst_45 = arith.constant dense<0.000000e+00> : vector<16xf32>
    %92 = vector.multi_reduction <add>, %91, %cst_45 [1] : vector<16x32xf32> to vector<16xf32>
    %93 = vector.shape_cast %92 : vector<16xf32> to vector<16x1xf32>
    %cst_46 = arith.constant 3.200000e+01 : f32
    %94 = vector.broadcast %cst_46 : f32 to vector<16x1xf32>
    %95 = arith.divf %93, %94 : vector<16x1xf32>
    %96 = vector.broadcast %88 : vector<16x1xf32> to vector<16x32xf32>
    %97 = arith.subf %84, %96 : vector<16x32xf32>
    %cst_47 = arith.constant 9.99999974E-6 : f32
    %98 = vector.broadcast %cst_47 : f32 to vector<16x1xf32>
    %99 = arith.addf %95, %98 : vector<16x1xf32>
    %100 = math.rsqrt %99 : vector<16x1xf32>
    %101 = vector.broadcast %100 : vector<16x1xf32> to vector<16x32xf32>
    %102 = arith.mulf %97, %101 : vector<16x32xf32>
    %103 = vector.shape_cast %102 : vector<16x32xf32> to vector<2x8x32xf32>
    %c0_48 = arith.constant 0 : index
    %c0_49 = arith.constant 0 : index
    %c0_50 = arith.constant 0 : index
    %104 = vector.load %arg9[%c0_48, %c0_49, %c0_50] : memref<2x8x32xf32, #tpu.memory_space<vmem>>, vector<2x8x32xf32>
    tpu.vector_store %arg9[%c0_48, %c0_49, %c0_50], %103 {strides = array<i32>} : memref<2x8x32xf32, #tpu.memory_space<vmem>>, vector<2x8x32xf32>,
    return
  }
  func.func @transform_0(%arg0: i32) -> (i32, i32, i32) {
    %c0_i32 = arith.constant 0 : i32
    %c0_i32_0 = arith.constant 0 : i32
    %c0_i32_1 = arith.constant 0 : i32
    %c0_i32_2 = arith.constant 0 : i32
    return %c0_i32, %c0_i32_0, %c0_i32_1 : i32, i32, i32
  }
  func.func @transform_1(%arg0: i32) -> (i32, i32, i32) {
    %c0_i32 = arith.constant 0 : i32
    %c0_i32_0 = arith.constant 0 : i32
    %c0_i32_1 = arith.constant 0 : i32
    %c0_i32_2 = arith.constant 0 : i32
    return %c0_i32, %c0_i32_0, %c0_i32_1 : i32, i32, i32
  }
  func.func @transform_2(%arg0: i32) -> (i32, i32, i32) {
    %c0_i32 = arith.constant 0 : i32
    %c0_i32_0 = arith.constant 0 : i32
    %c0_i32_1 = arith.constant 0 : i32
    %c0_i32_2 = arith.constant 0 : i32
    return %c0_i32, %c0_i32_0, %c0_i32_1 : i32, i32, i32
  }
  func.func @transform_3(%arg0: i32) -> (i32, i32, i32) {
    %c0_i32 = arith.constant 0 : i32
    %c0_i32_0 = arith.constant 0 : i32
    %c0_i32_1 = arith.constant 0 : i32
    %c0_i32_2 = arith.constant 0 : i32
    return %c0_i32, %c0_i32_0, %c0_i32_1 : i32, i32, i32
  }
  func.func @transform_4(%arg0: i32) -> (i32, i32, i32) {
    %c0_i32 = arith.constant 0 : i32
    %c0_i32_0 = arith.constant 0 : i32
    %c0_i32_1 = arith.constant 0 : i32
    %c0_i32_2 = arith.constant 0 : i32
    return %c0_i32, %c0_i32_0, %c0_i32_1 : i32, i32, i32
  }
  func.func @transform_5(%arg0: i32) -> (i32, i32, i32) {
    %c0_i32 = arith.constant 0 : i32
    %c0_i32_0 = arith.constant 0 : i32
    %c0_i32_1 = arith.constant 0 : i32
    %c0_i32_2 = arith.constant 0 : i32
    return %c0_i32, %c0_i32_0, %c0_i32_1 : i32, i32, i32
  }
  func.func @transform_6(%arg0: i32) -> (i32, i32) {
    %c0_i32 = arith.constant 0 : i32
    %c0_i32_0 = arith.constant 0 : i32
    %c0_i32_1 = arith.constant 0 : i32
    return %c0_i32, %c0_i32_0 : i32, i32
  }
  func.func @transform_7(%arg0: i32) -> (i32, i32) {
    %c0_i32 = arith.constant 0 : i32
    %c0_i32_0 = arith.constant 0 : i32
    %c0_i32_1 = arith.constant 0 : i32
    return %c0_i32, %c0_i32_0 : i32, i32
  }
  func.func @transform_8(%arg0: i32) -> (i32, i32, i32) {
    %c0_i32 = arith.constant 0 : i32
    %c0_i32_0 = arith.constant 0 : i32
    %c0_i32_1 = arith.constant 0 : i32
    %c0_i32_2 = arith.constant 0 : i32
    return %c0_i32, %c0_i32_0, %c0_i32_1 : i32, i32, i32
  }
  func.func @transform_9(%arg0: i32) -> (i32, i32, i32, i32) {
    %c0_i32 = arith.constant 0 : i32
    %c0_i32_0 = arith.constant 0 : i32
    %c0_i32_1 = arith.constant 0 : i32
    %c0_i32_2 = arith.constant 0 : i32
    %c0_i32_3 = arith.constant 0 : i32
    return %c0_i32, %c0_i32_0, %c0_i32_1, %c0_i32_2 : i32, i32, i32, i32
  }
}

</mosaic_0001>

<llo_original>
// kernel: tpu_custom_call.1
$region0: #{tpu_custom_call.1}
  #allocation0 [shape = 'u32[]', space=smem, size = 0x4, offset = 0x4, fixed_abs, tag = 'smem constant byte address 0x4 - core index']
  #allocation1 [shape = 'u32[144,128]{1,0:T(1,128)}', space=vmem, size = 0x12000, scoped, tag = 'internal scratch']
  %s0 = inlined_call_operand.vmem [shape: f32[2,8,32], index: 0, kind: input, shape index: {}]
  %s1 = inlined_call_operand.vmem [shape: s8[2,8,8], index: 1, kind: input, shape index: {}]
  %s2 = inlined_call_operand.vmem [shape: f32[4,32,8], index: 2, kind: input, shape index: {}]
  %s3 = inlined_call_operand.vmem [shape: f32[4,32,8], index: 3, kind: input, shape index: {}]
  %s4 = inlined_call_operand.vmem [shape: f32[4,32,8], index: 4, kind: input, shape index: {}]
  %s5 = inlined_call_operand.vmem [shape: f32[4,8,32], index: 5, kind: input, shape index: {}]
  %s6 = inlined_call_operand.vmem [shape: f32[32,64], index: 6, kind: input, shape index: {}]
  %s7 = inlined_call_operand.vmem [shape: f32[64,32], index: 7, kind: input, shape index: {}]
  %s8 = inlined_call_operand.hbm [shape: f32[2,8,32], index: 8, kind: output, shape index: {0}]
  %s9 = inlined_call_operand.hbm [shape: f32[2,4,8,8], index: 9, kind: output, shape index: {1}]
  %10 = xla_tuple %s8, %s9
  %s11 = sld [smem:[#allocation0]]
  $region50: #{tpu_custom_call.1} parent=0
    _
  %s13 = ssub.s32 1, %s11
  %s14 = scalar_select 0, %s13, %s11
  $region1: #{tpu_custom_call.1} parent=0
    #allocation2 [shape = 'u8[8192]{0}', space=vmem, size = 0x2000, scoped, tag = 'output window, operand 0, single buffered']
    #allocation3 [shape = 's32[1]{0}', space=sflag, size = 0x4, scoped, tag = 'scoped memory for tpu_custom_call.1']
    #allocation4 [shape = 'u8[32768]{0}', space=vmem, size = 0x8000, scoped, tag = 'output window, operand 1, single buffered']
    #allocation5 [shape = 's32[1]{0}', space=sflag, size = 0x4, scoped, tag = 'scoped memory for tpu_custom_call.1']
    %15 = vsyncpa [#allocation3], 0
    %16 = vsyncpa [#allocation5], 0
    // Predicated region
    $region2: #{tpu_custom_call.1} parent=1 // pred_check
      _
    $region3: #{tpu_custom_call.1} parent=1 // pred_check_branch
      %18 = sbr.rel (0) target = $region5
    $region4: #{tpu_custom_call.1} parent=1 // pred_region
      _
    $region5: #{tpu_custom_call.1} parent=1 // pred_fallthru
      _
    // Predicated region
    $region6: #{tpu_custom_call.1} parent=1 // pred_check
      _
    $region7: #{tpu_custom_call.1} parent=1 // pred_check_branch
      %20 = sbr.rel (0) target = $region9
    $region8: #{tpu_custom_call.1} parent=1 // pred_region
      _
    $region9: #{tpu_custom_call.1} parent=1 // pred_fallthru
      _
    // Predicated region
    $region10: #{tpu_custom_call.1} parent=1 // pred_check
      _
    $region11: #{tpu_custom_call.1} parent=1 // pred_check_branch
      %22 = sbr.rel (0) target = $region13
    $region12: #{tpu_custom_call.1} parent=1 // pred_region
      _
    $region13: #{tpu_custom_call.1} parent=1 // pred_fallthru
      _
    // Predicated region
    $region14: #{tpu_custom_call.1} parent=1 // pred_check
      _
    $region15: #{tpu_custom_call.1} parent=1 // pred_check_branch
      %24 = sbr.rel (0) target = $region17
    $region16: #{tpu_custom_call.1} parent=1 // pred_region
      _
    $region17: #{tpu_custom_call.1} parent=1 // pred_fallthru
      _
    // Predicated region
    $region18: #{tpu_custom_call.1} parent=1 // pred_check
      _
    $region19: #{tpu_custom_call.1} parent=1 // pred_check_branch
      %26 = sbr.rel (0) target = $region21
    $region20: #{tpu_custom_call.1} parent=1 // pred_region
      _
    $region21: #{tpu_custom_call.1} parent=1 // pred_fallthru
      _
    // Predicated region
    $region22: #{tpu_custom_call.1} parent=1 // pred_check
      _
    $region23: #{tpu_custom_call.1} parent=1 // pred_check_branch
      %28 = sbr.rel (0) target = $region25
    $region24: #{tpu_custom_call.1} parent=1 // pred_region
      _
    $region25: #{tpu_custom_call.1} parent=1 // pred_fallthru
      _
    // Predicated region
    $region26: #{tpu_custom_call.1} parent=1 // pred_check
      _
    $region27: #{tpu_custom_call.1} parent=1 // pred_check_branch
      %30 = sbr.rel (0) target = $region29
    $region28: #{tpu_custom_call.1} parent=1 // pred_region
      _
    $region29: #{tpu_custom_call.1} parent=1 // pred_fallthru
      _
    // Predicated region
    $region30: #{tpu_custom_call.1} parent=1 // pred_check
      _
    $region31: #{tpu_custom_call.1} parent=1 // pred_check_branch
      %32 = sbr.rel (0) target = $region33
    $region32: #{tpu_custom_call.1} parent=1 // pred_region
      _
    $region33: #{tpu_custom_call.1} parent=1 // pred_fallthru
      _
    %v33 = vld [vmem:[%s0] sm:$0xff]
    %v34 = vld [vmem:[%s0 + $0x8] sm:$0xff]
    %v35 = vld [vmem:[%s2] sm:$0xff]
    %v36 = vld [vmem:[%s2 + $0x8] sm:$0xff]
    %v37 = vld [vmem:[%s2 + $0x10] sm:$0xff]
    %v38 = vld [vmem:[%s2 + $0x18] sm:$0xff]
    %v39 = vld [vmem:[%s2 + $0x20] sm:$0xff]
    %v40 = vld [vmem:[%s2 + $0x28] sm:$0xff]
    %v41 = vld [vmem:[%s2 + $0x30] sm:$0xff]
    %v42 = vld [vmem:[%s2 + $0x38] sm:$0xff]
    %v43 = vld [vmem:[%s2 + $0x40] sm:$0xff]
    %v44 = vld [vmem:[%s2 + $0x48] sm:$0xff]
    %v45 = vld [vmem:[%s2 + $0x50] sm:$0xff]
    %v46 = vld [vmem:[%s2 + $0x58] sm:$0xff]
    %v47 = vld [vmem:[%s2 + $0x60] sm:$0xff]
    %v48 = vld [vmem:[%s2 + $0x68] sm:$0xff]
    %v49 = vld [vmem:[%s2 + $0x70] sm:$0xff]
    %v50 = vld [vmem:[%s2 + $0x78] sm:$0xff]
    %v51 = vld [vmem:[%s3] sm:$0xff]
    %v52 = vld [vmem:[%s3 + $0x8] sm:$0xff]
    %v53 = vld [vmem:[%s3 + $0x10] sm:$0xff]
    %v54 = vld [vmem:[%s3 + $0x18] sm:$0xff]
    %v55 = vld [vmem:[%s3 + $0x20] sm:$0xff]
    %v56 = vld [vmem:[%s3 + $0x28] sm:$0xff]
    %v57 = vld [vmem:[%s3 + $0x30] sm:$0xff]
    %v58 = vld [vmem:[%s3 + $0x38] sm:$0xff]
    %v59 = vld [vmem:[%s3 + $0x40] sm:$0xff]
    %v60 = vld [vmem:[%s3 + $0x48] sm:$0xff]
    %v61 = vld [vmem:[%s3 + $0x50] sm:$0xff]
    %v62 = vld [vmem:[%s3 + $0x58] sm:$0xff]
    %v63 = vld [vmem:[%s3 + $0x60] sm:$0xff]
    %v64 = vld [vmem:[%s3 + $0x68] sm:$0xff]
    %v65 = vld [vmem:[%s3 + $0x70] sm:$0xff]
    %v66 = vld [vmem:[%s3 + $0x78] sm:$0xff]
    %v67 = vld [vmem:[%s4] sm:$0xff]
    %v68 = vld [vmem:[%s4 + $0x8] sm:$0xff]
    %v69 = vld [vmem:[%s4 + $0x10] sm:$0xff]
    %v70 = vld [vmem:[%s4 + $0x18] sm:$0xff]
    %v71 = vld [vmem:[%s4 + $0x20] sm:$0xff]
    %v72 = vld [vmem:[%s4 + $0x28] sm:$0xff]
    %v73 = vld [vmem:[%s4 + $0x30] sm:$0xff]
    %v74 = vld [vmem:[%s4 + $0x38] sm:$0xff]
    %v75 = vld [vmem:[%s4 + $0x40] sm:$0xff]
    %v76 = vld [vmem:[%s4 + $0x48] sm:$0xff]
    %v77 = vld [vmem:[%s4 + $0x50] sm:$0xff]
    %v78 = vld [vmem:[%s4 + $0x58] sm:$0xff]
    %v79 = vld [vmem:[%s4 + $0x60] sm:$0xff]
    %v80 = vld [vmem:[%s4 + $0x68] sm:$0xff]
    %v81 = vld [vmem:[%s4 + $0x70] sm:$0xff]
    %v82 = vld [vmem:[%s4 + $0x78] sm:$0xff]
    %v83 = vld [vmem:[%s5] sm:$0xff]
    %v84 = vld [vmem:[%s5 + $0x8] sm:$0xff]
    %v85 = vld [vmem:[%s5 + $0x10] sm:$0xff]
    %v86 = vld [vmem:[%s5 + $0x18] sm:$0xff]
    %vm87 = vcmask 261120
    %v89 = vsel %vm87, %v33, 0
    %91 = vmatprep.subr.mxu0 0.0
    %92 = vmatpush1.msra.mxu0 %v35
    %93 = vmatprep.subr.mxu0 0.0
    %94 = vmatpush1.msra.mxu0 %v36
    %95 = vmatprep.subr.mxu0 0.0
    %96 = vmatpush1.msra.mxu0 %v37
    %97 = vmatprep.subr.mxu0 0.0
    %98 = vmatpush1.msra.mxu0 %v38
    %99 = vmatprep.subr.mxu0 0.0
    %100 = vmatpush1.msra.mxu0 0.0
    %101 = vmatprep.subr.mxu0 0.0
    %102 = vmatpush1.msra.mxu0 0.0
    %103 = vmatprep.subr.mxu0 0.0
    %104 = vmatpush1.msra.mxu0 0.0
    %105 = vmatprep.subr.mxu0 0.0
    %106 = vmatpush1.msra.mxu0 0.0
    %107 = vmatprep.subr.mxu0 0.0
    %108 = vmatpush1.msra.mxu0 0.0
    %109 = vmatprep.subr.mxu0 0.0
    %110 = vmatpush1.msra.mxu0 0.0
    %111 = vmatprep.subr.mxu0 0.0
    %112 = vmatpush1.msra.mxu0 0.0
    %113 = vmatprep.subr.mxu0 0.0
    %114 = vmatpush1.msra.mxu0 0.0
    %115 = vmatprep.subr.mxu0 0.0
    %116 = vmatpush1.msra.mxu0 0.0
    %117 = vmatprep.subr.mxu0 0.0
    %118 = vmatpush1.msra.mxu0 0.0
    %119 = vmatprep.subr.mxu0 0.0
    %120 = vmatpush1.msra.mxu0 0.0
    %121 = vmatprep.subr.mxu0 0.0
    %122 = vmatpush1.msra.mxu0 0.0
    %123 = vmatprep.subr.mxu0 0.0
    %124 = vmatpush1.msra.mxu0 0.0
    %125 = vmatprep.subr.mxu0 0.0
    %126 = vmatpush1.msra.mxu0 0.0
    %127 = vmatprep.subr.mxu0 0.0
    %128 = vmatpush1.msra.mxu0 0.0
    %129 = vmatprep.subr.mxu0 0.0
    %130 = vmatpush1.msra.mxu0 0.0
    %131 = vmatprep.subr.mxu0 0.0
    %132 = vmatpush1.msra.mxu0 0.0
    %133 = vmatprep.subr.mxu0 0.0
    %134 = vmatpush1.msra.mxu0 0.0
    %135 = vmatprep.subr.mxu0 0.0
    %136 = vmatpush1.msra.mxu0 0.0
    %137 = vmatprep.subr.mxu0 0.0
    %138 = vmatpush1.msra.mxu0 0.0
    %139 = vmatprep.subr.mxu0 0.0
    %140 = vmatpush1.msra.mxu0 0.0
    %141 = vmatprep.subr.mxu0 0.0
    %142 = vmatpush1.msra.mxu0 0.0
    %143 = vmatprep.subr.mxu0 0.0
    %144 = vmatpush1.msra.mxu0 0.0
    %145 = vmatprep.subr.mxu0 0.0
    %146 = vmatpush1.msra.mxu0 0.0
    %147 = vmatprep.subr.mxu0 0.0
    %148 = vmatpush1.msra.mxu0 0.0
    %149 = vmatprep.subr.mxu0 0.0
    %150 = vmatpush1.msra.mxu0 0.0
    %151 = vmatprep.subr.mxu0 0.0
    %152 = vmatpush1.msra.mxu0 0.0
    %153 = vmatprep.subr.mxu0 0.0
    %154 = vmatpush1.msra.mxu0 0.0
    %155 = vmatprep.mubr.f32.mxu0 0.0
    %156 = vmatmul.mubr.f32.gmra.mrb[0].mxu0 %v89
    %v157 = vpop.f32.mrb[0].mxu0
    %v158 = vadd.f32 0.0, %v157
    %v159 = vpop.f32.mrb[0].mxu0
    %160 = vdwg.mxu0
    %161 = vmatprep.subr.mxu0 0.0
    %162 = vmatpush1.msra.mxu0 %v39
    %163 = vmatprep.subr.mxu0 0.0
    %164 = vmatpush1.msra.mxu0 %v40
    %165 = vmatprep.subr.mxu0 0.0
    %166 = vmatpush1.msra.mxu0 %v41
    %167 = vmatprep.subr.mxu0 0.0
    %168 = vmatpush1.msra.mxu0 %v42
    %169 = vmatprep.subr.mxu0 0.0
    %170 = vmatpush1.msra.mxu0 0.0
    %171 = vmatprep.subr.mxu0 0.0
    %172 = vmatpush1.msra.mxu0 0.0
    %173 = vmatprep.subr.mxu0 0.0
    %174 = vmatpush1.msra.mxu0 0.0
    %175 = vmatprep.subr.mxu0 0.0
    %176 = vmatpush1.msra.mxu0 0.0
    %177 = vmatprep.subr.mxu0 0.0
    %178 = vmatpush1.msra.mxu0 0.0
    %179 = vmatprep.subr.mxu0 0.0
    %180 = vmatpush1.msra.mxu0 0.0
    %181 = vmatprep.subr.mxu0 0.0
    %182 = vmatpush1.msra.mxu0 0.0
    %183 = vmatprep.subr.mxu0 0.0
    %184 = vmatpush1.msra.mxu0 0.0
    %185 = vmatprep.subr.mxu0 0.0
    %186 = vmatpush1.msra.mxu0 0.0
    %187 = vmatprep.subr.mxu0 0.0
    %188 = vmatpush1.msra.mxu0 0.0
    %189 = vmatprep.subr.mxu0 0.0
    %190 = vmatpush1.msra.mxu0 0.0
    %191 = vmatprep.subr.mxu0 0.0
    %192 = vmatpush1.msra.mxu0 0.0
    %193 = vmatprep.subr.mxu0 0.0
    %194 = vmatpush1.msra.mxu0 0.0
    %195 = vmatprep.subr.mxu0 0.0
    %196 = vmatpush1.msra.mxu0 0.0
    %197 = vmatprep.subr.mxu0 0.0
    %198 = vmatpush1.msra.mxu0 0.0
    %199 = vmatprep.subr.mxu0 0.0
    %200 = vmatpush1.msra.mxu0 0.0
    %201 = vmatprep.subr.mxu0 0.0
    %202 = vmatpush1.msra.mxu0 0.0
    %203 = vmatprep.subr.mxu0 0.0
    %204 = vmatpush1.msra.mxu0 0.0
    %205 = vmatprep.subr.mxu0 0.0
    %206 = vmatpush1.msra.mxu0 0.0
    %207 = vmatprep.subr.mxu0 0.0
    %208 = vmatpush1.msra.mxu0 0.0
    %209 = vmatprep.subr.mxu0 0.0
    %210 = vmatpush1.msra.mxu0 0.0
    %211 = vmatprep.subr.mxu0 0.0
    %212 = vmatpush1.msra.mxu0 0.0
    %213 = vmatprep.subr.mxu0 0.0
    %214 = vmatpush1.msra.mxu0 0.0
    %215 = vmatprep.subr.mxu0 0.0
    %216 = vmatpush1.msra.mxu0 0.0
    %217 = vmatprep.subr.mxu0 0.0
    %218 = vmatpush1.msra.mxu0 0.0
    %219 = vmatprep.subr.mxu0 0.0
    %220 = vmatpush1.msra.mxu0 0.0
    %221 = vmatprep.subr.mxu0 0.0
    %222 = vmatpush1.msra.mxu0 0.0
    %223 = vmatprep.subr.mxu0 0.0
    %224 = vmatpush1.msra.mxu0 0.0
    %225 = vmatprep.mubr.f32.mxu0 0.0
    %226 = vmatmul.mubr.f32.gmra.mrb[0].mxu0 %v89
    %v227 = vpop.f32.mrb[0].mxu0
    %v228 = vadd.f32 0.0, %v227
    %v229 = vpop.f32.mrb[0].mxu0
    %230 = vdwg.mxu0
    %231 = vmatprep.subr.mxu0 0.0
    %232 = vmatpush1.msra.mxu0 %v43
    %233 = vmatprep.subr.mxu0 0.0
    %234 = vmatpush1.msra.mxu0 %v44
    %235 = vmatprep.subr.mxu0 0.0
    %236 = vmatpush1.msra.mxu0 %v45
    %237 = vmatprep.subr.mxu0 0.0
    %238 = vmatpush1.msra.mxu0 %v46
    %239 = vmatprep.subr.mxu0 0.0
    %240 = vmatpush1.msra.mxu0 0.0
    %241 = vmatprep.subr.mxu0 0.0
    %242 = vmatpush1.msra.mxu0 0.0
    %243 = vmatprep.subr.mxu0 0.0
    %244 = vmatpush1.msra.mxu0 0.0
    %245 = vmatprep.subr.mxu0 0.0
    %246 = vmatpush1.msra.mxu0 0.0
    %247 = vmatprep.subr.mxu0 0.0
    %248 = vmatpush1.msra.mxu0 0.0
    %249 = vmatprep.subr.mxu0 0.0
    %250 = vmatpush1.msra.mxu0 0.0
    %251 = vmatprep.subr.mxu0 0.0
    %252 = vmatpush1.msra.mxu0 0.0
    %253 = vmatprep.subr.mxu0 0.0
    %254 = vmatpush1.msra.mxu0 0.0
    %255 = vmatprep.subr.mxu0 0.0
    %256 = vmatpush1.msra.mxu0 0.0
    %257 = vmatprep.subr.mxu0 0.0
    %258 = vmatpush1.msra.mxu0 0.0
    %259 = vmatprep.subr.mxu0 0.0
    %260 = vmatpush1.msra.mxu0 0.0
    %261 = vmatprep.subr.mxu0 0.0
    %262 = vmatpush1.msra.mxu0 0.0
    %263 = vmatprep.subr.mxu0 0.0
    %264 = vmatpush1.msra.mxu0 0.0
    %265 = vmatprep.subr.mxu0 0.0
    %266 = vmatpush1.msra.mxu0 0.0
    %267 = vmatprep.subr.mxu0 0.0
    %268 = vmatpush1.msra.mxu0 0.0
    %269 = vmatprep.subr.mxu0 0.0
    %270 = vmatpush1.msra.mxu0 0.0
    %271 = vmatprep.subr.mxu0 0.0
    %272 = vmatpush1.msra.mxu0 0.0
    %273 = vmatprep.subr.mxu0 0.0
    %274 = vmatpush1.msra.mxu0 0.0
    %275 = vmatprep.subr.mxu0 0.0
    %276 = vmatpush1.msra.mxu0 0.0
    %277 = vmatprep.subr.mxu0 0.0
    %278 = vmatpush1.msra.mxu0 0.0
    %279 = vmatprep.subr.mxu0 0.0
    %280 = vmatpush1.msra.mxu0 0.0
    %281 = vmatprep.subr.mxu0 0.0
    %282 = vmatpush1.msra.mxu0 0.0
    %283 = vmatprep.subr.mxu0 0.0
    %284 = vmatpush1.msra.mxu0 0.0
    %285 = vmatprep.subr.mxu0 0.0
    %286 = vmatpush1.msra.mxu0 0.0
    %287 = vmatprep.subr.mxu0 0.0
    %288 = vmatpush1.msra.mxu0 0.0
    %289 = vmatprep.subr.mxu0 0.0
    %290 = vmatpush1.msra.mxu0 0.0
    %291 = vmatprep.subr.mxu0 0.0
    %292 = vmatpush1.msra.mxu0 0.0
    %293 = vmatprep.subr.mxu0 0.0
    %294 = vmatpush1.msra.mxu0 0.0
    %295 = vmatprep.mubr.f32.mxu0 0.0
    %296 = vmatmul.mubr.f32.gmra.mrb[0].mxu0 %v89
    %v297 = vpop.f32.mrb[0].mxu0
    %v298 = vadd.f32 0.0, %v297
    %v299 = vpop.f32.mrb[0].mxu0
    %300 = vdwg.mxu0
    %301 = vmatprep.subr.mxu0 0.0
    %302 = vmatpush1.msra.mxu0 %v47
    %303 = vmatprep.subr.mxu0 0.0
    %304 = vmatpush1.msra.mxu0 %v48
    %305 = vmatprep.subr.mxu0 0.0
    %306 = vmatpush1.msra.mxu0 %v49
    %307 = vmatprep.subr.mxu0 0.0
    %308 = vmatpush1.msra.mxu0 %v50
    %309 = vmatprep.subr.mxu0 0.0
    %310 = vmatpush1.msra.mxu0 0.0
    %311 = vmatprep.subr.mxu0 0.0
    %312 = vmatpush1.msra.mxu0 0.0
    %313 = vmatprep.subr.mxu0 0.0
    %314 = vmatpush1.msra.mxu0 0.0
    %315 = vmatprep.subr.mxu0 0.0
    %316 = vmatpush1.msra.mxu0 0.0
    %317 = vmatprep.subr.mxu0 0.0
    %318 = vmatpush1.msra.mxu0 0.0
    %319 = vmatprep.subr.mxu0 0.0
    %320 = vmatpush1.msra.mxu0 0.0
    %321 = vmatprep.subr.mxu0 0.0
    %322 = vmatpush1.msra.mxu0 0.0
    %323 = vmatprep.subr.mxu0 0.0
    %324 = vmatpush1.msra.mxu0 0.0
    %325 = vmatprep.subr.mxu0 0.0
    %326 = vmatpush1.msra.mxu0 0.0
    %327 = vmatprep.subr.mxu0 0.0
    %328 = vmatpush1.msra.mxu0 0.0
    %329 = vmatprep.subr.mxu0 0.0
    %330 = vmatpush1.msra.mxu0 0.0
    %331 = vmatprep.subr.mxu0 0.0
    %332 = vmatpush1.msra.mxu0 0.0
    %333 = vmatprep.subr.mxu0 0.0
    %334 = vmatpush1.msra.mxu0 0.0
    %335 = vmatprep.subr.mxu0 0.0
    %336 = vmatpush1.msra.mxu0 0.0
    %337 = vmatprep.subr.mxu0 0.0
    %338 = vmatpush1.msra.mxu0 0.0
    %339 = vmatprep.subr.mxu0 0.0
    %340 = vmatpush1.msra.mxu0 0.0
    %341 = vmatprep.subr.mxu0 0.0
    %342 = vmatpush1.msra.mxu0 0.0
    %343 = vmatprep.subr.mxu0 0.0
    %344 = vmatpush1.msra.mxu0 0.0
    %345 = vmatprep.subr.mxu0 0.0
    %346 = vmatpush1.msra.mxu0 0.0
    %347 = vmatprep.subr.mxu0 0.0
    %348 = vmatpush1.msra.mxu0 0.0
    %349 = vmatprep.subr.mxu0 0.0
    %350 = vmatpush1.msra.mxu0 0.0
    %351 = vmatprep.subr.mxu0 0.0
    %352 = vmatpush1.msra.mxu0 0.0
    %353 = vmatprep.subr.mxu0 0.0
    %354 = vmatpush1.msra.mxu0 0.0
    %355 = vmatprep.subr.mxu0 0.0
    %356 = vmatpush1.msra.mxu0 0.0
    %357 = vmatprep.subr.mxu0 0.0
    %358 = vmatpush1.msra.mxu0 0.0
    %359 = vmatprep.subr.mxu0 0.0
    %360 = vmatpush1.msra.mxu0 0.0
    %361 = vmatprep.subr.mxu0 0.0
    %362 = vmatpush1.msra.mxu0 0.0
    %363 = vmatprep.subr.mxu0 0.0
    %364 = vmatpush1.msra.mxu0 0.0
    %365 = vmatprep.mubr.f32.mxu0 0.0
    %366 = vmatmul.mubr.f32.gmra.mrb[0].mxu0 %v89
    %v367 = vpop.f32.mrb[0].mxu0
    %v368 = vadd.f32 0.0, %v367
    %v369 = vpop.f32.mrb[0].mxu0
    %370 = vdwg.mxu0
    %v372 = vsel %vm87, %v34, 0
    %374 = vmatprep.subr.mxu0 0.0
    %375 = vmatpush1.msra.mxu0 %v35
    %376 = vmatprep.subr.mxu0 0.0
    %377 = vmatpush1.msra.mxu0 %v36
    %378 = vmatprep.subr.mxu0 0.0
    %379 = vmatpush1.msra.mxu0 %v37
    %380 = vmatprep.subr.mxu0 0.0
    %381 = vmatpush1.msra.mxu0 %v38
    %382 = vmatprep.subr.mxu0 0.0
    %383 = vmatpush1.msra.mxu0 0.0
    %384 = vmatprep.subr.mxu0 0.0
    %385 = vmatpush1.msra.mxu0 0.0
    %386 = vmatprep.subr.mxu0 0.0
    %387 = vmatpush1.msra.mxu0 0.0
    %388 = vmatprep.subr.mxu0 0.0
    %389 = vmatpush1.msra.mxu0 0.0
    %390 = vmatprep.subr.mxu0 0.0
    %391 = vmatpush1.msra.mxu0 0.0
    %392 = vmatprep.subr.mxu0 0.0
    %393 = vmatpush1.msra.mxu0 0.0
    %394 = vmatprep.subr.mxu0 0.0
    %395 = vmatpush1.msra.mxu0 0.0
    %396 = vmatprep.subr.mxu0 0.0
    %397 = vmatpush1.msra.mxu0 0.0
    %398 = vmatprep.subr.mxu0 0.0
    %399 = vmatpush1.msra.mxu0 0.0
    %400 = vmatprep.subr.mxu0 0.0
    %401 = vmatpush1.msra.mxu0 0.0
    %402 = vmatprep.subr.mxu0 0.0
    %403 = vmatpush1.msra.mxu0 0.0
    %404 = vmatprep.subr.mxu0 0.0
    %405 = vmatpush1.msra.mxu0 0.0
    %406 = vmatprep.subr.mxu0 0.0
    %407 = vmatpush1.msra.mxu0 0.0
    %408 = vmatprep.subr.mxu0 0.0
    %409 = vmatpush1.msra.mxu0 0.0
    %410 = vmatprep.subr.mxu0 0.0
    %411 = vmatpush1.msra.mxu0 0.0
    %412 = vmatprep.subr.mxu0 0.0
    %413 = vmatpush1.msra.mxu0 0.0
    %414 = vmatprep.subr.mxu0 0.0
    %415 = vmatpush1.msra.mxu0 0.0
    %416 = vmatprep.subr.mxu0 0.0
    %417 = vmatpush1.msra.mxu0 0.0
    %418 = vmatprep.subr.mxu0 0.0
    %419 = vmatpush1.msra.mxu0 0.0
    %420 = vmatprep.subr.mxu0 0.0
    %421 = vmatpush1.msra.mxu0 0.0
    %422 = vmatprep.subr.mxu0 0.0
    %423 = vmatpush1.msra.mxu0 0.0
    %424 = vmatprep.subr.mxu0 0.0
    %425 = vmatpush1.msra.mxu0 0.0
    %426 = vmatprep.subr.mxu0 0.0
    %427 = vmatpush1.msra.mxu0 0.0
    %428 = vmatprep.subr.mxu0 0.0
    %429 = vmatpush1.msra.mxu0 0.0
    %430 = vmatprep.subr.mxu0 0.0
    %431 = vmatpush1.msra.mxu0 0.0
    %432 = vmatprep.subr.mxu0 0.0
    %433 = vmatpush1.msra.mxu0 0.0
    %434 = vmatprep.subr.mxu0 0.0
    %435 = vmatpush1.msra.mxu0 0.0
    %436 = vmatprep.subr.mxu0 0.0
    %437 = vmatpush1.msra.mxu0 0.0
    %438 = vmatprep.mubr.f32.mxu0 0.0
    %439 = vmatmul.mubr.f32.gmra.mrb[0].mxu0 %v372
    %v440 = vpop.f32.mrb[0].mxu0
    %v441 = vadd.f32 0.0, %v440
    %v442 = vpop.f32.mrb[0].mxu0
    %443 = vdwg.mxu0
    %444 = vmatprep.subr.mxu0 0.0
    %445 = vmatpush1.msra.mxu0 %v39
    %446 = vmatprep.subr.mxu0 0.0
    %447 = vmatpush1.msra.mxu0 %v40
    %448 = vmatprep.subr.mxu0 0.0
    %449 = vmatpush1.msra.mxu0 %v41
    %450 = vmatprep.subr.mxu0 0.0
    %451 = vmatpush1.msra.mxu0 %v42
    %452 = vmatprep.subr.mxu0 0.0
    %453 = vmatpush1.msra.mxu0 0.0
    %454 = vmatprep.subr.mxu0 0.0
    %455 = vmatpush1.msra.mxu0 0.0
    %456 = vmatprep.subr.mxu0 0.0
    %457 = vmatpush1.msra.mxu0 0.0
    %458 = vmatprep.subr.mxu0 0.0
    %459 = vmatpush1.msra.mxu0 0.0
    %460 = vmatprep.subr.mxu0 0.0
    %461 = vmatpush1.msra.mxu0 0.0
    %462 = vmatprep.subr.mxu0 0.0
    %463 = vmatpush1.msra.mxu0 0.0
    %464 = vmatprep.subr.mxu0 0.0
    %465 = vmatpush1.msra.mxu0 0.0
    %466 = vmatprep.subr.mxu0 0.0
    %467 = vmatpush1.msra.mxu0 0.0
    %468 = vmatprep.subr.mxu0 0.0
    %469 = vmatpush1.msra.mxu0 0.0
    %470 = vmatprep.subr.mxu0 0.0
    %471 = vmatpush1.msra.mxu0 0.0
    %472 = vmatprep.subr.mxu0 0.0
    %473 = vmatpush1.msra.mxu0 0.0
    %474 = vmatprep.subr.mxu0 0.0
    %475 = vmatpush1.msra.mxu0 0.0
    %476 = vmatprep.subr.mxu0 0.0
    %477 = vmatpush1.msra.mxu0 0.0
    %478 = vmatprep.subr.mxu0 0.0
    %479 = vmatpush1.msra.mxu0 0.0
    %480 = vmatprep.subr.mxu0 0.0
    %481 = vmatpush1.msra.mxu0 0.0
    %482 = vmatprep.subr.mxu0 0.0
    %483 = vmatpush1.msra.mxu0 0.0
    %484 = vmatprep.subr.mxu0 0.0
    %485 = vmatpush1.msra.mxu0 0.0
    %486 = vmatprep.subr.mxu0 0.0
    %487 = vmatpush1.msra.mxu0 0.0
    %488 = vmatprep.subr.mxu0 0.0
    %489 = vmatpush1.msra.mxu0 0.0
    %490 = vmatprep.subr.mxu0 0.0
    %491 = vmatpush1.msra.mxu0 0.0
    %492 = vmatprep.subr.mxu0 0.0
    %493 = vmatpush1.msra.mxu0 0.0
    %494 = vmatprep.subr.mxu0 0.0
    %495 = vmatpush1.msra.mxu0 0.0
    %496 = vmatprep.subr.mxu0 0.0
    %497 = vmatpush1.msra.mxu0 0.0
    %498 = vmatprep.subr.mxu0 0.0
    %499 = vmatpush1.msra.mxu0 0.0
    %500 = vmatprep.subr.mxu0 0.0
    %501 = vmatpush1.msra.mxu0 0.0
    %502 = vmatprep.subr.mxu0 0.0
    %503 = vmatpush1.msra.mxu0 0.0
    %504 = vmatprep.subr.mxu0 0.0
    %505 = vmatpush1.msra.mxu0 0.0
    %506 = vmatprep.subr.mxu0 0.0
    %507 = vmatpush1.msra.mxu0 0.0
    %508 = vmatprep.mubr.f32.mxu0 0.0
    %509 = vmatmul.mubr.f32.gmra.mrb[0].mxu0 %v372
    %v510 = vpop.f32.mrb[0].mxu0
    %v511 = vadd.f32 0.0, %v510
    %v512 = vpop.f32.mrb[0].mxu0
    %513 = vdwg.mxu0
    %514 = vmatprep.subr.mxu0 0.0
    %515 = vmatpush1.msra.mxu0 %v43
    %516 = vmatprep.subr.mxu0 0.0
    %517 = vmatpush1.msra.mxu0 %v44
    %518 = vmatprep.subr.mxu0 0.0
    %519 = vmatpush1.msra.mxu0 %v45
    %520 = vmatprep.subr.mxu0 0.0
    %521 = vmatpush1.msra.mxu0 %v46
    %522 = vmatprep.subr.mxu0 0.0
    %523 = vmatpush1.msra.mxu0 0.0
    %524 = vmatprep.subr.mxu0 0.0
    %525 = vmatpush1.msra.mxu0 0.0
    %526 = vmatprep.subr.mxu0 0.0
    %527 = vmatpush1.msra.mxu0 0.0
    %528 = vmatprep.subr.mxu0 0.0
    %529 = vmatpush1.msra.mxu0 0.0
    %530 = vmatprep.subr.mxu0 0.0
    %531 = vmatpush1.msra.mxu0 0.0
    %532 = vmatprep.subr.mxu0 0.0
    %533 = vmatpush1.msra.mxu0 0.0
    %534 = vmatprep.subr.mxu0 0.0
    %535 = vmatpush1.msra.mxu0 0.0
    %536 = vmatprep.subr.mxu0 0.0
    %537 = vmatpush1.msra.mxu0 0.0
    %538 = vmatprep.subr.mxu0 0.0
    %539 = vmatpush1.msra.mxu0 0.0
    %540 = vmatprep.subr.mxu0 0.0
    %541 = vmatpush1.msra.mxu0 0.0
    %542 = vmatprep.subr.mxu0 0.0
    %543 = vmatpush1.msra.mxu0 0.0
    %544 = vmatprep.subr.mxu0 0.0
    %545 = vmatpush1.msra.mxu0 0.0
    %546 = vmatprep.subr.mxu0 0.0
    %547 = vmatpush1.msra.mxu0 0.0
    %548 = vmatprep.subr.mxu0 0.0
    %549 = vmatpush1.msra.mxu0 0.0
    %550 = vmatprep.subr.mxu0 0.0
    %551 = vmatpush1.msra.mxu0 0.0
    %552 = vmatprep.subr.mxu0 0.0
    %553 = vmatpush1.msra.mxu0 0.0
    %554 = vmatprep.subr.mxu0 0.0
    %555 = vmatpush1.msra.mxu0 0.0
    %556 = vmatprep.subr.mxu0 0.0
    %557 = vmatpush1.msra.mxu0 0.0
    %558 = vmatprep.subr.mxu0 0.0
    %559 = vmatpush1.msra.mxu0 0.0
    %560 = vmatprep.subr.mxu0 0.0
    %561 = vmatpush1.msra.mxu0 0.0
    %562 = vmatprep.subr.mxu0 0.0
    %563 = vmatpush1.msra.mxu0 0.0
    %564 = vmatprep.subr.mxu0 0.0
    %565 = vmatpush1.msra.mxu0 0.0
    %566 = vmatprep.subr.mxu0 0.0
    %567 = vmatpush1.msra.mxu0 0.0
    %568 = vmatprep.subr.mxu0 0.0
    %569 = vmatpush1.msra.mxu0 0.0
    %570 = vmatprep.subr.mxu0 0.0
    %571 = vmatpush1.msra.mxu0 0.0
    %572 = vmatprep.subr.mxu0 0.0
    %573 = vmatpush1.msra.mxu0 0.0
    %574 = vmatprep.subr.mxu0 0.0
    %575 = vmatpush1.msra.mxu0 0.0
    %576 = vmatprep.subr.mxu0 0.0
    %577 = vmatpush1.msra.mxu0 0.0
    %578 = vmatprep.mubr.f32.mxu0 0.0
    %579 = vmatmul.mubr.f32.gmra.mrb[0].mxu0 %v372
    %v580 = vpop.f32.mrb[0].mxu0
    %v581 = vadd.f32 0.0, %v580
    %v582 = vpop.f32.mrb[0].mxu0
    %583 = vdwg.mxu0
    %584 = vmatprep.subr.mxu0 0.0
    %585 = vmatpush1.msra.mxu0 %v47
    %586 = vmatprep.subr.mxu0 0.0
    %587 = vmatpush1.msra.mxu0 %v48
    %588 = vmatprep.subr.mxu0 0.0
    %589 = vmatpush1.msra.mxu0 %v49
    %590 = vmatprep.subr.mxu0 0.0
    %591 = vmatpush1.msra.mxu0 %v50
    %592 = vmatprep.subr.mxu0 0.0
    %593 = vmatpush1.msra.mxu0 0.0
    %594 = vmatprep.subr.mxu0 0.0
    %595 = vmatpush1.msra.mxu0 0.0
    %596 = vmatprep.subr.mxu0 0.0
    %597 = vmatpush1.msra.mxu0 0.0
    %598 = vmatprep.subr.mxu0 0.0
    %599 = vmatpush1.msra.mxu0 0.0
    %600 = vmatprep.subr.mxu0 0.0
    %601 = vmatpush1.msra.mxu0 0.0
    %602 = vmatprep.subr.mxu0 0.0
    %603 = vmatpush1.msra.mxu0 0.0
    %604 = vmatprep.subr.mxu0 0.0
    %605 = vmatpush1.msra.mxu0 0.0
    %606 = vmatprep.subr.mxu0 0.0
    %607 = vmatpush1.msra.mxu0 0.0
    %608 = vmatprep.subr.mxu0 0.0
    %609 = vmatpush1.msra.mxu0 0.0
    %610 = vmatprep.subr.mxu0 0.0
    %611 = vmatpush1.msra.mxu0 0.0
    %612 = vmatprep.subr.mxu0 0.0
    %613 = vmatpush1.msra.mxu0 0.0
    %614 = vmatprep.subr.mxu0 0.0
    %615 = vmatpush1.msra.mxu0 0.0
    %616 = vmatprep.subr.mxu0 0.0
    %617 = vmatpush1.msra.mxu0 0.0
    %618 = vmatprep.subr.mxu0 0.0
    %619 = vmatpush1.msra.mxu0 0.0
    %620 = vmatprep.subr.mxu0 0.0
    %621 = vmatpush1.msra.mxu0 0.0
    %622 = vmatprep.subr.mxu0 0.0
    %623 = vmatpush1.msra.mxu0 0.0
    %624 = vmatprep.subr.mxu0 0.0
    %625 = vmatpush1.msra.mxu0 0.0
    %626 = vmatprep.subr.mxu0 0.0
    %627 = vmatpush1.msra.mxu0 0.0
    %628 = vmatprep.subr.mxu0 0.0
    %629 = vmatpush1.msra.mxu0 0.0
    %630 = vmatprep.subr.mxu0 0.0
    %631 = vmatpush1.msra.mxu0 0.0
    %632 = vmatprep.subr.mxu0 0.0
    %633 = vmatpush1.msra.mxu0 0.0
    %634 = vmatprep.subr.mxu0 0.0
    %635 = vmatpush1.msra.mxu0 0.0
    %636 = vmatprep.subr.mxu0 0.0
    %637 = vmatpush1.msra.mxu0 0.0
    %638 = vmatprep.subr.mxu0 0.0
    %639 = vmatpush1.msra.mxu0 0.0
    %640 = vmatprep.subr.mxu0 0.0
    %641 = vmatpush1.msra.mxu0 0.0
    %642 = vmatprep.subr.mxu0 0.0
    %643 = vmatpush1.msra.mxu0 0.0
    %644 = vmatprep.subr.mxu0 0.0
    %645 = vmatpush1.msra.mxu0 0.0
    %646 = vmatprep.subr.mxu0 0.0
    %647 = vmatpush1.msra.mxu0 0.0
    %648 = vmatprep.mubr.f32.mxu0 0.0
    %649 = vmatmul.mubr.f32.gmra.mrb[0].mxu0 %v372
    %v650 = vpop.f32.mrb[0].mxu0
    %v651 = vadd.f32 0.0, %v650
    %v652 = vpop.f32.mrb[0].mxu0
    %653 = vdwg.mxu0
    %654 = vmatprep.subr.mxu0 0.0
    %655 = vmatpush1.msra.mxu0 %v51
    %656 = vmatprep.subr.mxu0 0.0
    %657 = vmatpush1.msra.mxu0 %v52
    %658 = vmatprep.subr.mxu0 0.0
    %659 = vmatpush1.msra.mxu0 %v53
    %660 = vmatprep.subr.mxu0 0.0
    %661 = vmatpush1.msra.mxu0 %v54
    %662 = vmatprep.subr.mxu0 0.0
    %663 = vmatpush1.msra.mxu0 0.0
    %664 = vmatprep.subr.mxu0 0.0
    %665 = vmatpush1.msra.mxu0 0.0
    %666 = vmatprep.subr.mxu0 0.0
    %667 = vmatpush1.msra.mxu0 0.0
    %668 = vmatprep.subr.mxu0 0.0
    %669 = vmatpush1.msra.mxu0 0.0
    %670 = vmatprep.subr.mxu0 0.0
    %671 = vmatpush1.msra.mxu0 0.0
    %672 = vmatprep.subr.mxu0 0.0
    %673 = vmatpush1.msra.mxu0 0.0
    %674 = vmatprep.subr.mxu0 0.0
    %675 = vmatpush1.msra.mxu0 0.0
    %676 = vmatprep.subr.mxu0 0.0
    %677 = vmatpush1.msra.mxu0 0.0
    %678 = vmatprep.subr.mxu0 0.0
    %679 = vmatpush1.msra.mxu0 0.0
    %680 = vmatprep.subr.mxu0 0.0
    %681 = vmatpush1.msra.mxu0 0.0
    %682 = vmatprep.subr.mxu0 0.0
    %683 = vmatpush1.msra.mxu0 0.0
    %684 = vmatprep.subr.mxu0 0.0
    %685 = vmatpush1.msra.mxu0 0.0
    %686 = vmatprep.subr.mxu0 0.0
    %687 = vmatpush1.msra.mxu0 0.0
    %688 = vmatprep.subr.mxu0 0.0
    %689 = vmatpush1.msra.mxu0 0.0
    %690 = vmatprep.subr.mxu0 0.0
    %691 = vmatpush1.msra.mxu0 0.0
    %692 = vmatprep.subr.mxu0 0.0
    %693 = vmatpush1.msra.mxu0 0.0
    %694 = vmatprep.subr.mxu0 0.0
    %695 = vmatpush1.msra.mxu0 0.0
    %696 = vmatprep.subr.mxu0 0.0
    %697 = vmatpush1.msra.mxu0 0.0
    %698 = vmatprep.subr.mxu0 0.0
    %699 = vmatpush1.msra.mxu0 0.0
    %700 = vmatprep.subr.mxu0 0.0
    %701 = vmatpush1.msra.mxu0 0.0
    %702 = vmatprep.subr.mxu0 0.0
    %703 = vmatpush1.msra.mxu0 0.0
    %704 = vmatprep.subr.mxu0 0.0
    %705 = vmatpush1.msra.mxu0 0.0
    %706 = vmatprep.subr.mxu0 0.0
    %707 = vmatpush1.msra.mxu0 0.0
    %708 = vmatprep.subr.mxu0 0.0
    %709 = vmatpush1.msra.mxu0 0.0
    %710 = vmatprep.subr.mxu0 0.0
    %711 = vmatpush1.msra.mxu0 0.0
    %712 = vmatprep.subr.mxu0 0.0
    %713 = vmatpush1.msra.mxu0 0.0
    %714 = vmatprep.subr.mxu0 0.0
    %715 = vmatpush1.msra.mxu0 0.0
    %716 = vmatprep.subr.mxu0 0.0
    %717 = vmatpush1.msra.mxu0 0.0
    %718 = vmatprep.mubr.f32.mxu0 0.0
    %719 = vmatmul.mubr.f32.gmra.mrb[0].mxu0 %v89
    %v720 = vpop.f32.mrb[0].mxu0
    %v721 = vadd.f32 0.0, %v720
    %v722 = vpop.f32.mrb[0].mxu0
    %723 = vdwg.mxu0
    %724 = vmatprep.subr.mxu0 0.0
    %725 = vmatpush1.msra.mxu0 %v55
    %726 = vmatprep.subr.mxu0 0.0
    %727 = vmatpush1.msra.mxu0 %v56
    %728 = vmatprep.subr.mxu0 0.0
    %729 = vmatpush1.msra.mxu0 %v57
    %730 = vmatprep.subr.mxu0 0.0
    %731 = vmatpush1.msra.mxu0 %v58
    %732 = vmatprep.subr.mxu0 0.0
    %733 = vmatpush1.msra.mxu0 0.0
    %734 = vmatprep.subr.mxu0 0.0
    %735 = vmatpush1.msra.mxu0 0.0
    %736 = vmatprep.subr.mxu0 0.0
    %737 = vmatpush1.msra.mxu0 0.0
    %738 = vmatprep.subr.mxu0 0.0
    %739 = vmatpush1.msra.mxu0 0.0
    %740 = vmatprep.subr.mxu0 0.0
    %741 = vmatpush1.msra.mxu0 0.0
    %742 = vmatprep.subr.mxu0 0.0
    %743 = vmatpush1.msra.mxu0 0.0
    %744 = vmatprep.subr.mxu0 0.0
    %745 = vmatpush1.msra.mxu0 0.0
    %746 = vmatprep.subr.mxu0 0.0
    %747 = vmatpush1.msra.mxu0 0.0
    %748 = vmatprep.subr.mxu0 0.0
    %749 = vmatpush1.msra.mxu0 0.0
    %750 = vmatprep.subr.mxu0 0.0
    %751 = vmatpush1.msra.mxu0 0.0
    %752 = vmatprep.subr.mxu0 0.0
    %753 = vmatpush1.msra.mxu0 0.0
    %754 = vmatprep.subr.mxu0 0.0
    %755 = vmatpush1.msra.mxu0 0.0
    %756 = vmatprep.subr.mxu0 0.0
    %757 = vmatpush1.msra.mxu0 0.0
    %758 = vmatprep.subr.mxu0 0.0
    %759 = vmatpush1.msra.mxu0 0.0
    %760 = vmatprep.subr.mxu0 0.0
    %761 = vmatpush1.msra.mxu0 0.0
    %762 = vmatprep.subr.mxu0 0.0
    %763 = vmatpush1.msra.mxu0 0.0
    %764 = vmatprep.subr.mxu0 0.0
    %765 = vmatpush1.msra.mxu0 0.0
    %766 = vmatprep.subr.mxu0 0.0
    %767 = vmatpush1.msra.mxu0 0.0
    %768 = vmatprep.subr.mxu0 0.0
    %769 = vmatpush1.msra.mxu0 0.0
    %770 = vmatprep.subr.mxu0 0.0
    %771 = vmatpush1.msra.mxu0 0.0
    %772 = vmatprep.subr.mxu0 0.0
    %773 = vmatpush1.msra.mxu0 0.0
    %774 = vmatprep.subr.mxu0 0.0
    %775 = vmatpush1.msra.mxu0 0.0
    %776 = vmatprep.subr.mxu0 0.0
    %777 = vmatpush1.msra.mxu0 0.0
    %778 = vmatprep.subr.mxu0 0.0
    %779 = vmatpush1.msra.mxu0 0.0
    %780 = vmatprep.subr.mxu0 0.0
    %781 = vmatpush1.msra.mxu0 0.0
    %782 = vmatprep.subr.mxu0 0.0
    %783 = vmatpush1.msra.mxu0 0.0
    %784 = vmatprep.subr.mxu0 0.0
    %785 = vmatpush1.msra.mxu0 0.0
    %786 = vmatprep.subr.mxu0 0.0
    %787 = vmatpush1.msra.mxu0 0.0
    %788 = vmatprep.mubr.f32.mxu0 0.0
    %789 = vmatmul.mubr.f32.gmra.mrb[0].mxu0 %v89
    %v790 = vpop.f32.mrb[0].mxu0
    %v791 = vadd.f32 0.0, %v790
    %v792 = vpop.f32.mrb[0].mxu0
    %793 = vdwg.mxu0
    %794 = vmatprep.subr.mxu0 0.0
    %795 = vmatpush1.msra.mxu0 %v59
    %796 = vmatprep.subr.mxu0 0.0
    %797 = vmatpush1.msra.mxu0 %v60
    %798 = vmatprep.subr.mxu0 0.0
    %799 = vmatpush1.msra.mxu0 %v61
    %800 = vmatprep.subr.mxu0 0.0
    %801 = vmatpush1.msra.mxu0 %v62
    %802 = vmatprep.subr.mxu0 0.0
    %803 = vmatpush1.msra.mxu0 0.0
    %804 = vmatprep.subr.mxu0 0.0
    %805 = vmatpush1.msra.mxu0 0.0
    %806 = vmatprep.subr.mxu0 0.0
    %807 = vmatpush1.msra.mxu0 0.0
    %808 = vmatprep.subr.mxu0 0.0
    %809 = vmatpush1.msra.mxu0 0.0
    %810 = vmatprep.subr.mxu0 0.0
    %811 = vmatpush1.msra.mxu0 0.0
    %812 = vmatprep.subr.mxu0 0.0
    %813 = vmatpush1.msra.mxu0 0.0
    %814 = vmatprep.subr.mxu0 0.0
    %815 = vmatpush1.msra.mxu0 0.0
    %816 = vmatprep.subr.mxu0 0.0
    %817 = vmatpush1.msra.mxu0 0.0
    %818 = vmatprep.subr.mxu0 0.0
    %819 = vmatpush1.msra.mxu0 0.0
    %820 = vmatprep.subr.mxu0 0.0
    %821 = vmatpush1.msra.mxu0 0.0
    %822 = vmatprep.subr.mxu0 0.0
    %823 = vmatpush1.msra.mxu0 0.0
    %824 = vmatprep.subr.mxu0 0.0
    %825 = vmatpush1.msra.mxu0 0.0
    %826 = vmatprep.subr.mxu0 0.0
    %827 = vmatpush1.msra.mxu0 0.0
    %828 = vmatprep.subr.mxu0 0.0
    %829 = vmatpush1.msra.mxu0 0.0
    %830 = vmatprep.subr.mxu0 0.0
    %831 = vmatpush1.msra.mxu0 0.0
    %832 = vmatprep.subr.mxu0 0.0
    %833 = vmatpush1.msra.mxu0 0.0
    %834 = vmatprep.subr.mxu0 0.0
    %835 = vmatpush1.msra.mxu0 0.0
    %836 = vmatprep.subr.mxu0 0.0
    %837 = vmatpush1.msra.mxu0 0.0
    %838 = vmatprep.subr.mxu0 0.0
    %839 = vmatpush1.msra.mxu0 0.0
    %840 = vmatprep.subr.mxu0 0.0
    %841 = vmatpush1.msra.mxu0 0.0
    %842 = vmatprep.subr.mxu0 0.0
    %843 = vmatpush1.msra.mxu0 0.0
    %844 = vmatprep.subr.mxu0 0.0
    %845 = vmatpush1.msra.mxu0 0.0
    %846 = vmatprep.subr.mxu0 0.0
    %847 = vmatpush1.msra.mxu0 0.0
    %848 = vmatprep.subr.mxu0 0.0
    %849 = vmatpush1.msra.mxu0 0.0
    %850 = vmatprep.subr.mxu0 0.0
    %851 = vmatpush1.msra.mxu0 0.0
    %852 = vmatprep.subr.mxu0 0.0
    %853 = vmatpush1.msra.mxu0 0.0
    %854 = vmatprep.subr.mxu0 0.0
    %855 = vmatpush1.msra.mxu0 0.0
    %856 = vmatprep.subr.mxu0 0.0
    %857 = vmatpush1.msra.mxu0 0.0
    %858 = vmatprep.mubr.f32.mxu0 0.0
    %859 = vmatmul.mubr.f32.gmra.mrb[0].mxu0 %v89
    %v860 = vpop.f32.mrb[0].mxu0
    %v861 = vadd.f32 0.0, %v860
    %v862 = vpop.f32.mrb[0].mxu0
    %863 = vdwg.mxu0
    %864 = vmatprep.subr.mxu0 0.0
    %865 = vmatpush1.msra.mxu0 %v63
    %866 = vmatprep.subr.mxu0 0.0
    %867 = vmatpush1.msra.mxu0 %v64
    %868 = vmatprep.subr.mxu0 0.0
    %869 = vmatpush1.msra.mxu0 %v65
    %870 = vmatprep.subr.mxu0 0.0
    %871 = vmatpush1.msra.mxu0 %v66
    %872 = vmatprep.subr.mxu0 0.0
    %873 = vmatpush1.msra.mxu0 0.0
    %874 = vmatprep.subr.mxu0 0.0
    %875 = vmatpush1.msra.mxu0 0.0
    %876 = vmatprep.subr.mxu0 0.0
    %877 = vmatpush1.msra.mxu0 0.0
    %878 = vmatprep.subr.mxu0 0.0
    %879 = vmatpush1.msra.mxu0 0.0
    %880 = vmatprep.subr.mxu0 0.0
    %881 = vmatpush1.msra.mxu0 0.0
    %882 = vmatprep.subr.mxu0 0.0
    %883 = vmatpush1.msra.mxu0 0.0
    %884 = vmatprep.subr.mxu0 0.0
    %885 = vmatpush1.msra.mxu0 0.0
    %886 = vmatprep.subr.mxu0 0.0
    %887 = vmatpush1.msra.mxu0 0.0
    %888 = vmatprep.subr.mxu0 0.0
    %889 = vmatpush1.msra.mxu0 0.0
    %890 = vmatprep.subr.mxu0 0.0
    %891 = vmatpush1.msra.mxu0 0.0
    %892 = vmatprep.subr.mxu0 0.0
    %893 = vmatpush1.msra.mxu0 0.0
    %894 = vmatprep.subr.mxu0 0.0
    %895 = vmatpush1.msra.mxu0 0.0
    %896 = vmatprep.subr.mxu0 0.0
    %897 = vmatpush1.msra.mxu0 0.0
    %898 = vmatprep.subr.mxu0 0.0
    %899 = vmatpush1.msra.mxu0 0.0
    %900 = vmatprep.subr.mxu0 0.0
    %901 = vmatpush1.msra.mxu0 0.0
    %902 = vmatprep.subr.mxu0 0.0
    %903 = vmatpush1.msra.mxu0 0.0
    %904 = vmatprep.subr.mxu0 0.0
    %905 = vmatpush1.msra.mxu0 0.0
    %906 = vmatprep.subr.mxu0 0.0
    %907 = vmatpush1.msra.mxu0 0.0
    %908 = vmatprep.subr.mxu0 0.0
    %909 = vmatpush1.msra.mxu0 0.0
    %910 = vmatprep.subr.mxu0 0.0
    %911 = vmatpush1.msra.mxu0 0.0
    %912 = vmatprep.subr.mxu0 0.0
    %913 = vmatpush1.msra.mxu0 0.0
    %914 = vmatprep.subr.mxu0 0.0
    %915 = vmatpush1.msra.mxu0 0.0
    %916 = vmatprep.subr.mxu0 0.0
    %917 = vmatpush1.msra.mxu0 0.0
    %918 = vmatprep.subr.mxu0 0.0
    %919 = vmatpush1.msra.mxu0 0.0
    %920 = vmatprep.subr.mxu0 0.0
    %921 = vmatpush1.msra.mxu0 0.0
    %922 = vmatprep.subr.mxu0 0.0
    %923 = vmatpush1.msra.mxu0 0.0
    %924 = vmatprep.subr.mxu0 0.0
    %925 = vmatpush1.msra.mxu0 0.0
    %926 = vmatprep.subr.mxu0 0.0
    %927 = vmatpush1.msra.mxu0 0.0
    %928 = vmatprep.mubr.f32.mxu0 0.0
    %929 = vmatmul.mubr.f32.gmra.mrb[0].mxu0 %v89
    %v930 = vpop.f32.mrb[0].mxu0
    %v931 = vadd.f32 0.0, %v930
    %v932 = vpop.f32.mrb[0].mxu0
    %933 = vdwg.mxu0
    %934 = vmatprep.subr.mxu0 0.0
    %935 = vmatpush1.msra.mxu0 %v51
    %936 = vmatprep.subr.mxu0 0.0
    %937 = vmatpush1.msra.mxu0 %v52
    %938 = vmatprep.subr.mxu0 0.0
    %939 = vmatpush1.msra.mxu0 %v53
    %940 = vmatprep.subr.mxu0 0.0
    %941 = vmatpush1.msra.mxu0 %v54
    %942 = vmatprep.subr.mxu0 0.0
    %943 = vmatpush1.msra.mxu0 0.0
    %944 = vmatprep.subr.mxu0 0.0
    %945 = vmatpush1.msra.mxu0 0.0
    %946 = vmatprep.subr.mxu0 0.0
    %947 = vmatpush1.msra.mxu0 0.0
    %948 = vmatprep.subr.mxu0 0.0
    %949 = vmatpush1.msra.mxu0 0.0
    %950 = vmatprep.subr.mxu0 0.0
    %951 = vmatpush1.msra.mxu0 0.0
    %952 = vmatprep.subr.mxu0 0.0
    %953 = vmatpush1.msra.mxu0 0.0
    %954 = vmatprep.subr.mxu0 0.0
    %955 = vmatpush1.msra.mxu0 0.0
    %956 = vmatprep.subr.mxu0 0.0
    %957 = vmatpush1.msra.mxu0 0.0
    %958 = vmatprep.subr.mxu0 0.0
    %959 = vmatpush1.msra.mxu0 0.0
    %960 = vmatprep.subr.mxu0 0.0
    %961 = vmatpush1.msra.mxu0 0.0
    %962 = vmatprep.subr.mxu0 0.0
    %963 = vmatpush1.msra.mxu0 0.0
    %964 = vmatprep.subr.mxu0 0.0
    %965 = vmatpush1.msra.mxu0 0.0
    %966 = vmatprep.subr.mxu0 0.0
    %967 = vmatpush1.msra.mxu0 0.0
    %968 = vmatprep.subr.mxu0 0.0
    %969 = vmatpush1.msra.mxu0 0.0
    %970 = vmatprep.subr.mxu0 0.0
    %971 = vmatpush1.msra.mxu0 0.0
    %972 = vmatprep.subr.mxu0 0.0
    %973 = vmatpush1.msra.mxu0 0.0
    %974 = vmatprep.subr.mxu0 0.0
    %975 = vmatpush1.msra.mxu0 0.0
    %976 = vmatprep.subr.mxu0 0.0
    %977 = vmatpush1.msra.mxu0 0.0
    %978 = vmatprep.subr.mxu0 0.0
    %979 = vmatpush1.msra.mxu0 0.0
    %980 = vmatprep.subr.mxu0 0.0
    %981 = vmatpush1.msra.mxu0 0.0
    %982 = vmatprep.subr.mxu0 0.0
    %983 = vmatpush1.msra.mxu0 0.0
    %984 = vmatprep.subr.mxu0 0.0
    %985 = vmatpush1.msra.mxu0 0.0
    %986 = vmatprep.subr.mxu0 0.0
    %987 = vmatpush1.msra.mxu0 0.0
    %988 = vmatprep.subr.mxu0 0.0
    %989 = vmatpush1.msra.mxu0 0.0
    %990 = vmatprep.subr.mxu0 0.0
    %991 = vmatpush1.msra.mxu0 0.0
    %992 = vmatprep.subr.mxu0 0.0
    %993 = vmatpush1.msra.mxu0 0.0
    %994 = vmatprep.subr.mxu0 0.0
    %995 = vmatpush1.msra.mxu0 0.0
    %996 = vmatprep.subr.mxu0 0.0
    %997 = vmatpush1.msra.mxu0 0.0
    %998 = vmatprep.mubr.f32.mxu0 0.0
    %999 = vmatmul.mubr.f32.gmra.mrb[0].mxu0 %v372
    %v1000 = vpop.f32.mrb[0].mxu0
    %v1001 = vadd.f32 0.0, %v1000
    %v1002 = vpop.f32.mrb[0].mxu0
    %1003 = vdwg.mxu0
    %1004 = vmatprep.subr.mxu0 0.0
    %1005 = vmatpush1.msra.mxu0 %v55
    %1006 = vmatprep.subr.mxu0 0.0
    %1007 = vmatpush1.msra.mxu0 %v56
    %1008 = vmatprep.subr.mxu0 0.0
    %1009 = vmatpush1.msra.mxu0 %v57
    %1010 = vmatprep.subr.mxu0 0.0
    %1011 = vmatpush1.msra.mxu0 %v58
    %1012 = vmatprep.subr.mxu0 0.0
    %1013 = vmatpush1.msra.mxu0 0.0
    %1014 = vmatprep.subr.mxu0 0.0
    %1015 = vmatpush1.msra.mxu0 0.0
    %1016 = vmatprep.subr.mxu0 0.0
    %1017 = vmatpush1.msra.mxu0 0.0
    %1018 = vmatprep.subr.mxu0 0.0
    %1019 = vmatpush1.msra.mxu0 0.0
    %1020 = vmatprep.subr.mxu0 0.0
    %1021 = vmatpush1.msra.mxu0 0.0
    %1022 = vmatprep.subr.mxu0 0.0
    %1023 = vmatpush1.msra.mxu0 0.0
    %1024 = vmatprep.subr.mxu0 0.0
    %1025 = vmatpush1.msra.mxu0 0.0
    %1026 = vmatprep.subr.mxu0 0.0
    %1027 = vmatpush1.msra.mxu0 0.0
    %1028 = vmatprep.subr.mxu0 0.0
    %1029 = vmatpush1.msra.mxu0 0.0
    %1030 = vmatprep.subr.mxu0 0.0
    %1031 = vmatpush1.msra.mxu0 0.0
    %1032 = vmatprep.subr.mxu0 0.0
    %1033 = vmatpush1.msra.mxu0 0.0
    %1034 = vmatprep.subr.mxu0 0.0
    %1035 = vmatpush1.msra.mxu0 0.0
    %1036 = vmatprep.subr.mxu0 0.0
    %1037 = vmatpush1.msra.mxu0 0.0
    %1038 = vmatprep.subr.mxu0 0.0
    %1039 = vmatpush1.msra.mxu0 0.0
    %1040 = vmatprep.subr.mxu0 0.0
    %1041 = vmatpush1.msra.mxu0 0.0
    %1042 = vmatprep.subr.mxu0 0.0
    %1043 = vmatpush1.msra.mxu0 0.0
    %1044 = vmatprep.subr.mxu0 0.0
    %1045 = vmatpush1.msra.mxu0 0.0
    %1046 = vmatprep.subr.mxu0 0.0
    %1047 = vmatpush1.msra.mxu0 0.0
    %1048 = vmatprep.subr.mxu0 0.0
    %1049 = vmatpush1.msra.mxu0 0.0
    %1050 = vmatprep.subr.mxu0 0.0
    %1051 = vmatpush1.msra.mxu0 0.0
    %1052 = vmatprep.subr.mxu0 0.0
    %1053 = vmatpush1.msra.mxu0 0.0
    %1054 = vmatprep.subr.mxu0 0.0
    %1055 = vmatpush1.msra.mxu0 0.0
    %1056 = vmatprep.subr.mxu0 0.0
    %1057 = vmatpush1.msra.mxu0 0.0
    %1058 = vmatprep.subr.mxu0 0.0
    %1059 = vmatpush1.msra.mxu0 0.0
    %1060 = vmatprep.subr.mxu0 0.0
    %1061 = vmatpush1.msra.mxu0 0.0
    %1062 = vmatprep.subr.mxu0 0.0
    %1063 = vmatpush1.msra.mxu0 0.0
    %1064 = vmatprep.subr.mxu0 0.0
    %1065 = vmatpush1.msra.mxu0 0.0
    %1066 = vmatprep.subr.mxu0 0.0
    %1067 = vmatpush1.msra.mxu0 0.0
    %1068 = vmatprep.mubr.f32.mxu0 0.0
    %1069 = vmatmul.mubr.f32.gmra.mrb[0].mxu0 %v372
    %v1070 = vpop.f32.mrb[0].mxu0
    %v1071 = vadd.f32 0.0, %v1070
    %v1072 = vpop.f32.mrb[0].mxu0
    %1073 = vdwg.mxu0
    %1074 = vmatprep.subr.mxu0 0.0
    %1075 = vmatpush1.msra.mxu0 %v59
    %1076 = vmatprep.subr.mxu0 0.0
    %1077 = vmatpush1.msra.mxu0 %v60
    %1078 = vmatprep.subr.mxu0 0.0
    %1079 = vmatpush1.msra.mxu0 %v61
    %1080 = vmatprep.subr.mxu0 0.0
    %1081 = vmatpush1.msra.mxu0 %v62
    %1082 = vmatprep.subr.mxu0 0.0
    %1083 = vmatpush1.msra.mxu0 0.0
    %1084 = vmatprep.subr.mxu0 0.0
    %1085 = vmatpush1.msra.mxu0 0.0
    %1086 = vmatprep.subr.mxu0 0.0
    %1087 = vmatpush1.msra.mxu0 0.0
    %1088 = vmatprep.subr.mxu0 0.0
    %1089 = vmatpush1.msra.mxu0 0.0
    %1090 = vmatprep.subr.mxu0 0.0
    %1091 = vmatpush1.msra.mxu0 0.0
    %1092 = vmatprep.subr.mxu0 0.0
    %1093 = vmatpush1.msra.mxu0 0.0
    %1094 = vmatprep.subr.mxu0 0.0
    %1095 = vmatpush1.msra.mxu0 0.0
    %1096 = vmatprep.subr.mxu0 0.0
    %1097 = vmatpush1.msra.mxu0 0.0
    %1098 = vmatprep.subr.mxu0 0.0
    %1099 = vmatpush1.msra.mxu0 0.0
    %1100 = vmatprep.subr.mxu0 0.0
    %1101 = vmatpush1.msra.mxu0 0.0
    %1102 = vmatprep.subr.mxu0 0.0
    %1103 = vmatpush1.msra.mxu0 0.0
    %1104 = vmatprep.subr.mxu0 0.0
    %1105 = vmatpush1.msra.mxu0 0.0
    %1106 = vmatprep.subr.mxu0 0.0
    %1107 = vmatpush1.msra.mxu0 0.0
    %1108 = vmatprep.subr.mxu0 0.0
    %1109 = vmatpush1.msra.mxu0 0.0
    %1110 = vmatprep.subr.mxu0 0.0
    %1111 = vmatpush1.msra.mxu0 0.0
    %1112 = vmatprep.subr.mxu0 0.0
    %1113 = vmatpush1.msra.mxu0 0.0
    %1114 = vmatprep.subr.mxu0 0.0
    %1115 = vmatpush1.msra.mxu0 0.0
    %1116 = vmatprep.subr.mxu0 0.0
    %1117 = vmatpush1.msra.mxu0 0.0
    %1118 = vmatprep.subr.mxu0 0.0
    %1119 = vmatpush1.msra.mxu0 0.0
    %1120 = vmatprep.subr.mxu0 0.0
    %1121 = vmatpush1.msra.mxu0 0.0
    %1122 = vmatprep.subr.mxu0 0.0
    %1123 = vmatpush1.msra.mxu0 0.0
    %1124 = vmatprep.subr.mxu0 0.0
    %1125 = vmatpush1.msra.mxu0 0.0
    %1126 = vmatprep.subr.mxu0 0.0
    %1127 = vmatpush1.msra.mxu0 0.0
    %1128 = vmatprep.subr.mxu0 0.0
    %1129 = vmatpush1.msra.mxu0 0.0
    %1130 = vmatprep.subr.mxu0 0.0
    %1131 = vmatpush1.msra.mxu0 0.0
    %1132 = vmatprep.subr.mxu0 0.0
    %1133 = vmatpush1.msra.mxu0 0.0
    %1134 = vmatprep.subr.mxu0 0.0
    %1135 = vmatpush1.msra.mxu0 0.0
    %1136 = vmatprep.subr.mxu0 0.0
    %1137 = vmatpush1.msra.mxu0 0.0
    %1138 = vmatprep.mubr.f32.mxu0 0.0
    %1139 = vmatmul.mubr.f32.gmra.mrb[0].mxu0 %v372
    %v1140 = vpop.f32.mrb[0].mxu0
    %v1141 = vadd.f32 0.0, %v1140
    %v1142 = vpop.f32.mrb[0].mxu0
    %1143 = vdwg.mxu0
    %1144 = vmatprep.subr.mxu0 0.0
    %1145 = vmatpush1.msra.mxu0 %v63
    %1146 = vmatprep.subr.mxu0 0.0
    %1147 = vmatpush1.msra.mxu0 %v64
    %1148 = vmatprep.subr.mxu0 0.0
    %1149 = vmatpush1.msra.mxu0 %v65
    %1150 = vmatprep.subr.mxu0 0.0
    %1151 = vmatpush1.msra.mxu0 %v66
    %1152 = vmatprep.subr.mxu0 0.0
    %1153 = vmatpush1.msra.mxu0 0.0
    %1154 = vmatprep.subr.mxu0 0.0
    %1155 = vmatpush1.msra.mxu0 0.0
    %1156 = vmatprep.subr.mxu0 0.0
    %1157 = vmatpush1.msra.mxu0 0.0
    %1158 = vmatprep.subr.mxu0 0.0
    %1159 = vmatpush1.msra.mxu0 0.0
    %1160 = vmatprep.subr.mxu0 0.0
    %1161 = vmatpush1.msra.mxu0 0.0
    %1162 = vmatprep.subr.mxu0 0.0
    %1163 = vmatpush1.msra.mxu0 0.0
    %1164 = vmatprep.subr.mxu0 0.0
    %1165 = vmatpush1.msra.mxu0 0.0
    %1166 = vmatprep.subr.mxu0 0.0
    %1167 = vmatpush1.msra.mxu0 0.0
    %1168 = vmatprep.subr.mxu0 0.0
    %1169 = vmatpush1.msra.mxu0 0.0
    %1170 = vmatprep.subr.mxu0 0.0
    %1171 = vmatpush1.msra.mxu0 0.0
    %1172 = vmatprep.subr.mxu0 0.0
    %1173 = vmatpush1.msra.mxu0 0.0
    %1174 = vmatprep.subr.mxu0 0.0
    %1175 = vmatpush1.msra.mxu0 0.0
    %1176 = vmatprep.subr.mxu0 0.0
    %1177 = vmatpush1.msra.mxu0 0.0
    %1178 = vmatprep.subr.mxu0 0.0
    %1179 = vmatpush1.msra.mxu0 0.0
    %1180 = vmatprep.subr.mxu0 0.0
    %1181 = vmatpush1.msra.mxu0 0.0
    %1182 = vmatprep.subr.mxu0 0.0
    %1183 = vmatpush1.msra.mxu0 0.0
    %1184 = vmatprep.subr.mxu0 0.0
    %1185 = vmatpush1.msra.mxu0 0.0
    %1186 = vmatprep.subr.mxu0 0.0
    %1187 = vmatpush1.msra.mxu0 0.0
    %1188 = vmatprep.subr.mxu0 0.0
    %1189 = vmatpush1.msra.mxu0 0.0
    %1190 = vmatprep.subr.mxu0 0.0
    %1191 = vmatpush1.msra.mxu0 0.0
    %1192 = vmatprep.subr.mxu0 0.0
    %1193 = vmatpush1.msra.mxu0 0.0
    %1194 = vmatprep.subr.mxu0 0.0
    %1195 = vmatpush1.msra.mxu0 0.0
    %1196 = vmatprep.subr.mxu0 0.0
    %1197 = vmatpush1.msra.mxu0 0.0
    %1198 = vmatprep.subr.mxu0 0.0
    %1199 = vmatpush1.msra.mxu0 0.0
    %1200 = vmatprep.subr.mxu0 0.0
    %1201 = vmatpush1.msra.mxu0 0.0
    %1202 = vmatprep.subr.mxu0 0.0
    %1203 = vmatpush1.msra.mxu0 0.0
    %1204 = vmatprep.subr.mxu0 0.0
    %1205 = vmatpush1.msra.mxu0 0.0
    %1206 = vmatprep.subr.mxu0 0.0
    %1207 = vmatpush1.msra.mxu0 0.0
    %1208 = vmatprep.mubr.f32.mxu0 0.0
    %1209 = vmatmul.mubr.f32.gmra.mrb[0].mxu0 %v372
    %v1210 = vpop.f32.mrb[0].mxu0
    %v1211 = vadd.f32 0.0, %v1210
    %v1212 = vpop.f32.mrb[0].mxu0
    %1213 = vdwg.mxu0
    %1214 = vmatprep.subr.mxu0 0.0
    %1215 = vmatpush1.msra.mxu0 %v67
    %1216 = vmatprep.subr.mxu0 0.0
    %1217 = vmatpush1.msra.mxu0 %v68
    %1218 = vmatprep.subr.mxu0 0.0
    %1219 = vmatpush1.msra.mxu0 %v69
    %1220 = vmatprep.subr.mxu0 0.0
    %1221 = vmatpush1.msra.mxu0 %v70
    %1222 = vmatprep.subr.mxu0 0.0
    %1223 = vmatpush1.msra.mxu0 0.0
    %1224 = vmatprep.subr.mxu0 0.0
    %1225 = vmatpush1.msra.mxu0 0.0
    %1226 = vmatprep.subr.mxu0 0.0
    %1227 = vmatpush1.msra.mxu0 0.0
    %1228 = vmatprep.subr.mxu0 0.0
    %1229 = vmatpush1.msra.mxu0 0.0
    %1230 = vmatprep.subr.mxu0 0.0
    %1231 = vmatpush1.msra.mxu0 0.0
    %1232 = vmatprep.subr.mxu0 0.0
    %1233 = vmatpush1.msra.mxu0 0.0
    %1234 = vmatprep.subr.mxu0 0.0
    %1235 = vmatpush1.msra.mxu0 0.0
    %1236 = vmatprep.subr.mxu0 0.0
    %1237 = vmatpush1.msra.mxu0 0.0
    %1238 = vmatprep.subr.mxu0 0.0
    %1239 = vmatpush1.msra.mxu0 0.0
    %1240 = vmatprep.subr.mxu0 0.0
    %1241 = vmatpush1.msra.mxu0 0.0
    %1242 = vmatprep.subr.mxu0 0.0
    %1243 = vmatpush1.msra.mxu0 0.0
    %1244 = vmatprep.subr.mxu0 0.0
    %1245 = vmatpush1.msra.mxu0 0.0
    %1246 = vmatprep.subr.mxu0 0.0
    %1247 = vmatpush1.msra.mxu0 0.0
    %1248 = vmatprep.subr.mxu0 0.0
    %1249 = vmatpush1.msra.mxu0 0.0
    %1250 = vmatprep.subr.mxu0 0.0
    %1251 = vmatpush1.msra.mxu0 0.0
    %1252 = vmatprep.subr.mxu0 0.0
    %1253 = vmatpush1.msra.mxu0 0.0
    %1254 = vmatprep.subr.mxu0 0.0
    %1255 = vmatpush1.msra.mxu0 0.0
    %1256 = vmatprep.subr.mxu0 0.0
    %1257 = vmatpush1.msra.mxu0 0.0
    %1258 = vmatprep.subr.mxu0 0.0
    %1259 = vmatpush1.msra.mxu0 0.0
    %1260 = vmatprep.subr.mxu0 0.0
    %1261 = vmatpush1.msra.mxu0 0.0
    %1262 = vmatprep.subr.mxu0 0.0
    %1263 = vmatpush1.msra.mxu0 0.0
    %1264 = vmatprep.subr.mxu0 0.0
    %1265 = vmatpush1.msra.mxu0 0.0
    %1266 = vmatprep.subr.mxu0 0.0
    %1267 = vmatpush1.msra.mxu0 0.0
    %1268 = vmatprep.subr.mxu0 0.0
    %1269 = vmatpush1.msra.mxu0 0.0
    %1270 = vmatprep.subr.mxu0 0.0
    %1271 = vmatpush1.msra.mxu0 0.0
    %1272 = vmatprep.subr.mxu0 0.0
    %1273 = vmatpush1.msra.mxu0 0.0
    %1274 = vmatprep.subr.mxu0 0.0
    %1275 = vmatpush1.msra.mxu0 0.0
    %1276 = vmatprep.subr.mxu0 0.0
    %1277 = vmatpush1.msra.mxu0 0.0
    %1278 = vmatprep.mubr.f32.mxu0 0.0
    %1279 = vmatmul.mubr.f32.gmra.mrb[0].mxu0 %v89
    %v1280 = vpop.f32.mrb[0].mxu0
    %v1281 = vadd.f32 0.0, %v1280
    %v1282 = vpop.f32.mrb[0].mxu0
    %1283 = vdwg.mxu0
    %1284 = vmatprep.subr.mxu0 0.0
    %1285 = vmatpush1.msra.mxu0 %v71
    %1286 = vmatprep.subr.mxu0 0.0
    %1287 = vmatpush1.msra.mxu0 %v72
    %1288 = vmatprep.subr.mxu0 0.0
    %1289 = vmatpush1.msra.mxu0 %v73
    %1290 = vmatprep.subr.mxu0 0.0
    %1291 = vmatpush1.msra.mxu0 %v74
    %1292 = vmatprep.subr.mxu0 0.0
    %1293 = vmatpush1.msra.mxu0 0.0
    %1294 = vmatprep.subr.mxu0 0.0
    %1295 = vmatpush1.msra.mxu0 0.0
    %1296 = vmatprep.subr.mxu0 0.0
    %1297 = vmatpush1.msra.mxu0 0.0
    %1298 = vmatprep.subr.mxu0 0.0
    %1299 = vmatpush1.msra.mxu0 0.0
    %1300 = vmatprep.subr.mxu0 0.0
    %1301 = vmatpush1.msra.mxu0 0.0
    %1302 = vmatprep.subr.mxu0 0.0
    %1303 = vmatpush1.msra.mxu0 0.0
    %1304 = vmatprep.subr.mxu0 0.0
    %1305 = vmatpush1.msra.mxu0 0.0
    %1306 = vmatprep.subr.mxu0 0.0
    %1307 = vmatpush1.msra.mxu0 0.0
    %1308 = vmatprep.subr.mxu0 0.0
    %1309 = vmatpush1.msra.mxu0 0.0
    %1310 = vmatprep.subr.mxu0 0.0
    %1311 = vmatpush1.msra.mxu0 0.0
    %1312 = vmatprep.subr.mxu0 0.0
    %1313 = vmatpush1.msra.mxu0 0.0
    %1314 = vmatprep.subr.mxu0 0.0
    %1315 = vmatpush1.msra.mxu0 0.0
    %1316 = vmatprep.subr.mxu0 0.0
    %1317 = vmatpush1.msra.mxu0 0.0
    %1318 = vmatprep.subr.mxu0 0.0
    %1319 = vmatpush1.msra.mxu0 0.0
    %1320 = vmatprep.subr.mxu0 0.0
    %1321 = vmatpush1.msra.mxu0 0.0
    %1322 = vmatprep.subr.mxu0 0.0
    %1323 = vmatpush1.msra.mxu0 0.0
    %1324 = vmatprep.subr.mxu0 0.0
    %1325 = vmatpush1.msra.mxu0 0.0
    %1326 = vmatprep.subr.mxu0 0.0
    %1327 = vmatpush1.msra.mxu0 0.0
    %1328 = vmatprep.subr.mxu0 0.0
    %1329 = vmatpush1.msra.mxu0 0.0
    %1330 = vmatprep.subr.mxu0 0.0
    %1331 = vmatpush1.msra.mxu0 0.0
    %1332 = vmatprep.subr.mxu0 0.0
    %1333 = vmatpush1.msra.mxu0 0.0
    %1334 = vmatprep.subr.mxu0 0.0
    %1335 = vmatpush1.msra.mxu0 0.0
    %1336 = vmatprep.subr.mxu0 0.0
    %1337 = vmatpush1.msra.mxu0 0.0
    %1338 = vmatprep.subr.mxu0 0.0
    %1339 = vmatpush1.msra.mxu0 0.0
    %1340 = vmatprep.subr.mxu0 0.0
    %1341 = vmatpush1.msra.mxu0 0.0
    %1342 = vmatprep.subr.mxu0 0.0
    %1343 = vmatpush1.msra.mxu0 0.0
    %1344 = vmatprep.subr.mxu0 0.0
    %1345 = vmatpush1.msra.mxu0 0.0
    %1346 = vmatprep.subr.mxu0 0.0
    %1347 = vmatpush1.msra.mxu0 0.0
    %1348 = vmatprep.mubr.f32.mxu0 0.0
    %1349 = vmatmul.mubr.f32.gmra.mrb[0].mxu0 %v89
    %v1350 = vpop.f32.mrb[0].mxu0
    %v1351 = vadd.f32 0.0, %v1350
    %v1352 = vpop.f32.mrb[0].mxu0
    %1353 = vdwg.mxu0
    %1354 = vmatprep.subr.mxu0 0.0
    %1355 = vmatpush1.msra.mxu0 %v75
    %1356 = vmatprep.subr.mxu0 0.0
    %1357 = vmatpush1.msra.mxu0 %v76
    %1358 = vmatprep.subr.mxu0 0.0
    %1359 = vmatpush1.msra.mxu0 %v77
    %1360 = vmatprep.subr.mxu0 0.0
    %1361 = vmatpush1.msra.mxu0 %v78
    %1362 = vmatprep.subr.mxu0 0.0
    %1363 = vmatpush1.msra.mxu0 0.0
    %1364 = vmatprep.subr.mxu0 0.0
    %1365 = vmatpush1.msra.mxu0 0.0
    %1366 = vmatprep.subr.mxu0 0.0
    %1367 = vmatpush1.msra.mxu0 0.0
    %1368 = vmatprep.subr.mxu0 0.0
    %1369 = vmatpush1.msra.mxu0 0.0
    %1370 = vmatprep.subr.mxu0 0.0
    %1371 = vmatpush1.msra.mxu0 0.0
    %1372 = vmatprep.subr.mxu0 0.0
    %1373 = vmatpush1.msra.mxu0 0.0
    %1374 = vmatprep.subr.mxu0 0.0
    %1375 = vmatpush1.msra.mxu0 0.0
    %1376 = vmatprep.subr.mxu0 0.0
    %1377 = vmatpush1.msra.mxu0 0.0
    %1378 = vmatprep.subr.mxu0 0.0
    %1379 = vmatpush1.msra.mxu0 0.0
    %1380 = vmatprep.subr.mxu0 0.0
    %1381 = vmatpush1.msra.mxu0 0.0
    %1382 = vmatprep.subr.mxu0 0.0
    %1383 = vmatpush1.msra.mxu0 0.0
    %1384 = vmatprep.subr.mxu0 0.0
    %1385 = vmatpush1.msra.mxu0 0.0
    %1386 = vmatprep.subr.mxu0 0.0
    %1387 = vmatpush1.msra.mxu0 0.0
    %1388 = vmatprep.subr.mxu0 0.0
    %1389 = vmatpush1.msra.mxu0 0.0
    %1390 = vmatprep.subr.mxu0 0.0
    %1391 = vmatpush1.msra.mxu0 0.0
    %1392 = vmatprep.subr.mxu0 0.0
    %1393 = vmatpush1.msra.mxu0 0.0
    %1394 = vmatprep.subr.mxu0 0.0
    %1395 = vmatpush1.msra.mxu0 0.0
    %1396 = vmatprep.subr.mxu0 0.0
    %1397 = vmatpush1.msra.mxu0 0.0
    %1398 = vmatprep.subr.mxu0 0.0
    %1399 = vmatpush1.msra.mxu0 0.0
    %1400 = vmatprep.subr.mxu0 0.0
    %1401 = vmatpush1.msra.mxu0 0.0
    %1402 = vmatprep.subr.mxu0 0.0
    %1403 = vmatpush1.msra.mxu0 0.0
    %1404 = vmatprep.subr.mxu0 0.0
    %1405 = vmatpush1.msra.mxu0 0.0
    %1406 = vmatprep.subr.mxu0 0.0
    %1407 = vmatpush1.msra.mxu0 0.0
    %1408 = vmatprep.subr.mxu0 0.0
    %1409 = vmatpush1.msra.mxu0 0.0
    %1410 = vmatprep.subr.mxu0 0.0
    %1411 = vmatpush1.msra.mxu0 0.0
    %1412 = vmatprep.subr.mxu0 0.0
    %1413 = vmatpush1.msra.mxu0 0.0
    %1414 = vmatprep.subr.mxu0 0.0
    %1415 = vmatpush1.msra.mxu0 0.0
    %1416 = vmatprep.subr.mxu0 0.0
    %1417 = vmatpush1.msra.mxu0 0.0
    %1418 = vmatprep.mubr.f32.mxu0 0.0
    %1419 = vmatmul.mubr.f32.gmra.mrb[0].mxu0 %v89
    %v1420 = vpop.f32.mrb[0].mxu0
    %v1421 = vadd.f32 0.0, %v1420
    %v1422 = vpop.f32.mrb[0].mxu0
    %1423 = vdwg.mxu0
    %1424 = vmatprep.subr.mxu0 0.0
    %1425 = vmatpush1.msra.mxu0 %v79
    %1426 = vmatprep.subr.mxu0 0.0
    %1427 = vmatpush1.msra.mxu0 %v80
    %1428 = vmatprep.subr.mxu0 0.0
    %1429 = vmatpush1.msra.mxu0 %v81
    %1430 = vmatprep.subr.mxu0 0.0
    %1431 = vmatpush1.msra.mxu0 %v82
    %1432 = vmatprep.subr.mxu0 0.0
    %1433 = vmatpush1.msra.mxu0 0.0
    %1434 = vmatprep.subr.mxu0 0.0
    %1435 = vmatpush1.msra.mxu0 0.0
    %1436 = vmatprep.subr.mxu0 0.0
    %1437 = vmatpush1.msra.mxu0 0.0
    %1438 = vmatprep.subr.mxu0 0.0
    %1439 = vmatpush1.msra.mxu0 0.0
    %1440 = vmatprep.subr.mxu0 0.0
    %1441 = vmatpush1.msra.mxu0 0.0
    %1442 = vmatprep.subr.mxu0 0.0
    %1443 = vmatpush1.msra.mxu0 0.0
    %1444 = vmatprep.subr.mxu0 0.0
    %1445 = vmatpush1.msra.mxu0 0.0
    %1446 = vmatprep.subr.mxu0 0.0
    %1447 = vmatpush1.msra.mxu0 0.0
    %1448 = vmatprep.subr.mxu0 0.0
    %1449 = vmatpush1.msra.mxu0 0.0
    %1450 = vmatprep.subr.mxu0 0.0
    %1451 = vmatpush1.msra.mxu0 0.0
    %1452 = vmatprep.subr.mxu0 0.0
    %1453 = vmatpush1.msra.mxu0 0.0
    %1454 = vmatprep.subr.mxu0 0.0
    %1455 = vmatpush1.msra.mxu0 0.0
    %1456 = vmatprep.subr.mxu0 0.0
    %1457 = vmatpush1.msra.mxu0 0.0
    %1458 = vmatprep.subr.mxu0 0.0
    %1459 = vmatpush1.msra.mxu0 0.0
    %1460 = vmatprep.subr.mxu0 0.0
    %1461 = vmatpush1.msra.mxu0 0.0
    %1462 = vmatprep.subr.mxu0 0.0
    %1463 = vmatpush1.msra.mxu0 0.0
    %1464 = vmatprep.subr.mxu0 0.0
    %1465 = vmatpush1.msra.mxu0 0.0
    %1466 = vmatprep.subr.mxu0 0.0
    %1467 = vmatpush1.msra.mxu0 0.0
    %1468 = vmatprep.subr.mxu0 0.0
    %1469 = vmatpush1.msra.mxu0 0.0
    %1470 = vmatprep.subr.mxu0 0.0
    %1471 = vmatpush1.msra.mxu0 0.0
    %1472 = vmatprep.subr.mxu0 0.0
    %1473 = vmatpush1.msra.mxu0 0.0
    %1474 = vmatprep.subr.mxu0 0.0
    %1475 = vmatpush1.msra.mxu0 0.0
    %1476 = vmatprep.subr.mxu0 0.0
    %1477 = vmatpush1.msra.mxu0 0.0
    %1478 = vmatprep.subr.mxu0 0.0
    %1479 = vmatpush1.msra.mxu0 0.0
    %1480 = vmatprep.subr.mxu0 0.0
    %1481 = vmatpush1.msra.mxu0 0.0
    %1482 = vmatprep.subr.mxu0 0.0
    %1483 = vmatpush1.msra.mxu0 0.0
    %1484 = vmatprep.subr.mxu0 0.0
    %1485 = vmatpush1.msra.mxu0 0.0
    %1486 = vmatprep.subr.mxu0 0.0
    %1487 = vmatpush1.msra.mxu0 0.0
    %1488 = vmatprep.mubr.f32.mxu0 0.0
    %1489 = vmatmul.mubr.f32.gmra.mrb[0].mxu0 %v89
    %v1490 = vpop.f32.mrb[0].mxu0
    %v1491 = vadd.f32 0.0, %v1490
    %v1492 = vpop.f32.mrb[0].mxu0
    %1493 = vdwg.mxu0
    %1494 = vmatprep.subr.mxu0 0.0
    %1495 = vmatpush1.msra.mxu0 %v67
    %1496 = vmatprep.subr.mxu0 0.0
    %1497 = vmatpush1.msra.mxu0 %v68
    %1498 = vmatprep.subr.mxu0 0.0
    %1499 = vmatpush1.msra.mxu0 %v69
    %1500 = vmatprep.subr.mxu0 0.0
    %1501 = vmatpush1.msra.mxu0 %v70
    %1502 = vmatprep.subr.mxu0 0.0
    %1503 = vmatpush1.msra.mxu0 0.0
    %1504 = vmatprep.subr.mxu0 0.0
    %1505 = vmatpush1.msra.mxu0 0.0
    %1506 = vmatprep.subr.mxu0 0.0
    %1507 = vmatpush1.msra.mxu0 0.0
    %1508 = vmatprep.subr.mxu0 0.0
    %1509 = vmatpush1.msra.mxu0 0.0
    %1510 = vmatprep.subr.mxu0 0.0
    %1511 = vmatpush1.msra.mxu0 0.0
    %1512 = vmatprep.subr.mxu0 0.0
    %1513 = vmatpush1.msra.mxu0 0.0
    %1514 = vmatprep.subr.mxu0 0.0
    %1515 = vmatpush1.msra.mxu0 0.0
    %1516 = vmatprep.subr.mxu0 0.0
    %1517 = vmatpush1.msra.mxu0 0.0
    %1518 = vmatprep.subr.mxu0 0.0
    %1519 = vmatpush1.msra.mxu0 0.0
    %1520 = vmatprep.subr.mxu0 0.0
    %1521 = vmatpush1.msra.mxu0 0.0
    %1522 = vmatprep.subr.mxu0 0.0
    %1523 = vmatpush1.msra.mxu0 0.0
    %1524 = vmatprep.subr.mxu0 0.0
    %1525 = vmatpush1.msra.mxu0 0.0
    %1526 = vmatprep.subr.mxu0 0.0
    %1527 = vmatpush1.msra.mxu0 0.0
    %1528 = vmatprep.subr.mxu0 0.0
    %1529 = vmatpush1.msra.mxu0 0.0
    %1530 = vmatprep.subr.mxu0 0.0
    %1531 = vmatpush1.msra.mxu0 0.0
    %1532 = vmatprep.subr.mxu0 0.0
    %1533 = vmatpush1.msra.mxu0 0.0
    %1534 = vmatprep.subr.mxu0 0.0
    %1535 = vmatpush1.msra.mxu0 0.0
    %1536 = vmatprep.subr.mxu0 0.0
    %1537 = vmatpush1.msra.mxu0 0.0
    %1538 = vmatprep.subr.mxu0 0.0
    %1539 = vmatpush1.msra.mxu0 0.0
    %1540 = vmatprep.subr.mxu0 0.0
    %1541 = vmatpush1.msra.mxu0 0.0
    %1542 = vmatprep.subr.mxu0 0.0
    %1543 = vmatpush1.msra.mxu0 0.0
    %1544 = vmatprep.subr.mxu0 0.0
    %1545 = vmatpush1.msra.mxu0 0.0
    %1546 = vmatprep.subr.mxu0 0.0
    %1547 = vmatpush1.msra.mxu0 0.0
    %1548 = vmatprep.subr.mxu0 0.0
    %1549 = vmatpush1.msra.mxu0 0.0
    %1550 = vmatprep.subr.mxu0 0.0
    %1551 = vmatpush1.msra.mxu0 0.0
    %1552 = vmatprep.subr.mxu0 0.0
    %1553 = vmatpush1.msra.mxu0 0.0
    %1554 = vmatprep.subr.mxu0 0.0
    %1555 = vmatpush1.msra.mxu0 0.0
    %1556 = vmatprep.subr.mxu0 0.0
    %1557 = vmatpush1.msra.mxu0 0.0
    %1558 = vmatprep.mubr.f32.mxu0 0.0
    %1559 = vmatmul.mubr.f32.gmra.mrb[0].mxu0 %v372
    %v1560 = vpop.f32.mrb[0].mxu0
    %v1561 = vadd.f32 0.0, %v1560
    %v1562 = vpop.f32.mrb[0].mxu0
    %1563 = vdwg.mxu0
    %1564 = vmatprep.subr.mxu0 0.0
    %1565 = vmatpush1.msra.mxu0 %v71
    %1566 = vmatprep.subr.mxu0 0.0
    %1567 = vmatpush1.msra.mxu0 %v72
    %1568 = vmatprep.subr.mxu0 0.0
    %1569 = vmatpush1.msra.mxu0 %v73
    %1570 = vmatprep.subr.mxu0 0.0
    %1571 = vmatpush1.msra.mxu0 %v74
    %1572 = vmatprep.subr.mxu0 0.0
    %1573 = vmatpush1.msra.mxu0 0.0
    %1574 = vmatprep.subr.mxu0 0.0
    %1575 = vmatpush1.msra.mxu0 0.0
    %1576 = vmatprep.subr.mxu0 0.0
    %1577 = vmatpush1.msra.mxu0 0.0
    %1578 = vmatprep.subr.mxu0 0.0
    %1579 = vmatpush1.msra.mxu0 0.0
    %1580 = vmatprep.subr.mxu0 0.0
    %1581 = vmatpush1.msra.mxu0 0.0
    %1582 = vmatprep.subr.mxu0 0.0
    %1583 = vmatpush1.msra.mxu0 0.0
    %1584 = vmatprep.subr.mxu0 0.0
    %1585 = vmatpush1.msra.mxu0 0.0
    %1586 = vmatprep.subr.mxu0 0.0
    %1587 = vmatpush1.msra.mxu0 0.0
    %1588 = vmatprep.subr.mxu0 0.0
    %1589 = vmatpush1.msra.mxu0 0.0
    %1590 = vmatprep.subr.mxu0 0.0
    %1591 = vmatpush1.msra.mxu0 0.0
    %1592 = vmatprep.subr.mxu0 0.0
    %1593 = vmatpush1.msra.mxu0 0.0
    %1594 = vmatprep.subr.mxu0 0.0
    %1595 = vmatpush1.msra.mxu0 0.0
    %1596 = vmatprep.subr.mxu0 0.0
    %1597 = vmatpush1.msra.mxu0 0.0
    %1598 = vmatprep.subr.mxu0 0.0
    %1599 = vmatpush1.msra.mxu0 0.0
    %1600 = vmatprep.subr.mxu0 0.0
    %1601 = vmatpush1.msra.mxu0 0.0
    %1602 = vmatprep.subr.mxu0 0.0
    %1603 = vmatpush1.msra.mxu0 0.0
    %1604 = vmatprep.subr.mxu0 0.0
    %1605 = vmatpush1.msra.mxu0 0.0
    %1606 = vmatprep.subr.mxu0 0.0
    %1607 = vmatpush1.msra.mxu0 0.0
    %1608 = vmatprep.subr.mxu0 0.0
    %1609 = vmatpush1.msra.mxu0 0.0
    %1610 = vmatprep.subr.mxu0 0.0
    %1611 = vmatpush1.msra.mxu0 0.0
    %1612 = vmatprep.subr.mxu0 0.0
    %1613 = vmatpush1.msra.mxu0 0.0
    %1614 = vmatprep.subr.mxu0 0.0
    %1615 = vmatpush1.msra.mxu0 0.0
    %1616 = vmatprep.subr.mxu0 0.0
    %1617 = vmatpush1.msra.mxu0 0.0
    %1618 = vmatprep.subr.mxu0 0.0
    %1619 = vmatpush1.msra.mxu0 0.0
    %1620 = vmatprep.subr.mxu0 0.0
    %1621 = vmatpush1.msra.mxu0 0.0
    %1622 = vmatprep.subr.mxu0 0.0
    %1623 = vmatpush1.msra.mxu0 0.0
    %1624 = vmatprep.subr.mxu0 0.0
    %1625 = vmatpush1.msra.mxu0 0.0
    %1626 = vmatprep.subr.mxu0 0.0
    %1627 = vmatpush1.msra.mxu0 0.0
    %1628 = vmatprep.mubr.f32.mxu0 0.0
    %1629 = vmatmul.mubr.f32.gmra.mrb[0].mxu0 %v372
    %v1630 = vpop.f32.mrb[0].mxu0
    %v1631 = vadd.f32 0.0, %v1630
    %v1632 = vpop.f32.mrb[0].mxu0
    %1633 = vdwg.mxu0
    %1634 = vmatprep.subr.mxu0 0.0
    %1635 = vmatpush1.msra.mxu0 %v75
    %1636 = vmatprep.subr.mxu0 0.0
    %1637 = vmatpush1.msra.mxu0 %v76
    %1638 = vmatprep.subr.mxu0 0.0
    %1639 = vmatpush1.msra.mxu0 %v77
    %1640 = vmatprep.subr.mxu0 0.0
    %1641 = vmatpush1.msra.mxu0 %v78
    %1642 = vmatprep.subr.mxu0 0.0
    %1643 = vmatpush1.msra.mxu0 0.0
    %1644 = vmatprep.subr.mxu0 0.0
    %1645 = vmatpush1.msra.mxu0 0.0
    %1646 = vmatprep.subr.mxu0 0.0
    %1647 = vmatpush1.msra.mxu0 0.0
    %1648 = vmatprep.subr.mxu0 0.0
    %1649 = vmatpush1.msra.mxu0 0.0
    %1650 = vmatprep.subr.mxu0 0.0
    %1651 = vmatpush1.msra.mxu0 0.0
    %1652 = vmatprep.subr.mxu0 0.0
    %1653 = vmatpush1.msra.mxu0 0.0
    %1654 = vmatprep.subr.mxu0 0.0
    %1655 = vmatpush1.msra.mxu0 0.0
    %1656 = vmatprep.subr.mxu0 0.0
    %1657 = vmatpush1.msra.mxu0 0.0
    %1658 = vmatprep.subr.mxu0 0.0
    %1659 = vmatpush1.msra.mxu0 0.0
    %1660 = vmatprep.subr.mxu0 0.0
    %1661 = vmatpush1.msra.mxu0 0.0
    %1662 = vmatprep.subr.mxu0 0.0
    %1663 = vmatpush1.msra.mxu0 0.0
    %1664 = vmatprep.subr.mxu0 0.0
    %1665 = vmatpush1.msra.mxu0 0.0
    %1666 = vmatprep.subr.mxu0 0.0
    %1667 = vmatpush1.msra.mxu0 0.0
    %1668 = vmatprep.subr.mxu0 0.0
    %1669 = vmatpush1.msra.mxu0 0.0
    %1670 = vmatprep.subr.mxu0 0.0
    %1671 = vmatpush1.msra.mxu0 0.0
    %1672 = vmatprep.subr.mxu0 0.0
    %1673 = vmatpush1.msra.mxu0 0.0
    %1674 = vmatprep.subr.mxu0 0.0
    %1675 = vmatpush1.msra.mxu0 0.0
    %1676 = vmatprep.subr.mxu0 0.0
    %1677 = vmatpush1.msra.mxu0 0.0
    %1678 = vmatprep.subr.mxu0 0.0
    %1679 = vmatpush1.msra.mxu0 0.0
    %1680 = vmatprep.subr.mxu0 0.0
    %1681 = vmatpush1.msra.mxu0 0.0
    %1682 = vmatprep.subr.mxu0 0.0
    %1683 = vmatpush1.msra.mxu0 0.0
    %1684 = vmatprep.subr.mxu0 0.0
    %1685 = vmatpush1.msra.mxu0 0.0
    %1686 = vmatprep.subr.mxu0 0.0
    %1687 = vmatpush1.msra.mxu0 0.0
    %1688 = vmatprep.subr.mxu0 0.0
    %1689 = vmatpush1.msra.mxu0 0.0
    %1690 = vmatprep.subr.mxu0 0.0
    %1691 = vmatpush1.msra.mxu0 0.0
    %1692 = vmatprep.subr.mxu0 0.0
    %1693 = vmatpush1.msra.mxu0 0.0
    %1694 = vmatprep.subr.mxu0 0.0
    %1695 = vmatpush1.msra.mxu0 0.0
    %1696 = vmatprep.subr.mxu0 0.0
    %1697 = vmatpush1.msra.mxu0 0.0
    %1698 = vmatprep.mubr.f32.mxu0 0.0
    %1699 = vmatmul.mubr.f32.gmra.mrb[0].mxu0 %v372
    %v1700 = vpop.f32.mrb[0].mxu0
    %v1701 = vadd.f32 0.0, %v1700
    %v1702 = vpop.f32.mrb[0].mxu0
    %1703 = vdwg.mxu0
    %1704 = vmatprep.subr.mxu0 0.0
    %1705 = vmatpush1.msra.mxu0 %v79
    %1706 = vmatprep.subr.mxu0 0.0
    %1707 = vmatpush1.msra.mxu0 %v80
    %1708 = vmatprep.subr.mxu0 0.0
    %1709 = vmatpush1.msra.mxu0 %v81
    %1710 = vmatprep.subr.mxu0 0.0
    %1711 = vmatpush1.msra.mxu0 %v82
    %1712 = vmatprep.subr.mxu0 0.0
    %1713 = vmatpush1.msra.mxu0 0.0
    %1714 = vmatprep.subr.mxu0 0.0
    %1715 = vmatpush1.msra.mxu0 0.0
    %1716 = vmatprep.subr.mxu0 0.0
    %1717 = vmatpush1.msra.mxu0 0.0
    %1718 = vmatprep.subr.mxu0 0.0
    %1719 = vmatpush1.msra.mxu0 0.0
    %1720 = vmatprep.subr.mxu0 0.0
    %1721 = vmatpush1.msra.mxu0 0.0
    %1722 = vmatprep.subr.mxu0 0.0
    %1723 = vmatpush1.msra.mxu0 0.0
    %1724 = vmatprep.subr.mxu0 0.0
    %1725 = vmatpush1.msra.mxu0 0.0
    %1726 = vmatprep.subr.mxu0 0.0
    %1727 = vmatpush1.msra.mxu0 0.0
    %1728 = vmatprep.subr.mxu0 0.0
    %1729 = vmatpush1.msra.mxu0 0.0
    %1730 = vmatprep.subr.mxu0 0.0
    %1731 = vmatpush1.msra.mxu0 0.0
    %1732 = vmatprep.subr.mxu0 0.0
    %1733 = vmatpush1.msra.mxu0 0.0
    %1734 = vmatprep.subr.mxu0 0.0
    %1735 = vmatpush1.msra.mxu0 0.0
    %1736 = vmatprep.subr.mxu0 0.0
    %1737 = vmatpush1.msra.mxu0 0.0
    %1738 = vmatprep.subr.mxu0 0.0
    %1739 = vmatpush1.msra.mxu0 0.0
    %1740 = vmatprep.subr.mxu0 0.0
    %1741 = vmatpush1.msra.mxu0 0.0
    %1742 = vmatprep.subr.mxu0 0.0
    %1743 = vmatpush1.msra.mxu0 0.0
    %1744 = vmatprep.subr.mxu0 0.0
    %1745 = vmatpush1.msra.mxu0 0.0
    %1746 = vmatprep.subr.mxu0 0.0
    %1747 = vmatpush1.msra.mxu0 0.0
    %1748 = vmatprep.subr.mxu0 0.0
    %1749 = vmatpush1.msra.mxu0 0.0
    %1750 = vmatprep.subr.mxu0 0.0
    %1751 = vmatpush1.msra.mxu0 0.0
    %1752 = vmatprep.subr.mxu0 0.0
    %1753 = vmatpush1.msra.mxu0 0.0
    %1754 = vmatprep.subr.mxu0 0.0
    %1755 = vmatpush1.msra.mxu0 0.0
    %1756 = vmatprep.subr.mxu0 0.0
    %1757 = vmatpush1.msra.mxu0 0.0
    %1758 = vmatprep.subr.mxu0 0.0
    %1759 = vmatpush1.msra.mxu0 0.0
    %1760 = vmatprep.subr.mxu0 0.0
    %1761 = vmatpush1.msra.mxu0 0.0
    %1762 = vmatprep.subr.mxu0 0.0
    %1763 = vmatpush1.msra.mxu0 0.0
    %1764 = vmatprep.subr.mxu0 0.0
    %1765 = vmatpush1.msra.mxu0 0.0
    %1766 = vmatprep.subr.mxu0 0.0
    %1767 = vmatpush1.msra.mxu0 0.0
    %1768 = vmatprep.mubr.f32.mxu0 0.0
    %1769 = vmatmul.mubr.f32.gmra.mrb[0].mxu0 %v372
    %v1770 = vpop.f32.mrb[0].mxu0
    %v1771 = vadd.f32 0.0, %v1770
    %v1772 = vpop.f32.mrb[0].mxu0
    %1773 = vdwg.mxu0
    %vm1774 = vcmask 64512
    %v1776 = vsel %vm1774, %v158, 0
    %v1779 = vsel %vm1774, %v721, 0
    %1781 = vmatprep.subr.mxu0 0.0
    %1782 = vmatpush1.xpose.msra.mxu0 %v1779
    %1783 = vmatprep.subr.mxu0 0.0
    %1784 = vmatpush1.xpose.msra.mxu0 0.0
    %1785 = vmatprep.subr.mxu0 0.0
    %1786 = vmatpush1.xpose.msra.mxu0 0.0
    %1787 = vmatprep.subr.mxu0 0.0
    %1788 = vmatpush1.xpose.msra.mxu0 0.0
    %1789 = vmatprep.subr.mxu0 0.0
    %1790 = vmatpush1.xpose.msra.mxu0 0.0
    %1791 = vmatprep.subr.mxu0 0.0
    %1792 = vmatpush1.xpose.msra.mxu0 0.0
    %1793 = vmatprep.subr.mxu0 0.0
    %1794 = vmatpush1.xpose.msra.mxu0 0.0
    %1795 = vmatprep.subr.mxu0 0.0
    %1796 = vmatpush1.xpose.msra.mxu0 0.0
    %1797 = vmatprep.subr.mxu0 0.0
    %1798 = vmatpush1.xpose.msra.mxu0 0.0
    %1799 = vmatprep.subr.mxu0 0.0
    %1800 = vmatpush1.xpose.msra.mxu0 0.0
    %1801 = vmatprep.subr.mxu0 0.0
    %1802 = vmatpush1.xpose.msra.mxu0 0.0
    %1803 = vmatprep.subr.mxu0 0.0
    %1804 = vmatpush1.xpose.msra.mxu0 0.0
    %1805 = vmatprep.subr.mxu0 0.0
    %1806 = vmatpush1.xpose.msra.mxu0 0.0
    %1807 = vmatprep.subr.mxu0 0.0
    %1808 = vmatpush1.xpose.msra.mxu0 0.0
    %1809 = vmatprep.subr.mxu0 0.0
    %1810 = vmatpush1.xpose.msra.mxu0 0.0
    %1811 = vmatprep.subr.mxu0 0.0
    %1812 = vmatpush1.xpose.msra.mxu0 0.0
    %1813 = vmatprep.subr.mxu0 0.0
    %1814 = vmatpush1.xpose.msra.mxu0 0.0
    %1815 = vmatprep.subr.mxu0 0.0
    %1816 = vmatpush1.xpose.msra.mxu0 0.0
    %1817 = vmatprep.subr.mxu0 0.0
    %1818 = vmatpush1.xpose.msra.mxu0 0.0
    %1819 = vmatprep.subr.mxu0 0.0
    %1820 = vmatpush1.xpose.msra.mxu0 0.0
    %1821 = vmatprep.subr.mxu0 0.0
    %1822 = vmatpush1.xpose.msra.mxu0 0.0
    %1823 = vmatprep.subr.mxu0 0.0
    %1824 = vmatpush1.xpose.msra.mxu0 0.0
    %1825 = vmatprep.subr.mxu0 0.0
    %1826 = vmatpush1.xpose.msra.mxu0 0.0
    %1827 = vmatprep.subr.mxu0 0.0
    %1828 = vmatpush1.xpose.msra.mxu0 0.0
    %1829 = vmatprep.subr.mxu0 0.0
    %1830 = vmatpush1.xpose.msra.mxu0 0.0
    %1831 = vmatprep.subr.mxu0 0.0
    %1832 = vmatpush1.xpose.msra.mxu0 0.0
    %1833 = vmatprep.subr.mxu0 0.0
    %1834 = vmatpush1.xpose.msra.mxu0 0.0
    %1835 = vmatprep.subr.mxu0 0.0
    %1836 = vmatpush1.xpose.msra.mxu0 0.0
    %1837 = vmatprep.subr.mxu0 0.0
    %1838 = vmatpush1.xpose.msra.mxu0 0.0
    %1839 = vmatprep.subr.mxu0 0.0
    %1840 = vmatpush1.xpose.msra.mxu0 0.0
    %1841 = vmatprep.subr.mxu0 0.0
    %1842 = vmatpush1.xpose.msra.mxu0 0.0
    %1843 = vmatprep.subr.mxu0 0.0
    %1844 = vmatpush1.xpose.msra.mxu0 0.0
    %1845 = vmatprep.mubr.f32.mxu0 0.0
    %1846 = vmatmul.mubr.f32.gmra.mrb[0].mxu0 %v1776
    %v1847 = vpop.f32.mrb[0].mxu0
    %v1848 = vadd.f32 0.0, %v1847
    %v1849 = vpop.f32.mrb[0].mxu0
    %1850 = vdwg.mxu0
    %v1852 = vsel %vm1774, %v228, 0
    %v1855 = vsel %vm1774, %v791, 0
    %1857 = vmatprep.subr.mxu0 0.0
    %1858 = vmatpush1.xpose.msra.mxu0 %v1855
    %1859 = vmatprep.subr.mxu0 0.0
    %1860 = vmatpush1.xpose.msra.mxu0 0.0
    %1861 = vmatprep.subr.mxu0 0.0
    %1862 = vmatpush1.xpose.msra.mxu0 0.0
    %1863 = vmatprep.subr.mxu0 0.0
    %1864 = vmatpush1.xpose.msra.mxu0 0.0
    %1865 = vmatprep.subr.mxu0 0.0
    %1866 = vmatpush1.xpose.msra.mxu0 0.0
    %1867 = vmatprep.subr.mxu0 0.0
    %1868 = vmatpush1.xpose.msra.mxu0 0.0
    %1869 = vmatprep.subr.mxu0 0.0
    %1870 = vmatpush1.xpose.msra.mxu0 0.0
    %1871 = vmatprep.subr.mxu0 0.0
    %1872 = vmatpush1.xpose.msra.mxu0 0.0
    %1873 = vmatprep.subr.mxu0 0.0
    %1874 = vmatpush1.xpose.msra.mxu0 0.0
    %1875 = vmatprep.subr.mxu0 0.0
    %1876 = vmatpush1.xpose.msra.mxu0 0.0
    %1877 = vmatprep.subr.mxu0 0.0
    %1878 = vmatpush1.xpose.msra.mxu0 0.0
    %1879 = vmatprep.subr.mxu0 0.0
    %1880 = vmatpush1.xpose.msra.mxu0 0.0
    %1881 = vmatprep.subr.mxu0 0.0
    %1882 = vmatpush1.xpose.msra.mxu0 0.0
    %1883 = vmatprep.subr.mxu0 0.0
    %1884 = vmatpush1.xpose.msra.mxu0 0.0
    %1885 = vmatprep.subr.mxu0 0.0
    %1886 = vmatpush1.xpose.msra.mxu0 0.0
    %1887 = vmatprep.subr.mxu0 0.0
    %1888 = vmatpush1.xpose.msra.mxu0 0.0
    %1889 = vmatprep.subr.mxu0 0.0
    %1890 = vmatpush1.xpose.msra.mxu0 0.0
    %1891 = vmatprep.subr.mxu0 0.0
    %1892 = vmatpush1.xpose.msra.mxu0 0.0
    %1893 = vmatprep.subr.mxu0 0.0
    %1894 = vmatpush1.xpose.msra.mxu0 0.0
    %1895 = vmatprep.subr.mxu0 0.0
    %1896 = vmatpush1.xpose.msra.mxu0 0.0
    %1897 = vmatprep.subr.mxu0 0.0
    %1898 = vmatpush1.xpose.msra.mxu0 0.0
    %1899 = vmatprep.subr.mxu0 0.0
    %1900 = vmatpush1.xpose.msra.mxu0 0.0
    %1901 = vmatprep.subr.mxu0 0.0
    %1902 = vmatpush1.xpose.msra.mxu0 0.0
    %1903 = vmatprep.subr.mxu0 0.0
    %1904 = vmatpush1.xpose.msra.mxu0 0.0
    %1905 = vmatprep.subr.mxu0 0.0
    %1906 = vmatpush1.xpose.msra.mxu0 0.0
    %1907 = vmatprep.subr.mxu0 0.0
    %1908 = vmatpush1.xpose.msra.mxu0 0.0
    %1909 = vmatprep.subr.mxu0 0.0
    %1910 = vmatpush1.xpose.msra.mxu0 0.0
    %1911 = vmatprep.subr.mxu0 0.0
    %1912 = vmatpush1.xpose.msra.mxu0 0.0
    %1913 = vmatprep.subr.mxu0 0.0
    %1914 = vmatpush1.xpose.msra.mxu0 0.0
    %1915 = vmatprep.subr.mxu0 0.0
    %1916 = vmatpush1.xpose.msra.mxu0 0.0
    %1917 = vmatprep.subr.mxu0 0.0
    %1918 = vmatpush1.xpose.msra.mxu0 0.0
    %1919 = vmatprep.subr.mxu0 0.0
    %1920 = vmatpush1.xpose.msra.mxu0 0.0
    %1921 = vmatprep.mubr.f32.mxu0 0.0
    %1922 = vmatmul.mubr.f32.gmra.mrb[0].mxu0 %v1852
    %v1923 = vpop.f32.mrb[0].mxu0
    %v1924 = vadd.f32 0.0, %v1923
    %v1925 = vpop.f32.mrb[0].mxu0
    %1926 = vdwg.mxu0
    %v1928 = vsel %vm1774, %v298, 0
    %v1931 = vsel %vm1774, %v861, 0
    %1933 = vmatprep.subr.mxu0 0.0
    %1934 = vmatpush1.xpose.msra.mxu0 %v1931
    %1935 = vmatprep.subr.mxu0 0.0
    %1936 = vmatpush1.xpose.msra.mxu0 0.0
    %1937 = vmatprep.subr.mxu0 0.0
    %1938 = vmatpush1.xpose.msra.mxu0 0.0
    %1939 = vmatprep.subr.mxu0 0.0
    %1940 = vmatpush1.xpose.msra.mxu0 0.0
    %1941 = vmatprep.subr.mxu0 0.0
    %1942 = vmatpush1.xpose.msra.mxu0 0.0
    %1943 = vmatprep.subr.mxu0 0.0
    %1944 = vmatpush1.xpose.msra.mxu0 0.0
    %1945 = vmatprep.subr.mxu0 0.0
    %1946 = vmatpush1.xpose.msra.mxu0 0.0
    %1947 = vmatprep.subr.mxu0 0.0
    %1948 = vmatpush1.xpose.msra.mxu0 0.0
    %1949 = vmatprep.subr.mxu0 0.0
    %1950 = vmatpush1.xpose.msra.mxu0 0.0
    %1951 = vmatprep.subr.mxu0 0.0
    %1952 = vmatpush1.xpose.msra.mxu0 0.0
    %1953 = vmatprep.subr.mxu0 0.0
    %1954 = vmatpush1.xpose.msra.mxu0 0.0
    %1955 = vmatprep.subr.mxu0 0.0
    %1956 = vmatpush1.xpose.msra.mxu0 0.0
    %1957 = vmatprep.subr.mxu0 0.0
    %1958 = vmatpush1.xpose.msra.mxu0 0.0
    %1959 = vmatprep.subr.mxu0 0.0
    %1960 = vmatpush1.xpose.msra.mxu0 0.0
    %1961 = vmatprep.subr.mxu0 0.0
    %1962 = vmatpush1.xpose.msra.mxu0 0.0
    %1963 = vmatprep.subr.mxu0 0.0
    %1964 = vmatpush1.xpose.msra.mxu0 0.0
    %1965 = vmatprep.subr.mxu0 0.0
    %1966 = vmatpush1.xpose.msra.mxu0 0.0
    %1967 = vmatprep.subr.mxu0 0.0
    %1968 = vmatpush1.xpose.msra.mxu0 0.0
    %1969 = vmatprep.subr.mxu0 0.0
    %1970 = vmatpush1.xpose.msra.mxu0 0.0
    %1971 = vmatprep.subr.mxu0 0.0
    %1972 = vmatpush1.xpose.msra.mxu0 0.0
    %1973 = vmatprep.subr.mxu0 0.0
    %1974 = vmatpush1.xpose.msra.mxu0 0.0
    %1975 = vmatprep.subr.mxu0 0.0
    %1976 = vmatpush1.xpose.msra.mxu0 0.0
    %1977 = vmatprep.subr.mxu0 0.0
    %1978 = vmatpush1.xpose.msra.mxu0 0.0
    %1979 = vmatprep.subr.mxu0 0.0
    %1980 = vmatpush1.xpose.msra.mxu0 0.0
    %1981 = vmatprep.subr.mxu0 0.0
    %1982 = vmatpush1.xpose.msra.mxu0 0.0
    %1983 = vmatprep.subr.mxu0 0.0
    %1984 = vmatpush1.xpose.msra.mxu0 0.0
    %1985 = vmatprep.subr.mxu0 0.0
    %1986 = vmatpush1.xpose.msra.mxu0 0.0
    %1987 = vmatprep.subr.mxu0 0.0
    %1988 = vmatpush1.xpose.msra.mxu0 0.0
    %1989 = vmatprep.subr.mxu0 0.0
    %1990 = vmatpush1.xpose.msra.mxu0 0.0
    %1991 = vmatprep.subr.mxu0 0.0
    %1992 = vmatpush1.xpose.msra.mxu0 0.0
    %1993 = vmatprep.subr.mxu0 0.0
    %1994 = vmatpush1.xpose.msra.mxu0 0.0
    %1995 = vmatprep.subr.mxu0 0.0
    %1996 = vmatpush1.xpose.msra.mxu0 0.0
    %1997 = vmatprep.mubr.f32.mxu0 0.0
    %1998 = vmatmul.mubr.f32.gmra.mrb[0].mxu0 %v1928
    %v1999 = vpop.f32.mrb[0].mxu0
    %v2000 = vadd.f32 0.0, %v1999
    %v2001 = vpop.f32.mrb[0].mxu0
    %2002 = vdwg.mxu0
    %v2004 = vsel %vm1774, %v368, 0
    %v2007 = vsel %vm1774, %v931, 0
    %2009 = vmatprep.subr.mxu0 0.0
    %2010 = vmatpush1.xpose.msra.mxu0 %v2007
    %2011 = vmatprep.subr.mxu0 0.0
    %2012 = vmatpush1.xpose.msra.mxu0 0.0
    %2013 = vmatprep.subr.mxu0 0.0
    %2014 = vmatpush1.xpose.msra.mxu0 0.0
    %2015 = vmatprep.subr.mxu0 0.0
    %2016 = vmatpush1.xpose.msra.mxu0 0.0
    %2017 = vmatprep.subr.mxu0 0.0
    %2018 = vmatpush1.xpose.msra.mxu0 0.0
    %2019 = vmatprep.subr.mxu0 0.0
    %2020 = vmatpush1.xpose.msra.mxu0 0.0
    %2021 = vmatprep.subr.mxu0 0.0
    %2022 = vmatpush1.xpose.msra.mxu0 0.0
    %2023 = vmatprep.subr.mxu0 0.0
    %2024 = vmatpush1.xpose.msra.mxu0 0.0
    %2025 = vmatprep.subr.mxu0 0.0
    %2026 = vmatpush1.xpose.msra.mxu0 0.0
    %2027 = vmatprep.subr.mxu0 0.0
    %2028 = vmatpush1.xpose.msra.mxu0 0.0
    %2029 = vmatprep.subr.mxu0 0.0
    %2030 = vmatpush1.xpose.msra.mxu0 0.0
    %2031 = vmatprep.subr.mxu0 0.0
    %2032 = vmatpush1.xpose.msra.mxu0 0.0
    %2033 = vmatprep.subr.mxu0 0.0
    %2034 = vmatpush1.xpose.msra.mxu0 0.0
    %2035 = vmatprep.subr.mxu0 0.0
    %2036 = vmatpush1.xpose.msra.mxu0 0.0
    %2037 = vmatprep.subr.mxu0 0.0
    %2038 = vmatpush1.xpose.msra.mxu0 0.0
    %2039 = vmatprep.subr.mxu0 0.0
    %2040 = vmatpush1.xpose.msra.mxu0 0.0
    %2041 = vmatprep.subr.mxu0 0.0
    %2042 = vmatpush1.xpose.msra.mxu0 0.0
    %2043 = vmatprep.subr.mxu0 0.0
    %2044 = vmatpush1.xpose.msra.mxu0 0.0
    %2045 = vmatprep.subr.mxu0 0.0
    %2046 = vmatpush1.xpose.msra.mxu0 0.0
    %2047 = vmatprep.subr.mxu0 0.0
    %2048 = vmatpush1.xpose.msra.mxu0 0.0
    %2049 = vmatprep.subr.mxu0 0.0
    %2050 = vmatpush1.xpose.msra.mxu0 0.0
    %2051 = vmatprep.subr.mxu0 0.0
    %2052 = vmatpush1.xpose.msra.mxu0 0.0
    %2053 = vmatprep.subr.mxu0 0.0
    %2054 = vmatpush1.xpose.msra.mxu0 0.0
    %2055 = vmatprep.subr.mxu0 0.0
    %2056 = vmatpush1.xpose.msra.mxu0 0.0
    %2057 = vmatprep.subr.mxu0 0.0
    %2058 = vmatpush1.xpose.msra.mxu0 0.0
    %2059 = vmatprep.subr.mxu0 0.0
    %2060 = vmatpush1.xpose.msra.mxu0 0.0
    %2061 = vmatprep.subr.mxu0 0.0
    %2062 = vmatpush1.xpose.msra.mxu0 0.0
    %2063 = vmatprep.subr.mxu0 0.0
    %2064 = vmatpush1.xpose.msra.mxu0 0.0
    %2065 = vmatprep.subr.mxu0 0.0
    %2066 = vmatpush1.xpose.msra.mxu0 0.0
    %2067 = vmatprep.subr.mxu0 0.0
    %2068 = vmatpush1.xpose.msra.mxu0 0.0
    %2069 = vmatprep.subr.mxu0 0.0
    %2070 = vmatpush1.xpose.msra.mxu0 0.0
    %2071 = vmatprep.subr.mxu0 0.0
    %2072 = vmatpush1.xpose.msra.mxu0 0.0
    %2073 = vmatprep.mubr.f32.mxu0 0.0
    %2074 = vmatmul.mubr.f32.gmra.mrb[0].mxu0 %v2004
    %v2075 = vpop.f32.mrb[0].mxu0
    %v2076 = vadd.f32 0.0, %v2075
    %v2077 = vpop.f32.mrb[0].mxu0
    %2078 = vdwg.mxu0
    %v2080 = vsel %vm1774, %v441, 0
    %v2083 = vsel %vm1774, %v1001, 0
    %2085 = vmatprep.subr.mxu0 0.0
    %2086 = vmatpush1.xpose.msra.mxu0 %v2083
    %2087 = vmatprep.subr.mxu0 0.0
    %2088 = vmatpush1.xpose.msra.mxu0 0.0
    %2089 = vmatprep.subr.mxu0 0.0
    %2090 = vmatpush1.xpose.msra.mxu0 0.0
    %2091 = vmatprep.subr.mxu0 0.0
    %2092 = vmatpush1.xpose.msra.mxu0 0.0
    %2093 = vmatprep.subr.mxu0 0.0
    %2094 = vmatpush1.xpose.msra.mxu0 0.0
    %2095 = vmatprep.subr.mxu0 0.0
    %2096 = vmatpush1.xpose.msra.mxu0 0.0
    %2097 = vmatprep.subr.mxu0 0.0
    %2098 = vmatpush1.xpose.msra.mxu0 0.0
    %2099 = vmatprep.subr.mxu0 0.0
    %2100 = vmatpush1.xpose.msra.mxu0 0.0
    %2101 = vmatprep.subr.mxu0 0.0
    %2102 = vmatpush1.xpose.msra.mxu0 0.0
    %2103 = vmatprep.subr.mxu0 0.0
    %2104 = vmatpush1.xpose.msra.mxu0 0.0
    %2105 = vmatprep.subr.mxu0 0.0
    %2106 = vmatpush1.xpose.msra.mxu0 0.0
    %2107 = vmatprep.subr.mxu0 0.0
    %2108 = vmatpush1.xpose.msra.mxu0 0.0
    %2109 = vmatprep.subr.mxu0 0.0
    %2110 = vmatpush1.xpose.msra.mxu0 0.0
    %2111 = vmatprep.subr.mxu0 0.0
    %2112 = vmatpush1.xpose.msra.mxu0 0.0
    %2113 = vmatprep.subr.mxu0 0.0
    %2114 = vmatpush1.xpose.msra.mxu0 0.0
    %2115 = vmatprep.subr.mxu0 0.0
    %2116 = vmatpush1.xpose.msra.mxu0 0.0
    %2117 = vmatprep.subr.mxu0 0.0
    %2118 = vmatpush1.xpose.msra.mxu0 0.0
    %2119 = vmatprep.subr.mxu0 0.0
    %2120 = vmatpush1.xpose.msra.mxu0 0.0
    %2121 = vmatprep.subr.mxu0 0.0
    %2122 = vmatpush1.xpose.msra.mxu0 0.0
    %2123 = vmatprep.subr.mxu0 0.0
    %2124 = vmatpush1.xpose.msra.mxu0 0.0
    %2125 = vmatprep.subr.mxu0 0.0
    %2126 = vmatpush1.xpose.msra.mxu0 0.0
    %2127 = vmatprep.subr.mxu0 0.0
    %2128 = vmatpush1.xpose.msra.mxu0 0.0
    %2129 = vmatprep.subr.mxu0 0.0
    %2130 = vmatpush1.xpose.msra.mxu0 0.0
    %2131 = vmatprep.subr.mxu0 0.0
    %2132 = vmatpush1.xpose.msra.mxu0 0.0
    %2133 = vmatprep.subr.mxu0 0.0
    %2134 = vmatpush1.xpose.msra.mxu0 0.0
    %2135 = vmatprep.subr.mxu0 0.0
    %2136 = vmatpush1.xpose.msra.mxu0 0.0
    %2137 = vmatprep.subr.mxu0 0.0
    %2138 = vmatpush1.xpose.msra.mxu0 0.0
    %2139 = vmatprep.subr.mxu0 0.0
    %2140 = vmatpush1.xpose.msra.mxu0 0.0
    %2141 = vmatprep.subr.mxu0 0.0
    %2142 = vmatpush1.xpose.msra.mxu0 0.0
    %2143 = vmatprep.subr.mxu0 0.0
    %2144 = vmatpush1.xpose.msra.mxu0 0.0
    %2145 = vmatprep.subr.mxu0 0.0
    %2146 = vmatpush1.xpose.msra.mxu0 0.0
    %2147 = vmatprep.subr.mxu0 0.0
    %2148 = vmatpush1.xpose.msra.mxu0 0.0
    %2149 = vmatprep.mubr.f32.mxu0 0.0
    %2150 = vmatmul.mubr.f32.gmra.mrb[0].mxu0 %v2080
    %v2151 = vpop.f32.mrb[0].mxu0
    %v2152 = vadd.f32 0.0, %v2151
    %v2153 = vpop.f32.mrb[0].mxu0
    %2154 = vdwg.mxu0
    %v2156 = vsel %vm1774, %v511, 0
    %v2159 = vsel %vm1774, %v1071, 0
    %2161 = vmatprep.subr.mxu0 0.0
    %2162 = vmatpush1.xpose.msra.mxu0 %v2159
    %2163 = vmatprep.subr.mxu0 0.0
    %2164 = vmatpush1.xpose.msra.mxu0 0.0
    %2165 = vmatprep.subr.mxu0 0.0
    %2166 = vmatpush1.xpose.msra.mxu0 0.0
    %2167 = vmatprep.subr.mxu0 0.0
    %2168 = vmatpush1.xpose.msra.mxu0 0.0
    %2169 = vmatprep.subr.mxu0 0.0
    %2170 = vmatpush1.xpose.msra.mxu0 0.0
    %2171 = vmatprep.subr.mxu0 0.0
    %2172 = vmatpush1.xpose.msra.mxu0 0.0
    %2173 = vmatprep.subr.mxu0 0.0
    %2174 = vmatpush1.xpose.msra.mxu0 0.0
    %2175 = vmatprep.subr.mxu0 0.0
    %2176 = vmatpush1.xpose.msra.mxu0 0.0
    %2177 = vmatprep.subr.mxu0 0.0
    %2178 = vmatpush1.xpose.msra.mxu0 0.0
    %2179 = vmatprep.subr.mxu0 0.0
    %2180 = vmatpush1.xpose.msra.mxu0 0.0
    %2181 = vmatprep.subr.mxu0 0.0
    %2182 = vmatpush1.xpose.msra.mxu0 0.0
    %2183 = vmatprep.subr.mxu0 0.0
    %2184 = vmatpush1.xpose.msra.mxu0 0.0
    %2185 = vmatprep.subr.mxu0 0.0
    %2186 = vmatpush1.xpose.msra.mxu0 0.0
    %2187 = vmatprep.subr.mxu0 0.0
    %2188 = vmatpush1.xpose.msra.mxu0 0.0
    %2189 = vmatprep.subr.mxu0 0.0
    %2190 = vmatpush1.xpose.msra.mxu0 0.0
    %2191 = vmatprep.subr.mxu0 0.0
    %2192 = vmatpush1.xpose.msra.mxu0 0.0
    %2193 = vmatprep.subr.mxu0 0.0
    %2194 = vmatpush1.xpose.msra.mxu0 0.0
    %2195 = vmatprep.subr.mxu0 0.0
    %2196 = vmatpush1.xpose.msra.mxu0 0.0
    %2197 = vmatprep.subr.mxu0 0.0
    %2198 = vmatpush1.xpose.msra.mxu0 0.0
    %2199 = vmatprep.subr.mxu0 0.0
    %2200 = vmatpush1.xpose.msra.mxu0 0.0
    %2201 = vmatprep.subr.mxu0 0.0
    %2202 = vmatpush1.xpose.msra.mxu0 0.0
    %2203 = vmatprep.subr.mxu0 0.0
    %2204 = vmatpush1.xpose.msra.mxu0 0.0
    %2205 = vmatprep.subr.mxu0 0.0
    %2206 = vmatpush1.xpose.msra.mxu0 0.0
    %2207 = vmatprep.subr.mxu0 0.0
    %2208 = vmatpush1.xpose.msra.mxu0 0.0
    %2209 = vmatprep.subr.mxu0 0.0
    %2210 = vmatpush1.xpose.msra.mxu0 0.0
    %2211 = vmatprep.subr.mxu0 0.0
    %2212 = vmatpush1.xpose.msra.mxu0 0.0
    %2213 = vmatprep.subr.mxu0 0.0
    %2214 = vmatpush1.xpose.msra.mxu0 0.0
    %2215 = vmatprep.subr.mxu0 0.0
    %2216 = vmatpush1.xpose.msra.mxu0 0.0
    %2217 = vmatprep.subr.mxu0 0.0
    %2218 = vmatpush1.xpose.msra.mxu0 0.0
    %2219 = vmatprep.subr.mxu0 0.0
    %2220 = vmatpush1.xpose.msra.mxu0 0.0
    %2221 = vmatprep.subr.mxu0 0.0
    %2222 = vmatpush1.xpose.msra.mxu0 0.0
    %2223 = vmatprep.subr.mxu0 0.0
    %2224 = vmatpush1.xpose.msra.mxu0 0.0
    %2225 = vmatprep.mubr.f32.mxu0 0.0
    %2226 = vmatmul.mubr.f32.gmra.mrb[0].mxu0 %v2156
    %v2227 = vpop.f32.mrb[0].mxu0
    %v2228 = vadd.f32 0.0, %v2227
    %v2229 = vpop.f32.mrb[0].mxu0
    %2230 = vdwg.mxu0
    %v2232 = vsel %vm1774, %v581, 0
    %v2235 = vsel %vm1774, %v1141, 0
    %2237 = vmatprep.subr.mxu0 0.0
    %2238 = vmatpush1.xpose.msra.mxu0 %v2235
    %2239 = vmatprep.subr.mxu0 0.0
    %2240 = vmatpush1.xpose.msra.mxu0 0.0
    %2241 = vmatprep.subr.mxu0 0.0
    %2242 = vmatpush1.xpose.msra.mxu0 0.0
    %2243 = vmatprep.subr.mxu0 0.0
    %2244 = vmatpush1.xpose.msra.mxu0 0.0
    %2245 = vmatprep.subr.mxu0 0.0
    %2246 = vmatpush1.xpose.msra.mxu0 0.0
    %2247 = vmatprep.subr.mxu0 0.0
    %2248 = vmatpush1.xpose.msra.mxu0 0.0
    %2249 = vmatprep.subr.mxu0 0.0
    %2250 = vmatpush1.xpose.msra.mxu0 0.0
    %2251 = vmatprep.subr.mxu0 0.0
    %2252 = vmatpush1.xpose.msra.mxu0 0.0
    %2253 = vmatprep.subr.mxu0 0.0
    %2254 = vmatpush1.xpose.msra.mxu0 0.0
    %2255 = vmatprep.subr.mxu0 0.0
    %2256 = vmatpush1.xpose.msra.mxu0 0.0
    %2257 = vmatprep.subr.mxu0 0.0
    %2258 = vmatpush1.xpose.msra.mxu0 0.0
    %2259 = vmatprep.subr.mxu0 0.0
    %2260 = vmatpush1.xpose.msra.mxu0 0.0
    %2261 = vmatprep.subr.mxu0 0.0
    %2262 = vmatpush1.xpose.msra.mxu0 0.0
    %2263 = vmatprep.subr.mxu0 0.0
    %2264 = vmatpush1.xpose.msra.mxu0 0.0
    %2265 = vmatprep.subr.mxu0 0.0
    %2266 = vmatpush1.xpose.msra.mxu0 0.0
    %2267 = vmatprep.subr.mxu0 0.0
    %2268 = vmatpush1.xpose.msra.mxu0 0.0
    %2269 = vmatprep.subr.mxu0 0.0
    %2270 = vmatpush1.xpose.msra.mxu0 0.0
    %2271 = vmatprep.subr.mxu0 0.0
    %2272 = vmatpush1.xpose.msra.mxu0 0.0
    %2273 = vmatprep.subr.mxu0 0.0
    %2274 = vmatpush1.xpose.msra.mxu0 0.0
    %2275 = vmatprep.subr.mxu0 0.0
    %2276 = vmatpush1.xpose.msra.mxu0 0.0
    %2277 = vmatprep.subr.mxu0 0.0
    %2278 = vmatpush1.xpose.msra.mxu0 0.0
    %2279 = vmatprep.subr.mxu0 0.0
    %2280 = vmatpush1.xpose.msra.mxu0 0.0
    %2281 = vmatprep.subr.mxu0 0.0
    %2282 = vmatpush1.xpose.msra.mxu0 0.0
    %2283 = vmatprep.subr.mxu0 0.0
    %2284 = vmatpush1.xpose.msra.mxu0 0.0
    %2285 = vmatprep.subr.mxu0 0.0
    %2286 = vmatpush1.xpose.msra.mxu0 0.0
    %2287 = vmatprep.subr.mxu0 0.0
    %2288 = vmatpush1.xpose.msra.mxu0 0.0
    %2289 = vmatprep.subr.mxu0 0.0
    %2290 = vmatpush1.xpose.msra.mxu0 0.0
    %2291 = vmatprep.subr.mxu0 0.0
    %2292 = vmatpush1.xpose.msra.mxu0 0.0
    %2293 = vmatprep.subr.mxu0 0.0
    %2294 = vmatpush1.xpose.msra.mxu0 0.0
    %2295 = vmatprep.subr.mxu0 0.0
    %2296 = vmatpush1.xpose.msra.mxu0 0.0
    %2297 = vmatprep.subr.mxu0 0.0
    %2298 = vmatpush1.xpose.msra.mxu0 0.0
    %2299 = vmatprep.subr.mxu0 0.0
    %2300 = vmatpush1.xpose.msra.mxu0 0.0
    %2301 = vmatprep.mubr.f32.mxu0 0.0
    %2302 = vmatmul.mubr.f32.gmra.mrb[0].mxu0 %v2232
    %v2303 = vpop.f32.mrb[0].mxu0
    %v2304 = vadd.f32 0.0, %v2303
    %v2305 = vpop.f32.mrb[0].mxu0
    %2306 = vdwg.mxu0
    %v2308 = vsel %vm1774, %v651, 0
    %v2311 = vsel %vm1774, %v1211, 0
    %2313 = vmatprep.subr.mxu0 0.0
    %2314 = vmatpush1.xpose.msra.mxu0 %v2311
    %2315 = vmatprep.subr.mxu0 0.0
    %2316 = vmatpush1.xpose.msra.mxu0 0.0
    %2317 = vmatprep.subr.mxu0 0.0
    %2318 = vmatpush1.xpose.msra.mxu0 0.0
    %2319 = vmatprep.subr.mxu0 0.0
    %2320 = vmatpush1.xpose.msra.mxu0 0.0
    %2321 = vmatprep.subr.mxu0 0.0
    %2322 = vmatpush1.xpose.msra.mxu0 0.0
    %2323 = vmatprep.subr.mxu0 0.0
    %2324 = vmatpush1.xpose.msra.mxu0 0.0
    %2325 = vmatprep.subr.mxu0 0.0
    %2326 = vmatpush1.xpose.msra.mxu0 0.0
    %2327 = vmatprep.subr.mxu0 0.0
    %2328 = vmatpush1.xpose.msra.mxu0 0.0
    %2329 = vmatprep.subr.mxu0 0.0
    %2330 = vmatpush1.xpose.msra.mxu0 0.0
    %2331 = vmatprep.subr.mxu0 0.0
    %2332 = vmatpush1.xpose.msra.mxu0 0.0
    %2333 = vmatprep.subr.mxu0 0.0
    %2334 = vmatpush1.xpose.msra.mxu0 0.0
    %2335 = vmatprep.subr.mxu0 0.0
    %2336 = vmatpush1.xpose.msra.mxu0 0.0
    %2337 = vmatprep.subr.mxu0 0.0
    %2338 = vmatpush1.xpose.msra.mxu0 0.0
    %2339 = vmatprep.subr.mxu0 0.0
    %2340 = vmatpush1.xpose.msra.mxu0 0.0
    %2341 = vmatprep.subr.mxu0 0.0
    %2342 = vmatpush1.xpose.msra.mxu0 0.0
    %2343 = vmatprep.subr.mxu0 0.0
    %2344 = vmatpush1.xpose.msra.mxu0 0.0
    %2345 = vmatprep.subr.mxu0 0.0
    %2346 = vmatpush1.xpose.msra.mxu0 0.0
    %2347 = vmatprep.subr.mxu0 0.0
    %2348 = vmatpush1.xpose.msra.mxu0 0.0
    %2349 = vmatprep.subr.mxu0 0.0
    %2350 = vmatpush1.xpose.msra.mxu0 0.0
    %2351 = vmatprep.subr.mxu0 0.0
    %2352 = vmatpush1.xpose.msra.mxu0 0.0
    %2353 = vmatprep.subr.mxu0 0.0
    %2354 = vmatpush1.xpose.msra.mxu0 0.0
    %2355 = vmatprep.subr.mxu0 0.0
    %2356 = vmatpush1.xpose.msra.mxu0 0.0
    %2357 = vmatprep.subr.mxu0 0.0
    %2358 = vmatpush1.xpose.msra.mxu0 0.0
    %2359 = vmatprep.subr.mxu0 0.0
    %2360 = vmatpush1.xpose.msra.mxu0 0.0
    %2361 = vmatprep.subr.mxu0 0.0
    %2362 = vmatpush1.xpose.msra.mxu0 0.0
    %2363 = vmatprep.subr.mxu0 0.0
    %2364 = vmatpush1.xpose.msra.mxu0 0.0
    %2365 = vmatprep.subr.mxu0 0.0
    %2366 = vmatpush1.xpose.msra.mxu0 0.0
    %2367 = vmatprep.subr.mxu0 0.0
    %2368 = vmatpush1.xpose.msra.mxu0 0.0
    %2369 = vmatprep.subr.mxu0 0.0
    %2370 = vmatpush1.xpose.msra.mxu0 0.0
    %2371 = vmatprep.subr.mxu0 0.0
    %2372 = vmatpush1.xpose.msra.mxu0 0.0
    %2373 = vmatprep.subr.mxu0 0.0
    %2374 = vmatpush1.xpose.msra.mxu0 0.0
    %2375 = vmatprep.subr.mxu0 0.0
    %2376 = vmatpush1.xpose.msra.mxu0 0.0
    %2377 = vmatprep.mubr.f32.mxu0 0.0
    %2378 = vmatmul.mubr.f32.gmra.mrb[0].mxu0 %v2308
    %v2379 = vpop.f32.mrb[0].mxu0
    %v2380 = vadd.f32 0.0, %v2379
    %v2381 = vpop.f32.mrb[0].mxu0
    %2382 = vdwg.mxu0
    %v2383 = vmul.f32 %v1848, 0.35355338
    %v2384 = vmul.f32 %v1924, 0.35355338
    %v2385 = vmul.f32 %v2000, 0.35355338
    %v2386 = vmul.f32 %v2076, 0.35355338
    %v2387 = vmul.f32 %v2152, 0.35355338
    %v2388 = vmul.f32 %v2228, 0.35355338
    %v2389 = vmul.f32 %v2304, 0.35355338
    %v2390 = vmul.f32 %v2380, 0.35355338
    %v2391 = vld [vmem:[%s1] sm:$0x3]
    %v2392 = vld [vmem:[%s1 + $0x2] sm:$0x3]
    %v2393 = vunpack.c.0.s8 %v2391
    %v2394 = vunpack.c.0.s8 %v2392
    %vm2395 = vcmp.ne.s32.totalorder %v2393, 0
    %vm2396 = vcmp.ne.s32.totalorder %v2394, 0
    %v2397 = vsel %vm2395, -1e+09, %v2383
    %v2398 = vsel %vm2395, -1e+09, %v2384
    %v2399 = vsel %vm2395, -1e+09, %v2385
    %v2400 = vsel %vm2395, -1e+09, %v2386
    %v2401 = vsel %vm2396, -1e+09, %v2387
    %v2402 = vsel %vm2396, -1e+09, %v2388
    %v2403 = vsel %vm2396, -1e+09, %v2389
    %v2404 = vsel %vm2396, -1e+09, %v2390
    %v2405 = vsel %vm1774, %v2397, -inf
    %2406 = vmax.xlane.f32.xlu0 %v2405
    %v2407 = vpop.xlane.xlu0 %2406
    %v2408 = vsel %vm1774, %v2398, -inf
    %2409 = vmax.xlane.f32.xlu0 %v2408
    %v2410 = vpop.xlane.xlu0 %2409
    %v2411 = vsel %vm1774, %v2399, -inf
    %2412 = vmax.xlane.f32.xlu0 %v2411
    %v2413 = vpop.xlane.xlu0 %2412
    %v2414 = vsel %vm1774, %v2400, -inf
    %2415 = vmax.xlane.f32.xlu0 %v2414
    %v2416 = vpop.xlane.xlu0 %2415
    %v2417 = vsel %vm1774, %v2401, -inf
    %2418 = vmax.xlane.f32.xlu0 %v2417
    %v2419 = vpop.xlane.xlu0 %2418
    %v2420 = vsel %vm1774, %v2402, -inf
    %2421 = vmax.xlane.f32.xlu0 %v2420
    %v2422 = vpop.xlane.xlu0 %2421
    %v2423 = vsel %vm1774, %v2403, -inf
    %2424 = vmax.xlane.f32.xlu0 %v2423
    %v2425 = vpop.xlane.xlu0 %2424
    %v2426 = vsel %vm1774, %v2404, -inf
    %2427 = vmax.xlane.f32.xlu0 %v2426
    %v2428 = vpop.xlane.xlu0 %2427
    %v2429 = vsub.f32 %v2397, %v2407
    %v2430 = vsub.f32 %v2398, %v2410
    %v2431 = vsub.f32 %v2399, %v2413
    %v2432 = vsub.f32 %v2400, %v2416
    %v2433 = vsub.f32 %v2401, %v2419
    %v2434 = vsub.f32 %v2402, %v2422
    %v2435 = vsub.f32 %v2403, %v2425
    %v2436 = vsub.f32 %v2404, %v2428
    %v2437 = vmul.f32 %v2429, 1.442695
    %v2438 = vpow.pop %v2437
    %v2439 = vmul.f32 %v2430, 1.442695
    %v2440 = vpow.pop %v2439
    %v2441 = vmul.f32 %v2431, 1.442695
    %v2442 = vpow.pop %v2441
    %v2443 = vmul.f32 %v2432, 1.442695
    %v2444 = vpow.pop %v2443
    %v2445 = vmul.f32 %v2433, 1.442695
    %v2446 = vpow.pop %v2445
    %v2447 = vmul.f32 %v2434, 1.442695
    %v2448 = vpow.pop %v2447
    %v2449 = vmul.f32 %v2435, 1.442695
    %v2450 = vpow.pop %v2449
    %v2451 = vmul.f32 %v2436, 1.442695
    %v2452 = vpow.pop %v2451
    %v2453 = vsel %vm1774, %v2438, 0.0
    %2454 = vadd.xlane.f32.xlu0 %v2453
    %v2455 = vpop.xlane.xlu0 %2454
    %v2456 = vsel %vm1774, %v2440, 0.0
    %2457 = vadd.xlane.f32.xlu0 %v2456
    %v2458 = vpop.xlane.xlu0 %2457
    %v2459 = vsel %vm1774, %v2442, 0.0
    %2460 = vadd.xlane.f32.xlu0 %v2459
    %v2461 = vpop.xlane.xlu0 %2460
    %v2462 = vsel %vm1774, %v2444, 0.0
    %2463 = vadd.xlane.f32.xlu0 %v2462
    %v2464 = vpop.xlane.xlu0 %2463
    %v2465 = vsel %vm1774, %v2446, 0.0
    %2466 = vadd.xlane.f32.xlu0 %v2465
    %v2467 = vpop.xlane.xlu0 %2466
    %v2468 = vsel %vm1774, %v2448, 0.0
    %2469 = vadd.xlane.f32.xlu0 %v2468
    %v2470 = vpop.xlane.xlu0 %2469
    %v2471 = vsel %vm1774, %v2450, 0.0
    %2472 = vadd.xlane.f32.xlu0 %v2471
    %v2473 = vpop.xlane.xlu0 %2472
    %v2474 = vsel %vm1774, %v2452, 0.0
    %2475 = vadd.xlane.f32.xlu0 %v2474
    %v2476 = vpop.xlane.xlu0 %2475
    %v2477 = vrcp.pop %v2455
    %v2478 = vrcp.pop %v2458
    %v2479 = vrcp.pop %v2461
    %v2480 = vrcp.pop %v2464
    %v2481 = vrcp.pop %v2467
    %v2482 = vrcp.pop %v2470
    %v2483 = vrcp.pop %v2473
    %v2484 = vrcp.pop %v2476
    %v2485 = vmul.f32 %v2438, %v2477
    %v2486 = vmul.f32 %v2440, %v2478
    %v2487 = vmul.f32 %v2442, %v2479
    %v2488 = vmul.f32 %v2444, %v2480
    %v2489 = vmul.f32 %v2446, %v2481
    %v2490 = vmul.f32 %v2448, %v2482
    %v2491 = vmul.f32 %v2450, %v2483
    %v2492 = vmul.f32 %v2452, %v2484
    %2493 = vst.msk [vmem:[#allocation4] sm:$0xff] %vm1774, %v2485
    %2494 = vst.msk [vmem:[#allocation4 + $0x8] sm:$0xff] %vm1774, %v2486
    %2495 = vst.msk [vmem:[#allocation4 + $0x10] sm:$0xff] %vm1774, %v2487
    %2496 = vst.msk [vmem:[#allocation4 + $0x18] sm:$0xff] %vm1774, %v2488
    %2497 = vst.msk [vmem:[#allocation4 + $0x20] sm:$0xff] %vm1774, %v2489
    %2498 = vst.msk [vmem:[#allocation4 + $0x28] sm:$0xff] %vm1774, %v2490
    %2499 = vst.msk [vmem:[#allocation4 + $0x30] sm:$0xff] %vm1774, %v2491
    %2500 = vst.msk [vmem:[#allocation4 + $0x38] sm:$0xff] %vm1774, %v2492
    %v2502 = vsel %vm1774, %v2485, 0
    %2504 = vmatprep.subr.mxu0 0.0
    %2505 = vmatpush1.msra.mxu0 %v1281
    %2506 = vmatprep.subr.mxu0 0.0
    %2507 = vmatpush1.msra.mxu0 0.0
    %2508 = vmatprep.subr.mxu0 0.0
    %2509 = vmatpush1.msra.mxu0 0.0
    %2510 = vmatprep.subr.mxu0 0.0
    %2511 = vmatpush1.msra.mxu0 0.0
    %2512 = vmatprep.subr.mxu0 0.0
    %2513 = vmatpush1.msra.mxu0 0.0
    %2514 = vmatprep.subr.mxu0 0.0
    %2515 = vmatpush1.msra.mxu0 0.0
    %2516 = vmatprep.subr.mxu0 0.0
    %2517 = vmatpush1.msra.mxu0 0.0
    %2518 = vmatprep.subr.mxu0 0.0
    %2519 = vmatpush1.msra.mxu0 0.0
    %2520 = vmatprep.subr.mxu0 0.0
    %2521 = vmatpush1.msra.mxu0 0.0
    %2522 = vmatprep.subr.mxu0 0.0
    %2523 = vmatpush1.msra.mxu0 0.0
    %2524 = vmatprep.subr.mxu0 0.0
    %2525 = vmatpush1.msra.mxu0 0.0
    %2526 = vmatprep.subr.mxu0 0.0
    %2527 = vmatpush1.msra.mxu0 0.0
    %2528 = vmatprep.subr.mxu0 0.0
    %2529 = vmatpush1.msra.mxu0 0.0
    %2530 = vmatprep.subr.mxu0 0.0
    %2531 = vmatpush1.msra.mxu0 0.0
    %2532 = vmatprep.subr.mxu0 0.0
    %2533 = vmatpush1.msra.mxu0 0.0
    %2534 = vmatprep.subr.mxu0 0.0
    %2535 = vmatpush1.msra.mxu0 0.0
    %2536 = vmatprep.subr.mxu0 0.0
    %2537 = vmatpush1.msra.mxu0 0.0
    %2538 = vmatprep.subr.mxu0 0.0
    %2539 = vmatpush1.msra.mxu0 0.0
    %2540 = vmatprep.subr.mxu0 0.0
    %2541 = vmatpush1.msra.mxu0 0.0
    %2542 = vmatprep.subr.mxu0 0.0
    %2543 = vmatpush1.msra.mxu0 0.0
    %2544 = vmatprep.subr.mxu0 0.0
    %2545 = vmatpush1.msra.mxu0 0.0
    %2546 = vmatprep.subr.mxu0 0.0
    %2547 = vmatpush1.msra.mxu0 0.0
    %2548 = vmatprep.subr.mxu0 0.0
    %2549 = vmatpush1.msra.mxu0 0.0
    %2550 = vmatprep.subr.mxu0 0.0
    %2551 = vmatpush1.msra.mxu0 0.0
    %2552 = vmatprep.subr.mxu0 0.0
    %2553 = vmatpush1.msra.mxu0 0.0
    %2554 = vmatprep.subr.mxu0 0.0
    %2555 = vmatpush1.msra.mxu0 0.0
    %2556 = vmatprep.subr.mxu0 0.0
    %2557 = vmatpush1.msra.mxu0 0.0
    %2558 = vmatprep.subr.mxu0 0.0
    %2559 = vmatpush1.msra.mxu0 0.0
    %2560 = vmatprep.subr.mxu0 0.0
    %2561 = vmatpush1.msra.mxu0 0.0
    %2562 = vmatprep.subr.mxu0 0.0
    %2563 = vmatpush1.msra.mxu0 0.0
    %2564 = vmatprep.subr.mxu0 0.0
    %2565 = vmatpush1.msra.mxu0 0.0
    %2566 = vmatprep.subr.mxu0 0.0
    %2567 = vmatpush1.msra.mxu0 0.0
    %2568 = vmatprep.mubr.f32.mxu0 0.0
    %2569 = vmatmul.mubr.f32.gmra.mrb[0].mxu0 %v2502
    %v2570 = vpop.f32.mrb[0].mxu0
    %v2571 = vadd.f32 0.0, %v2570
    %v2572 = vpop.f32.mrb[0].mxu0
    %2573 = vdwg.mxu0
    %v2575 = vsel %vm1774, %v2486, 0
    %2577 = vmatprep.subr.mxu0 0.0
    %2578 = vmatpush1.msra.mxu0 %v1351
    %2579 = vmatprep.subr.mxu0 0.0
    %2580 = vmatpush1.msra.mxu0 0.0
    %2581 = vmatprep.subr.mxu0 0.0
    %2582 = vmatpush1.msra.mxu0 0.0
    %2583 = vmatprep.subr.mxu0 0.0
    %2584 = vmatpush1.msra.mxu0 0.0
    %2585 = vmatprep.subr.mxu0 0.0
    %2586 = vmatpush1.msra.mxu0 0.0
    %2587 = vmatprep.subr.mxu0 0.0
    %2588 = vmatpush1.msra.mxu0 0.0
    %2589 = vmatprep.subr.mxu0 0.0
    %2590 = vmatpush1.msra.mxu0 0.0
    %2591 = vmatprep.subr.mxu0 0.0
    %2592 = vmatpush1.msra.mxu0 0.0
    %2593 = vmatprep.subr.mxu0 0.0
    %2594 = vmatpush1.msra.mxu0 0.0
    %2595 = vmatprep.subr.mxu0 0.0
    %2596 = vmatpush1.msra.mxu0 0.0
    %2597 = vmatprep.subr.mxu0 0.0
    %2598 = vmatpush1.msra.mxu0 0.0
    %2599 = vmatprep.subr.mxu0 0.0
    %2600 = vmatpush1.msra.mxu0 0.0
    %2601 = vmatprep.subr.mxu0 0.0
    %2602 = vmatpush1.msra.mxu0 0.0
    %2603 = vmatprep.subr.mxu0 0.0
    %2604 = vmatpush1.msra.mxu0 0.0
    %2605 = vmatprep.subr.mxu0 0.0
    %2606 = vmatpush1.msra.mxu0 0.0
    %2607 = vmatprep.subr.mxu0 0.0
    %2608 = vmatpush1.msra.mxu0 0.0
    %2609 = vmatprep.subr.mxu0 0.0
    %2610 = vmatpush1.msra.mxu0 0.0
    %2611 = vmatprep.subr.mxu0 0.0
    %2612 = vmatpush1.msra.mxu0 0.0
    %2613 = vmatprep.subr.mxu0 0.0
    %2614 = vmatpush1.msra.mxu0 0.0
    %2615 = vmatprep.subr.mxu0 0.0
    %2616 = vmatpush1.msra.mxu0 0.0
    %2617 = vmatprep.subr.mxu0 0.0
    %2618 = vmatpush1.msra.mxu0 0.0
    %2619 = vmatprep.subr.mxu0 0.0
    %2620 = vmatpush1.msra.mxu0 0.0
    %2621 = vmatprep.subr.mxu0 0.0
    %2622 = vmatpush1.msra.mxu0 0.0
    %2623 = vmatprep.subr.mxu0 0.0
    %2624 = vmatpush1.msra.mxu0 0.0
    %2625 = vmatprep.subr.mxu0 0.0
    %2626 = vmatpush1.msra.mxu0 0.0
    %2627 = vmatprep.subr.mxu0 0.0
    %2628 = vmatpush1.msra.mxu0 0.0
    %2629 = vmatprep.subr.mxu0 0.0
    %2630 = vmatpush1.msra.mxu0 0.0
    %2631 = vmatprep.subr.mxu0 0.0
    %2632 = vmatpush1.msra.mxu0 0.0
    %2633 = vmatprep.subr.mxu0 0.0
    %2634 = vmatpush1.msra.mxu0 0.0
    %2635 = vmatprep.subr.mxu0 0.0
    %2636 = vmatpush1.msra.mxu0 0.0
    %2637 = vmatprep.subr.mxu0 0.0
    %2638 = vmatpush1.msra.mxu0 0.0
    %2639 = vmatprep.subr.mxu0 0.0
    %2640 = vmatpush1.msra.mxu0 0.0
    %2641 = vmatprep.mubr.f32.mxu0 0.0
    %2642 = vmatmul.mubr.f32.gmra.mrb[0].mxu0 %v2575
    %v2643 = vpop.f32.mrb[0].mxu0
    %v2644 = vadd.f32 0.0, %v2643
    %v2645 = vpop.f32.mrb[0].mxu0
    %2646 = vdwg.mxu0
    %v2648 = vsel %vm1774, %v2487, 0
    %2650 = vmatprep.subr.mxu0 0.0
    %2651 = vmatpush1.msra.mxu0 %v1421
    %2652 = vmatprep.subr.mxu0 0.0
    %2653 = vmatpush1.msra.mxu0 0.0
    %2654 = vmatprep.subr.mxu0 0.0
    %2655 = vmatpush1.msra.mxu0 0.0
    %2656 = vmatprep.subr.mxu0 0.0
    %2657 = vmatpush1.msra.mxu0 0.0
    %2658 = vmatprep.subr.mxu0 0.0
    %2659 = vmatpush1.msra.mxu0 0.0
    %2660 = vmatprep.subr.mxu0 0.0
    %2661 = vmatpush1.msra.mxu0 0.0
    %2662 = vmatprep.subr.mxu0 0.0
    %2663 = vmatpush1.msra.mxu0 0.0
    %2664 = vmatprep.subr.mxu0 0.0
    %2665 = vmatpush1.msra.mxu0 0.0
    %2666 = vmatprep.subr.mxu0 0.0
    %2667 = vmatpush1.msra.mxu0 0.0
    %2668 = vmatprep.subr.mxu0 0.0
    %2669 = vmatpush1.msra.mxu0 0.0
    %2670 = vmatprep.subr.mxu0 0.0
    %2671 = vmatpush1.msra.mxu0 0.0
    %2672 = vmatprep.subr.mxu0 0.0
    %2673 = vmatpush1.msra.mxu0 0.0
    %2674 = vmatprep.subr.mxu0 0.0
    %2675 = vmatpush1.msra.mxu0 0.0
    %2676 = vmatprep.subr.mxu0 0.0
    %2677 = vmatpush1.msra.mxu0 0.0
    %2678 = vmatprep.subr.mxu0 0.0
    %2679 = vmatpush1.msra.mxu0 0.0
    %2680 = vmatprep.subr.mxu0 0.0
    %2681 = vmatpush1.msra.mxu0 0.0
    %2682 = vmatprep.subr.mxu0 0.0
    %2683 = vmatpush1.msra.mxu0 0.0
    %2684 = vmatprep.subr.mxu0 0.0
    %2685 = vmatpush1.msra.mxu0 0.0
    %2686 = vmatprep.subr.mxu0 0.0
    %2687 = vmatpush1.msra.mxu0 0.0
    %2688 = vmatprep.subr.mxu0 0.0
    %2689 = vmatpush1.msra.mxu0 0.0
    %2690 = vmatprep.subr.mxu0 0.0
    %2691 = vmatpush1.msra.mxu0 0.0
    %2692 = vmatprep.subr.mxu0 0.0
    %2693 = vmatpush1.msra.mxu0 0.0
    %2694 = vmatprep.subr.mxu0 0.0
    %2695 = vmatpush1.msra.mxu0 0.0
    %2696 = vmatprep.subr.mxu0 0.0
    %2697 = vmatpush1.msra.mxu0 0.0
    %2698 = vmatprep.subr.mxu0 0.0
    %2699 = vmatpush1.msra.mxu0 0.0
    %2700 = vmatprep.subr.mxu0 0.0
    %2701 = vmatpush1.msra.mxu0 0.0
    %2702 = vmatprep.subr.mxu0 0.0
    %2703 = vmatpush1.msra.mxu0 0.0
    %2704 = vmatprep.subr.mxu0 0.0
    %2705 = vmatpush1.msra.mxu0 0.0
    %2706 = vmatprep.subr.mxu0 0.0
    %2707 = vmatpush1.msra.mxu0 0.0
    %2708 = vmatprep.subr.mxu0 0.0
    %2709 = vmatpush1.msra.mxu0 0.0
    %2710 = vmatprep.subr.mxu0 0.0
    %2711 = vmatpush1.msra.mxu0 0.0
    %2712 = vmatprep.subr.mxu0 0.0
    %2713 = vmatpush1.msra.mxu0 0.0
    %2714 = vmatprep.mubr.f32.mxu0 0.0
    %2715 = vmatmul.mubr.f32.gmra.mrb[0].mxu0 %v2648
    %v2716 = vpop.f32.mrb[0].mxu0
    %v2717 = vadd.f32 0.0, %v2716
    %v2718 = vpop.f32.mrb[0].mxu0
    %2719 = vdwg.mxu0
    %v2721 = vsel %vm1774, %v2488, 0
    %2723 = vmatprep.subr.mxu0 0.0
    %2724 = vmatpush1.msra.mxu0 %v1491
    %2725 = vmatprep.subr.mxu0 0.0
    %2726 = vmatpush1.msra.mxu0 0.0
    %2727 = vmatprep.subr.mxu0 0.0
    %2728 = vmatpush1.msra.mxu0 0.0
    %2729 = vmatprep.subr.mxu0 0.0
    %2730 = vmatpush1.msra.mxu0 0.0
    %2731 = vmatprep.subr.mxu0 0.0
    %2732 = vmatpush1.msra.mxu0 0.0
    %2733 = vmatprep.subr.mxu0 0.0
    %2734 = vmatpush1.msra.mxu0 0.0
    %2735 = vmatprep.subr.mxu0 0.0
    %2736 = vmatpush1.msra.mxu0 0.0
    %2737 = vmatprep.subr.mxu0 0.0
    %2738 = vmatpush1.msra.mxu0 0.0
    %2739 = vmatprep.subr.mxu0 0.0
    %2740 = vmatpush1.msra.mxu0 0.0
    %2741 = vmatprep.subr.mxu0 0.0
    %2742 = vmatpush1.msra.mxu0 0.0
    %2743 = vmatprep.subr.mxu0 0.0
    %2744 = vmatpush1.msra.mxu0 0.0
    %2745 = vmatprep.subr.mxu0 0.0
    %2746 = vmatpush1.msra.mxu0 0.0
    %2747 = vmatprep.subr.mxu0 0.0
    %2748 = vmatpush1.msra.mxu0 0.0
    %2749 = vmatprep.subr.mxu0 0.0
    %2750 = vmatpush1.msra.mxu0 0.0
    %2751 = vmatprep.subr.mxu0 0.0
    %2752 = vmatpush1.msra.mxu0 0.0
    %2753 = vmatprep.subr.mxu0 0.0
    %2754 = vmatpush1.msra.mxu0 0.0
    %2755 = vmatprep.subr.mxu0 0.0
    %2756 = vmatpush1.msra.mxu0 0.0
    %2757 = vmatprep.subr.mxu0 0.0
    %2758 = vmatpush1.msra.mxu0 0.0
    %2759 = vmatprep.subr.mxu0 0.0
    %2760 = vmatpush1.msra.mxu0 0.0
    %2761 = vmatprep.subr.mxu0 0.0
    %2762 = vmatpush1.msra.mxu0 0.0
    %2763 = vmatprep.subr.mxu0 0.0
    %2764 = vmatpush1.msra.mxu0 0.0
    %2765 = vmatprep.subr.mxu0 0.0
    %2766 = vmatpush1.msra.mxu0 0.0
    %2767 = vmatprep.subr.mxu0 0.0
    %2768 = vmatpush1.msra.mxu0 0.0
    %2769 = vmatprep.subr.mxu0 0.0
    %2770 = vmatpush1.msra.mxu0 0.0
    %2771 = vmatprep.subr.mxu0 0.0
    %2772 = vmatpush1.msra.mxu0 0.0
    %2773 = vmatprep.subr.mxu0 0.0
    %2774 = vmatpush1.msra.mxu0 0.0
    %2775 = vmatprep.subr.mxu0 0.0
    %2776 = vmatpush1.msra.mxu0 0.0
    %2777 = vmatprep.subr.mxu0 0.0
    %2778 = vmatpush1.msra.mxu0 0.0
    %2779 = vmatprep.subr.mxu0 0.0
    %2780 = vmatpush1.msra.mxu0 0.0
    %2781 = vmatprep.subr.mxu0 0.0
    %2782 = vmatpush1.msra.mxu0 0.0
    %2783 = vmatprep.subr.mxu0 0.0
    %2784 = vmatpush1.msra.mxu0 0.0
    %2785 = vmatprep.subr.mxu0 0.0
    %2786 = vmatpush1.msra.mxu0 0.0
    %2787 = vmatprep.mubr.f32.mxu0 0.0
    %2788 = vmatmul.mubr.f32.gmra.mrb[0].mxu0 %v2721
    %v2789 = vpop.f32.mrb[0].mxu0
    %v2790 = vadd.f32 0.0, %v2789
    %v2791 = vpop.f32.mrb[0].mxu0
    %2792 = vdwg.mxu0
    %v2794 = vsel %vm1774, %v2489, 0
    %2796 = vmatprep.subr.mxu0 0.0
    %2797 = vmatpush1.msra.mxu0 %v1561
    %2798 = vmatprep.subr.mxu0 0.0
    %2799 = vmatpush1.msra.mxu0 0.0
    %2800 = vmatprep.subr.mxu0 0.0
    %2801 = vmatpush1.msra.mxu0 0.0
    %2802 = vmatprep.subr.mxu0 0.0
    %2803 = vmatpush1.msra.mxu0 0.0
    %2804 = vmatprep.subr.mxu0 0.0
    %2805 = vmatpush1.msra.mxu0 0.0
    %2806 = vmatprep.subr.mxu0 0.0
    %2807 = vmatpush1.msra.mxu0 0.0
    %2808 = vmatprep.subr.mxu0 0.0
    %2809 = vmatpush1.msra.mxu0 0.0
    %2810 = vmatprep.subr.mxu0 0.0
    %2811 = vmatpush1.msra.mxu0 0.0
    %2812 = vmatprep.subr.mxu0 0.0
    %2813 = vmatpush1.msra.mxu0 0.0
    %2814 = vmatprep.subr.mxu0 0.0
    %2815 = vmatpush1.msra.mxu0 0.0
    %2816 = vmatprep.subr.mxu0 0.0
    %2817 = vmatpush1.msra.mxu0 0.0
    %2818 = vmatprep.subr.mxu0 0.0
    %2819 = vmatpush1.msra.mxu0 0.0
    %2820 = vmatprep.subr.mxu0 0.0
    %2821 = vmatpush1.msra.mxu0 0.0
    %2822 = vmatprep.subr.mxu0 0.0
    %2823 = vmatpush1.msra.mxu0 0.0
    %2824 = vmatprep.subr.mxu0 0.0
    %2825 = vmatpush1.msra.mxu0 0.0
    %2826 = vmatprep.subr.mxu0 0.0
    %2827 = vmatpush1.msra.mxu0 0.0
    %2828 = vmatprep.subr.mxu0 0.0
    %2829 = vmatpush1.msra.mxu0 0.0
    %2830 = vmatprep.subr.mxu0 0.0
    %2831 = vmatpush1.msra.mxu0 0.0
    %2832 = vmatprep.subr.mxu0 0.0
    %2833 = vmatpush1.msra.mxu0 0.0
    %2834 = vmatprep.subr.mxu0 0.0
    %2835 = vmatpush1.msra.mxu0 0.0
    %2836 = vmatprep.subr.mxu0 0.0
    %2837 = vmatpush1.msra.mxu0 0.0
    %2838 = vmatprep.subr.mxu0 0.0
    %2839 = vmatpush1.msra.mxu0 0.0
    %2840 = vmatprep.subr.mxu0 0.0
    %2841 = vmatpush1.msra.mxu0 0.0
    %2842 = vmatprep.subr.mxu0 0.0
    %2843 = vmatpush1.msra.mxu0 0.0
    %2844 = vmatprep.subr.mxu0 0.0
    %2845 = vmatpush1.msra.mxu0 0.0
    %2846 = vmatprep.subr.mxu0 0.0
    %2847 = vmatpush1.msra.mxu0 0.0
    %2848 = vmatprep.subr.mxu0 0.0
    %2849 = vmatpush1.msra.mxu0 0.0
    %2850 = vmatprep.subr.mxu0 0.0
    %2851 = vmatpush1.msra.mxu0 0.0
    %2852 = vmatprep.subr.mxu0 0.0
    %2853 = vmatpush1.msra.mxu0 0.0
    %2854 = vmatprep.subr.mxu0 0.0
    %2855 = vmatpush1.msra.mxu0 0.0
    %2856 = vmatprep.subr.mxu0 0.0
    %2857 = vmatpush1.msra.mxu0 0.0
    %2858 = vmatprep.subr.mxu0 0.0
    %2859 = vmatpush1.msra.mxu0 0.0
    %2860 = vmatprep.mubr.f32.mxu0 0.0
    %2861 = vmatmul.mubr.f32.gmra.mrb[0].mxu0 %v2794
    %v2862 = vpop.f32.mrb[0].mxu0
    %v2863 = vadd.f32 0.0, %v2862
    %v2864 = vpop.f32.mrb[0].mxu0
    %2865 = vdwg.mxu0
    %v2867 = vsel %vm1774, %v2490, 0
    %2869 = vmatprep.subr.mxu0 0.0
    %2870 = vmatpush1.msra.mxu0 %v1631
    %2871 = vmatprep.subr.mxu0 0.0
    %2872 = vmatpush1.msra.mxu0 0.0
    %2873 = vmatprep.subr.mxu0 0.0
    %2874 = vmatpush1.msra.mxu0 0.0
    %2875 = vmatprep.subr.mxu0 0.0
    %2876 = vmatpush1.msra.mxu0 0.0
    %2877 = vmatprep.subr.mxu0 0.0
    %2878 = vmatpush1.msra.mxu0 0.0
    %2879 = vmatprep.subr.mxu0 0.0
    %2880 = vmatpush1.msra.mxu0 0.0
    %2881 = vmatprep.subr.mxu0 0.0
    %2882 = vmatpush1.msra.mxu0 0.0
    %2883 = vmatprep.subr.mxu0 0.0
    %2884 = vmatpush1.msra.mxu0 0.0
    %2885 = vmatprep.subr.mxu0 0.0
    %2886 = vmatpush1.msra.mxu0 0.0
    %2887 = vmatprep.subr.mxu0 0.0
    %2888 = vmatpush1.msra.mxu0 0.0
    %2889 = vmatprep.subr.mxu0 0.0
    %2890 = vmatpush1.msra.mxu0 0.0
    %2891 = vmatprep.subr.mxu0 0.0
    %2892 = vmatpush1.msra.mxu0 0.0
    %2893 = vmatprep.subr.mxu0 0.0
    %2894 = vmatpush1.msra.mxu0 0.0
    %2895 = vmatprep.subr.mxu0 0.0
    %2896 = vmatpush1.msra.mxu0 0.0
    %2897 = vmatprep.subr.mxu0 0.0
    %2898 = vmatpush1.msra.mxu0 0.0
    %2899 = vmatprep.subr.mxu0 0.0
    %2900 = vmatpush1.msra.mxu0 0.0
    %2901 = vmatprep.subr.mxu0 0.0
    %2902 = vmatpush1.msra.mxu0 0.0
    %2903 = vmatprep.subr.mxu0 0.0
    %2904 = vmatpush1.msra.mxu0 0.0
    %2905 = vmatprep.subr.mxu0 0.0
    %2906 = vmatpush1.msra.mxu0 0.0
    %2907 = vmatprep.subr.mxu0 0.0
    %2908 = vmatpush1.msra.mxu0 0.0
    %2909 = vmatprep.subr.mxu0 0.0
    %2910 = vmatpush1.msra.mxu0 0.0
    %2911 = vmatprep.subr.mxu0 0.0
    %2912 = vmatpush1.msra.mxu0 0.0
    %2913 = vmatprep.subr.mxu0 0.0
    %2914 = vmatpush1.msra.mxu0 0.0
    %2915 = vmatprep.subr.mxu0 0.0
    %2916 = vmatpush1.msra.mxu0 0.0
    %2917 = vmatprep.subr.mxu0 0.0
    %2918 = vmatpush1.msra.mxu0 0.0
    %2919 = vmatprep.subr.mxu0 0.0
    %2920 = vmatpush1.msra.mxu0 0.0
    %2921 = vmatprep.subr.mxu0 0.0
    %2922 = vmatpush1.msra.mxu0 0.0
    %2923 = vmatprep.subr.mxu0 0.0
    %2924 = vmatpush1.msra.mxu0 0.0
    %2925 = vmatprep.subr.mxu0 0.0
    %2926 = vmatpush1.msra.mxu0 0.0
    %2927 = vmatprep.subr.mxu0 0.0
    %2928 = vmatpush1.msra.mxu0 0.0
    %2929 = vmatprep.subr.mxu0 0.0
    %2930 = vmatpush1.msra.mxu0 0.0
    %2931 = vmatprep.subr.mxu0 0.0
    %2932 = vmatpush1.msra.mxu0 0.0
    %2933 = vmatprep.mubr.f32.mxu0 0.0
    %2934 = vmatmul.mubr.f32.gmra.mrb[0].mxu0 %v2867
    %v2935 = vpop.f32.mrb[0].mxu0
    %v2936 = vadd.f32 0.0, %v2935
    %v2937 = vpop.f32.mrb[0].mxu0
    %2938 = vdwg.mxu0
    %v2940 = vsel %vm1774, %v2491, 0
    %2942 = vmatprep.subr.mxu0 0.0
    %2943 = vmatpush1.msra.mxu0 %v1701
    %2944 = vmatprep.subr.mxu0 0.0
    %2945 = vmatpush1.msra.mxu0 0.0
    %2946 = vmatprep.subr.mxu0 0.0
    %2947 = vmatpush1.msra.mxu0 0.0
    %2948 = vmatprep.subr.mxu0 0.0
    %2949 = vmatpush1.msra.mxu0 0.0
    %2950 = vmatprep.subr.mxu0 0.0
    %2951 = vmatpush1.msra.mxu0 0.0
    %2952 = vmatprep.subr.mxu0 0.0
    %2953 = vmatpush1.msra.mxu0 0.0
    %2954 = vmatprep.subr.mxu0 0.0
    %2955 = vmatpush1.msra.mxu0 0.0
    %2956 = vmatprep.subr.mxu0 0.0
    %2957 = vmatpush1.msra.mxu0 0.0
    %2958 = vmatprep.subr.mxu0 0.0
    %2959 = vmatpush1.msra.mxu0 0.0
    %2960 = vmatprep.subr.mxu0 0.0
    %2961 = vmatpush1.msra.mxu0 0.0
    %2962 = vmatprep.subr.mxu0 0.0
    %2963 = vmatpush1.msra.mxu0 0.0
    %2964 = vmatprep.subr.mxu0 0.0
    %2965 = vmatpush1.msra.mxu0 0.0
    %2966 = vmatprep.subr.mxu0 0.0
    %2967 = vmatpush1.msra.mxu0 0.0
    %2968 = vmatprep.subr.mxu0 0.0
    %2969 = vmatpush1.msra.mxu0 0.0
    %2970 = vmatprep.subr.mxu0 0.0
    %2971 = vmatpush1.msra.mxu0 0.0
    %2972 = vmatprep.subr.mxu0 0.0
    %2973 = vmatpush1.msra.mxu0 0.0
    %2974 = vmatprep.subr.mxu0 0.0
    %2975 = vmatpush1.msra.mxu0 0.0
    %2976 = vmatprep.subr.mxu0 0.0
    %2977 = vmatpush1.msra.mxu0 0.0
    %2978 = vmatprep.subr.mxu0 0.0
    %2979 = vmatpush1.msra.mxu0 0.0
    %2980 = vmatprep.subr.mxu0 0.0
    %2981 = vmatpush1.msra.mxu0 0.0
    %2982 = vmatprep.subr.mxu0 0.0
    %2983 = vmatpush1.msra.mxu0 0.0
    %2984 = vmatprep.subr.mxu0 0.0
    %2985 = vmatpush1.msra.mxu0 0.0
    %2986 = vmatprep.subr.mxu0 0.0
    %2987 = vmatpush1.msra.mxu0 0.0
    %2988 = vmatprep.subr.mxu0 0.0
    %2989 = vmatpush1.msra.mxu0 0.0
    %2990 = vmatprep.subr.mxu0 0.0
    %2991 = vmatpush1.msra.mxu0 0.0
    %2992 = vmatprep.subr.mxu0 0.0
    %2993 = vmatpush1.msra.mxu0 0.0
    %2994 = vmatprep.subr.mxu0 0.0
    %2995 = vmatpush1.msra.mxu0 0.0
    %2996 = vmatprep.subr.mxu0 0.0
    %2997 = vmatpush1.msra.mxu0 0.0
    %2998 = vmatprep.subr.mxu0 0.0
    %2999 = vmatpush1.msra.mxu0 0.0
    %3000 = vmatprep.subr.mxu0 0.0
    %3001 = vmatpush1.msra.mxu0 0.0
    %3002 = vmatprep.subr.mxu0 0.0
    %3003 = vmatpush1.msra.mxu0 0.0
    %3004 = vmatprep.subr.mxu0 0.0
    %3005 = vmatpush1.msra.mxu0 0.0
    %3006 = vmatprep.mubr.f32.mxu0 0.0
    %3007 = vmatmul.mubr.f32.gmra.mrb[0].mxu0 %v2940
    %v3008 = vpop.f32.mrb[0].mxu0
    %v3009 = vadd.f32 0.0, %v3008
    %v3010 = vpop.f32.mrb[0].mxu0
    %3011 = vdwg.mxu0
    %v3013 = vsel %vm1774, %v2492, 0
    %3015 = vmatprep.subr.mxu0 0.0
    %3016 = vmatpush1.msra.mxu0 %v1771
    %3017 = vmatprep.subr.mxu0 0.0
    %3018 = vmatpush1.msra.mxu0 0.0
    %3019 = vmatprep.subr.mxu0 0.0
    %3020 = vmatpush1.msra.mxu0 0.0
    %3021 = vmatprep.subr.mxu0 0.0
    %3022 = vmatpush1.msra.mxu0 0.0
    %3023 = vmatprep.subr.mxu0 0.0
    %3024 = vmatpush1.msra.mxu0 0.0
    %3025 = vmatprep.subr.mxu0 0.0
    %3026 = vmatpush1.msra.mxu0 0.0
    %3027 = vmatprep.subr.mxu0 0.0
    %3028 = vmatpush1.msra.mxu0 0.0
    %3029 = vmatprep.subr.mxu0 0.0
    %3030 = vmatpush1.msra.mxu0 0.0
    %3031 = vmatprep.subr.mxu0 0.0
    %3032 = vmatpush1.msra.mxu0 0.0
    %3033 = vmatprep.subr.mxu0 0.0
    %3034 = vmatpush1.msra.mxu0 0.0
    %3035 = vmatprep.subr.mxu0 0.0
    %3036 = vmatpush1.msra.mxu0 0.0
    %3037 = vmatprep.subr.mxu0 0.0
    %3038 = vmatpush1.msra.mxu0 0.0
    %3039 = vmatprep.subr.mxu0 0.0
    %3040 = vmatpush1.msra.mxu0 0.0
    %3041 = vmatprep.subr.mxu0 0.0
    %3042 = vmatpush1.msra.mxu0 0.0
    %3043 = vmatprep.subr.mxu0 0.0
    %3044 = vmatpush1.msra.mxu0 0.0
    %3045 = vmatprep.subr.mxu0 0.0
    %3046 = vmatpush1.msra.mxu0 0.0
    %3047 = vmatprep.subr.mxu0 0.0
    %3048 = vmatpush1.msra.mxu0 0.0
    %3049 = vmatprep.subr.mxu0 0.0
    %3050 = vmatpush1.msra.mxu0 0.0
    %3051 = vmatprep.subr.mxu0 0.0
    %3052 = vmatpush1.msra.mxu0 0.0
    %3053 = vmatprep.subr.mxu0 0.0
    %3054 = vmatpush1.msra.mxu0 0.0
    %3055 = vmatprep.subr.mxu0 0.0
    %3056 = vmatpush1.msra.mxu0 0.0
    %3057 = vmatprep.subr.mxu0 0.0
    %3058 = vmatpush1.msra.mxu0 0.0
    %3059 = vmatprep.subr.mxu0 0.0
    %3060 = vmatpush1.msra.mxu0 0.0
    %3061 = vmatprep.subr.mxu0 0.0
    %3062 = vmatpush1.msra.mxu0 0.0
    %3063 = vmatprep.subr.mxu0 0.0
    %3064 = vmatpush1.msra.mxu0 0.0
    %3065 = vmatprep.subr.mxu0 0.0
    %3066 = vmatpush1.msra.mxu0 0.0
    %3067 = vmatprep.subr.mxu0 0.0
    %3068 = vmatpush1.msra.mxu0 0.0
    %3069 = vmatprep.subr.mxu0 0.0
    %3070 = vmatpush1.msra.mxu0 0.0
    %3071 = vmatprep.subr.mxu0 0.0
    %3072 = vmatpush1.msra.mxu0 0.0
    %3073 = vmatprep.subr.mxu0 0.0
    %3074 = vmatpush1.msra.mxu0 0.0
    %3075 = vmatprep.subr.mxu0 0.0
    %3076 = vmatpush1.msra.mxu0 0.0
    %3077 = vmatprep.subr.mxu0 0.0
    %3078 = vmatpush1.msra.mxu0 0.0
    %3079 = vmatprep.mubr.f32.mxu0 0.0
    %3080 = vmatmul.mubr.f32.gmra.mrb[0].mxu0 %v3013
    %v3081 = vpop.f32.mrb[0].mxu0
    %v3082 = vadd.f32 0.0, %v3081
    %v3083 = vpop.f32.mrb[0].mxu0
    %3084 = vdwg.mxu0
    %v3086 = vsel %vm1774, %v2571, 0
    %3088 = vmatprep.subr.mxu0 0.0
    %3089 = vmatpush1.msra.mxu0 %v83
    %3090 = vmatprep.subr.mxu0 0.0
    %3091 = vmatpush1.msra.mxu0 0.0
    %3092 = vmatprep.subr.mxu0 0.0
    %3093 = vmatpush1.msra.mxu0 0.0
    %3094 = vmatprep.subr.mxu0 0.0
    %3095 = vmatpush1.msra.mxu0 0.0
    %3096 = vmatprep.subr.mxu0 0.0
    %3097 = vmatpush1.msra.mxu0 0.0
    %3098 = vmatprep.subr.mxu0 0.0
    %3099 = vmatpush1.msra.mxu0 0.0
    %3100 = vmatprep.subr.mxu0 0.0
    %3101 = vmatpush1.msra.mxu0 0.0
    %3102 = vmatprep.subr.mxu0 0.0
    %3103 = vmatpush1.msra.mxu0 0.0
    %3104 = vmatprep.subr.mxu0 0.0
    %3105 = vmatpush1.msra.mxu0 0.0
    %3106 = vmatprep.subr.mxu0 0.0
    %3107 = vmatpush1.msra.mxu0 0.0
    %3108 = vmatprep.subr.mxu0 0.0
    %3109 = vmatpush1.msra.mxu0 0.0
    %3110 = vmatprep.subr.mxu0 0.0
    %3111 = vmatpush1.msra.mxu0 0.0
    %3112 = vmatprep.subr.mxu0 0.0
    %3113 = vmatpush1.msra.mxu0 0.0
    %3114 = vmatprep.subr.mxu0 0.0
    %3115 = vmatpush1.msra.mxu0 0.0
    %3116 = vmatprep.subr.mxu0 0.0
    %3117 = vmatpush1.msra.mxu0 0.0
    %3118 = vmatprep.subr.mxu0 0.0
    %3119 = vmatpush1.msra.mxu0 0.0
    %3120 = vmatprep.subr.mxu0 0.0
    %3121 = vmatpush1.msra.mxu0 0.0
    %3122 = vmatprep.subr.mxu0 0.0
    %3123 = vmatpush1.msra.mxu0 0.0
    %3124 = vmatprep.subr.mxu0 0.0
    %3125 = vmatpush1.msra.mxu0 0.0
    %3126 = vmatprep.subr.mxu0 0.0
    %3127 = vmatpush1.msra.mxu0 0.0
    %3128 = vmatprep.subr.mxu0 0.0
    %3129 = vmatpush1.msra.mxu0 0.0
    %3130 = vmatprep.subr.mxu0 0.0
    %3131 = vmatpush1.msra.mxu0 0.0
    %3132 = vmatprep.subr.mxu0 0.0
    %3133 = vmatpush1.msra.mxu0 0.0
    %3134 = vmatprep.subr.mxu0 0.0
    %3135 = vmatpush1.msra.mxu0 0.0
    %3136 = vmatprep.subr.mxu0 0.0
    %3137 = vmatpush1.msra.mxu0 0.0
    %3138 = vmatprep.subr.mxu0 0.0
    %3139 = vmatpush1.msra.mxu0 0.0
    %3140 = vmatprep.subr.mxu0 0.0
    %3141 = vmatpush1.msra.mxu0 0.0
    %3142 = vmatprep.subr.mxu0 0.0
    %3143 = vmatpush1.msra.mxu0 0.0
    %3144 = vmatprep.subr.mxu0 0.0
    %3145 = vmatpush1.msra.mxu0 0.0
    %3146 = vmatprep.subr.mxu0 0.0
    %3147 = vmatpush1.msra.mxu0 0.0
    %3148 = vmatprep.subr.mxu0 0.0
    %3149 = vmatpush1.msra.mxu0 0.0
    %3150 = vmatprep.subr.mxu0 0.0
    %3151 = vmatpush1.msra.mxu0 0.0
    %3152 = vmatprep.mubr.f32.mxu0 0.0
    %3153 = vmatmul.mubr.f32.gmra.mrb[0].mxu0 %v3086
    %v3154 = vpop.f32.mrb[0].mxu0
    %v3155 = vadd.f32 0.0, %v3154
    %v3156 = vpop.f32.mrb[0].mxu0
    %3157 = vdwg.mxu0
    %v3159 = vsel %vm1774, %v2644, 0
    %3161 = vmatprep.subr.mxu0 0.0
    %3162 = vmatpush1.msra.mxu0 %v84
    %3163 = vmatprep.subr.mxu0 0.0
    %3164 = vmatpush1.msra.mxu0 0.0
    %3165 = vmatprep.subr.mxu0 0.0
    %3166 = vmatpush1.msra.mxu0 0.0
    %3167 = vmatprep.subr.mxu0 0.0
    %3168 = vmatpush1.msra.mxu0 0.0
    %3169 = vmatprep.subr.mxu0 0.0
    %3170 = vmatpush1.msra.mxu0 0.0
    %3171 = vmatprep.subr.mxu0 0.0
    %3172 = vmatpush1.msra.mxu0 0.0
    %3173 = vmatprep.subr.mxu0 0.0
    %3174 = vmatpush1.msra.mxu0 0.0
    %3175 = vmatprep.subr.mxu0 0.0
    %3176 = vmatpush1.msra.mxu0 0.0
    %3177 = vmatprep.subr.mxu0 0.0
    %3178 = vmatpush1.msra.mxu0 0.0
    %3179 = vmatprep.subr.mxu0 0.0
    %3180 = vmatpush1.msra.mxu0 0.0
    %3181 = vmatprep.subr.mxu0 0.0
    %3182 = vmatpush1.msra.mxu0 0.0
    %3183 = vmatprep.subr.mxu0 0.0
    %3184 = vmatpush1.msra.mxu0 0.0
    %3185 = vmatprep.subr.mxu0 0.0
    %3186 = vmatpush1.msra.mxu0 0.0
    %3187 = vmatprep.subr.mxu0 0.0
    %3188 = vmatpush1.msra.mxu0 0.0
    %3189 = vmatprep.subr.mxu0 0.0
    %3190 = vmatpush1.msra.mxu0 0.0
    %3191 = vmatprep.subr.mxu0 0.0
    %3192 = vmatpush1.msra.mxu0 0.0
    %3193 = vmatprep.subr.mxu0 0.0
    %3194 = vmatpush1.msra.mxu0 0.0
    %3195 = vmatprep.subr.mxu0 0.0
    %3196 = vmatpush1.msra.mxu0 0.0
    %3197 = vmatprep.subr.mxu0 0.0
    %3198 = vmatpush1.msra.mxu0 0.0
    %3199 = vmatprep.subr.mxu0 0.0
    %3200 = vmatpush1.msra.mxu0 0.0
    %3201 = vmatprep.subr.mxu0 0.0
    %3202 = vmatpush1.msra.mxu0 0.0
    %3203 = vmatprep.subr.mxu0 0.0
    %3204 = vmatpush1.msra.mxu0 0.0
    %3205 = vmatprep.subr.mxu0 0.0
    %3206 = vmatpush1.msra.mxu0 0.0
    %3207 = vmatprep.subr.mxu0 0.0
    %3208 = vmatpush1.msra.mxu0 0.0
    %3209 = vmatprep.subr.mxu0 0.0
    %3210 = vmatpush1.msra.mxu0 0.0
    %3211 = vmatprep.subr.mxu0 0.0
    %3212 = vmatpush1.msra.mxu0 0.0
    %3213 = vmatprep.subr.mxu0 0.0
    %3214 = vmatpush1.msra.mxu0 0.0
    %3215 = vmatprep.subr.mxu0 0.0
    %3216 = vmatpush1.msra.mxu0 0.0
    %3217 = vmatprep.subr.mxu0 0.0
    %3218 = vmatpush1.msra.mxu0 0.0
    %3219 = vmatprep.subr.mxu0 0.0
    %3220 = vmatpush1.msra.mxu0 0.0
    %3221 = vmatprep.subr.mxu0 0.0
    %3222 = vmatpush1.msra.mxu0 0.0
    %3223 = vmatprep.subr.mxu0 0.0
    %3224 = vmatpush1.msra.mxu0 0.0
    %3225 = vmatprep.mubr.f32.mxu0 0.0
    %3226 = vmatmul.mubr.f32.gmra.mrb[0].mxu0 %v3159
    %v3227 = vpop.f32.mrb[0].mxu0
    %v3228 = vadd.f32 0.0, %v3227
    %v3229 = vpop.f32.mrb[0].mxu0
    %3230 = vdwg.mxu0
    %v3232 = vsel %vm1774, %v2717, 0
    %3234 = vmatprep.subr.mxu0 0.0
    %3235 = vmatpush1.msra.mxu0 %v85
    %3236 = vmatprep.subr.mxu0 0.0
    %3237 = vmatpush1.msra.mxu0 0.0
    %3238 = vmatprep.subr.mxu0 0.0
    %3239 = vmatpush1.msra.mxu0 0.0
    %3240 = vmatprep.subr.mxu0 0.0
    %3241 = vmatpush1.msra.mxu0 0.0
    %3242 = vmatprep.subr.mxu0 0.0
    %3243 = vmatpush1.msra.mxu0 0.0
    %3244 = vmatprep.subr.mxu0 0.0
    %3245 = vmatpush1.msra.mxu0 0.0
    %3246 = vmatprep.subr.mxu0 0.0
    %3247 = vmatpush1.msra.mxu0 0.0
    %3248 = vmatprep.subr.mxu0 0.0
    %3249 = vmatpush1.msra.mxu0 0.0
    %3250 = vmatprep.subr.mxu0 0.0
    %3251 = vmatpush1.msra.mxu0 0.0
    %3252 = vmatprep.subr.mxu0 0.0
    %3253 = vmatpush1.msra.mxu0 0.0
    %3254 = vmatprep.subr.mxu0 0.0
    %3255 = vmatpush1.msra.mxu0 0.0
    %3256 = vmatprep.subr.mxu0 0.0
    %3257 = vmatpush1.msra.mxu0 0.0
    %3258 = vmatprep.subr.mxu0 0.0
    %3259 = vmatpush1.msra.mxu0 0.0
    %3260 = vmatprep.subr.mxu0 0.0
    %3261 = vmatpush1.msra.mxu0 0.0
    %3262 = vmatprep.subr.mxu0 0.0
    %3263 = vmatpush1.msra.mxu0 0.0
    %3264 = vmatprep.subr.mxu0 0.0
    %3265 = vmatpush1.msra.mxu0 0.0
    %3266 = vmatprep.subr.mxu0 0.0
    %3267 = vmatpush1.msra.mxu0 0.0
    %3268 = vmatprep.subr.mxu0 0.0
    %3269 = vmatpush1.msra.mxu0 0.0
    %3270 = vmatprep.subr.mxu0 0.0
    %3271 = vmatpush1.msra.mxu0 0.0
    %3272 = vmatprep.subr.mxu0 0.0
    %3273 = vmatpush1.msra.mxu0 0.0
    %3274 = vmatprep.subr.mxu0 0.0
    %3275 = vmatpush1.msra.mxu0 0.0
    %3276 = vmatprep.subr.mxu0 0.0
    %3277 = vmatpush1.msra.mxu0 0.0
    %3278 = vmatprep.subr.mxu0 0.0
    %3279 = vmatpush1.msra.mxu0 0.0
    %3280 = vmatprep.subr.mxu0 0.0
    %3281 = vmatpush1.msra.mxu0 0.0
    %3282 = vmatprep.subr.mxu0 0.0
    %3283 = vmatpush1.msra.mxu0 0.0
    %3284 = vmatprep.subr.mxu0 0.0
    %3285 = vmatpush1.msra.mxu0 0.0
    %3286 = vmatprep.subr.mxu0 0.0
    %3287 = vmatpush1.msra.mxu0 0.0
    %3288 = vmatprep.subr.mxu0 0.0
    %3289 = vmatpush1.msra.mxu0 0.0
    %3290 = vmatprep.subr.mxu0 0.0
    %3291 = vmatpush1.msra.mxu0 0.0
    %3292 = vmatprep.subr.mxu0 0.0
    %3293 = vmatpush1.msra.mxu0 0.0
    %3294 = vmatprep.subr.mxu0 0.0
    %3295 = vmatpush1.msra.mxu0 0.0
    %3296 = vmatprep.subr.mxu0 0.0
    %3297 = vmatpush1.msra.mxu0 0.0
    %3298 = vmatprep.mubr.f32.mxu0 0.0
    %3299 = vmatmul.mubr.f32.gmra.mrb[0].mxu0 %v3232
    %v3300 = vpop.f32.mrb[0].mxu0
    %v3301 = vadd.f32 0.0, %v3300
    %v3302 = vpop.f32.mrb[0].mxu0
    %3303 = vdwg.mxu0
    %v3305 = vsel %vm1774, %v2790, 0
    %3307 = vmatprep.subr.mxu0 0.0
    %3308 = vmatpush1.msra.mxu0 %v86
    %3309 = vmatprep.subr.mxu0 0.0
    %3310 = vmatpush1.msra.mxu0 0.0
    %3311 = vmatprep.subr.mxu0 0.0
    %3312 = vmatpush1.msra.mxu0 0.0
    %3313 = vmatprep.subr.mxu0 0.0
    %3314 = vmatpush1.msra.mxu0 0.0
    %3315 = vmatprep.subr.mxu0 0.0
    %3316 = vmatpush1.msra.mxu0 0.0
    %3317 = vmatprep.subr.mxu0 0.0
    %3318 = vmatpush1.msra.mxu0 0.0
    %3319 = vmatprep.subr.mxu0 0.0
    %3320 = vmatpush1.msra.mxu0 0.0
    %3321 = vmatprep.subr.mxu0 0.0
    %3322 = vmatpush1.msra.mxu0 0.0
    %3323 = vmatprep.subr.mxu0 0.0
    %3324 = vmatpush1.msra.mxu0 0.0
    %3325 = vmatprep.subr.mxu0 0.0
    %3326 = vmatpush1.msra.mxu0 0.0
    %3327 = vmatprep.subr.mxu0 0.0
    %3328 = vmatpush1.msra.mxu0 0.0
    %3329 = vmatprep.subr.mxu0 0.0
    %3330 = vmatpush1.msra.mxu0 0.0
    %3331 = vmatprep.subr.mxu0 0.0
    %3332 = vmatpush1.msra.mxu0 0.0
    %3333 = vmatprep.subr.mxu0 0.0
    %3334 = vmatpush1.msra.mxu0 0.0
    %3335 = vmatprep.subr.mxu0 0.0
    %3336 = vmatpush1.msra.mxu0 0.0
    %3337 = vmatprep.subr.mxu0 0.0
    %3338 = vmatpush1.msra.mxu0 0.0
    %3339 = vmatprep.subr.mxu0 0.0
    %3340 = vmatpush1.msra.mxu0 0.0
    %3341 = vmatprep.subr.mxu0 0.0
    %3342 = vmatpush1.msra.mxu0 0.0
    %3343 = vmatprep.subr.mxu0 0.0
    %3344 = vmatpush1.msra.mxu0 0.0
    %3345 = vmatprep.subr.mxu0 0.0
    %3346 = vmatpush1.msra.mxu0 0.0
    %3347 = vmatprep.subr.mxu0 0.0
    %3348 = vmatpush1.msra.mxu0 0.0
    %3349 = vmatprep.subr.mxu0 0.0
    %3350 = vmatpush1.msra.mxu0 0.0
    %3351 = vmatprep.subr.mxu0 0.0
    %3352 = vmatpush1.msra.mxu0 0.0
    %3353 = vmatprep.subr.mxu0 0.0
    %3354 = vmatpush1.msra.mxu0 0.0
    %3355 = vmatprep.subr.mxu0 0.0
    %3356 = vmatpush1.msra.mxu0 0.0
    %3357 = vmatprep.subr.mxu0 0.0
    %3358 = vmatpush1.msra.mxu0 0.0
    %3359 = vmatprep.subr.mxu0 0.0
    %3360 = vmatpush1.msra.mxu0 0.0
    %3361 = vmatprep.subr.mxu0 0.0
    %3362 = vmatpush1.msra.mxu0 0.0
    %3363 = vmatprep.subr.mxu0 0.0
    %3364 = vmatpush1.msra.mxu0 0.0
    %3365 = vmatprep.subr.mxu0 0.0
    %3366 = vmatpush1.msra.mxu0 0.0
    %3367 = vmatprep.subr.mxu0 0.0
    %3368 = vmatpush1.msra.mxu0 0.0
    %3369 = vmatprep.subr.mxu0 0.0
    %3370 = vmatpush1.msra.mxu0 0.0
    %3371 = vmatprep.mubr.f32.mxu0 0.0
    %3372 = vmatmul.mubr.f32.gmra.mrb[0].mxu0 %v3305
    %v3373 = vpop.f32.mrb[0].mxu0
    %v3374 = vadd.f32 0.0, %v3373
    %v3375 = vpop.f32.mrb[0].mxu0
    %3376 = vdwg.mxu0
    %v3378 = vsel %vm1774, %v2863, 0
    %3380 = vmatprep.subr.mxu0 0.0
    %3381 = vmatpush1.msra.mxu0 %v83
    %3382 = vmatprep.subr.mxu0 0.0
    %3383 = vmatpush1.msra.mxu0 0.0
    %3384 = vmatprep.subr.mxu0 0.0
    %3385 = vmatpush1.msra.mxu0 0.0
    %3386 = vmatprep.subr.mxu0 0.0
    %3387 = vmatpush1.msra.mxu0 0.0
    %3388 = vmatprep.subr.mxu0 0.0
    %3389 = vmatpush1.msra.mxu0 0.0
    %3390 = vmatprep.subr.mxu0 0.0
    %3391 = vmatpush1.msra.mxu0 0.0
    %3392 = vmatprep.subr.mxu0 0.0
    %3393 = vmatpush1.msra.mxu0 0.0
    %3394 = vmatprep.subr.mxu0 0.0
    %3395 = vmatpush1.msra.mxu0 0.0
    %3396 = vmatprep.subr.mxu0 0.0
    %3397 = vmatpush1.msra.mxu0 0.0
    %3398 = vmatprep.subr.mxu0 0.0
    %3399 = vmatpush1.msra.mxu0 0.0
    %3400 = vmatprep.subr.mxu0 0.0
    %3401 = vmatpush1.msra.mxu0 0.0
    %3402 = vmatprep.subr.mxu0 0.0
    %3403 = vmatpush1.msra.mxu0 0.0
    %3404 = vmatprep.subr.mxu0 0.0
    %3405 = vmatpush1.msra.mxu0 0.0
    %3406 = vmatprep.subr.mxu0 0.0
    %3407 = vmatpush1.msra.mxu0 0.0
    %3408 = vmatprep.subr.mxu0 0.0
    %3409 = vmatpush1.msra.mxu0 0.0
    %3410 = vmatprep.subr.mxu0 0.0
    %3411 = vmatpush1.msra.mxu0 0.0
    %3412 = vmatprep.subr.mxu0 0.0
    %3413 = vmatpush1.msra.mxu0 0.0
    %3414 = vmatprep.subr.mxu0 0.0
    %3415 = vmatpush1.msra.mxu0 0.0
    %3416 = vmatprep.subr.mxu0 0.0
    %3417 = vmatpush1.msra.mxu0 0.0
    %3418 = vmatprep.subr.mxu0 0.0
    %3419 = vmatpush1.msra.mxu0 0.0
    %3420 = vmatprep.subr.mxu0 0.0
    %3421 = vmatpush1.msra.mxu0 0.0
    %3422 = vmatprep.subr.mxu0 0.0
    %3423 = vmatpush1.msra.mxu0 0.0
    %3424 = vmatprep.subr.mxu0 0.0
    %3425 = vmatpush1.msra.mxu0 0.0
    %3426 = vmatprep.subr.mxu0 0.0
    %3427 = vmatpush1.msra.mxu0 0.0
    %3428 = vmatprep.subr.mxu0 0.0
    %3429 = vmatpush1.msra.mxu0 0.0
    %3430 = vmatprep.subr.mxu0 0.0
    %3431 = vmatpush1.msra.mxu0 0.0
    %3432 = vmatprep.subr.mxu0 0.0
    %3433 = vmatpush1.msra.mxu0 0.0
    %3434 = vmatprep.subr.mxu0 0.0
    %3435 = vmatpush1.msra.mxu0 0.0
    %3436 = vmatprep.subr.mxu0 0.0
    %3437 = vmatpush1.msra.mxu0 0.0
    %3438 = vmatprep.subr.mxu0 0.0
    %3439 = vmatpush1.msra.mxu0 0.0
    %3440 = vmatprep.subr.mxu0 0.0
    %3441 = vmatpush1.msra.mxu0 0.0
    %3442 = vmatprep.subr.mxu0 0.0
    %3443 = vmatpush1.msra.mxu0 0.0
    %3444 = vmatprep.mubr.f32.mxu0 0.0
    %3445 = vmatmul.mubr.f32.gmra.mrb[0].mxu0 %v3378
    %v3446 = vpop.f32.mrb[0].mxu0
    %v3447 = vadd.f32 0.0, %v3446
    %v3448 = vpop.f32.mrb[0].mxu0
    %3449 = vdwg.mxu0
    %v3451 = vsel %vm1774, %v2936, 0
    %3453 = vmatprep.subr.mxu0 0.0
    %3454 = vmatpush1.msra.mxu0 %v84
    %3455 = vmatprep.subr.mxu0 0.0
    %3456 = vmatpush1.msra.mxu0 0.0
    %3457 = vmatprep.subr.mxu0 0.0
    %3458 = vmatpush1.msra.mxu0 0.0
    %3459 = vmatprep.subr.mxu0 0.0
    %3460 = vmatpush1.msra.mxu0 0.0
    %3461 = vmatprep.subr.mxu0 0.0
    %3462 = vmatpush1.msra.mxu0 0.0
    %3463 = vmatprep.subr.mxu0 0.0
    %3464 = vmatpush1.msra.mxu0 0.0
    %3465 = vmatprep.subr.mxu0 0.0
    %3466 = vmatpush1.msra.mxu0 0.0
    %3467 = vmatprep.subr.mxu0 0.0
    %3468 = vmatpush1.msra.mxu0 0.0
    %3469 = vmatprep.subr.mxu0 0.0
    %3470 = vmatpush1.msra.mxu0 0.0
    %3471 = vmatprep.subr.mxu0 0.0
    %3472 = vmatpush1.msra.mxu0 0.0
    %3473 = vmatprep.subr.mxu0 0.0
    %3474 = vmatpush1.msra.mxu0 0.0
    %3475 = vmatprep.subr.mxu0 0.0
    %3476 = vmatpush1.msra.mxu0 0.0
    %3477 = vmatprep.subr.mxu0 0.0
    %3478 = vmatpush1.msra.mxu0 0.0
    %3479 = vmatprep.subr.mxu0 0.0
    %3480 = vmatpush1.msra.mxu0 0.0
    %3481 = vmatprep.subr.mxu0 0.0
    %3482 = vmatpush1.msra.mxu0 0.0
    %3483 = vmatprep.subr.mxu0 0.0
    %3484 = vmatpush1.msra.mxu0 0.0
    %3485 = vmatprep.subr.mxu0 0.0
    %3486 = vmatpush1.msra.mxu0 0.0
    %3487 = vmatprep.subr.mxu0 0.0
    %3488 = vmatpush1.msra.mxu0 0.0
    %3489 = vmatprep.subr.mxu0 0.0
    %3490 = vmatpush1.msra.mxu0 0.0
    %3491 = vmatprep.subr.mxu0 0.0
    %3492 = vmatpush1.msra.mxu0 0.0
    %3493 = vmatprep.subr.mxu0 0.0
    %3494 = vmatpush1.msra.mxu0 0.0
    %3495 = vmatprep.subr.mxu0 0.0
    %3496 = vmatpush1.msra.mxu0 0.0
    %3497 = vmatprep.subr.mxu0 0.0
    %3498 = vmatpush1.msra.mxu0 0.0
    %3499 = vmatprep.subr.mxu0 0.0
    %3500 = vmatpush1.msra.mxu0 0.0
    %3501 = vmatprep.subr.mxu0 0.0
    %3502 = vmatpush1.msra.mxu0 0.0
    %3503 = vmatprep.subr.mxu0 0.0
    %3504 = vmatpush1.msra.mxu0 0.0
    %3505 = vmatprep.subr.mxu0 0.0
    %3506 = vmatpush1.msra.mxu0 0.0
    %3507 = vmatprep.subr.mxu0 0.0
    %3508 = vmatpush1.msra.mxu0 0.0
    %3509 = vmatprep.subr.mxu0 0.0
    %3510 = vmatpush1.msra.mxu0 0.0
    %3511 = vmatprep.subr.mxu0 0.0
    %3512 = vmatpush1.msra.mxu0 0.0
    %3513 = vmatprep.subr.mxu0 0.0
    %3514 = vmatpush1.msra.mxu0 0.0
    %3515 = vmatprep.subr.mxu0 0.0
    %3516 = vmatpush1.msra.mxu0 0.0
    %3517 = vmatprep.mubr.f32.mxu0 0.0
    %3518 = vmatmul.mubr.f32.gmra.mrb[0].mxu0 %v3451
    %v3519 = vpop.f32.mrb[0].mxu0
    %v3520 = vadd.f32 0.0, %v3519
    %v3521 = vpop.f32.mrb[0].mxu0
    %3522 = vdwg.mxu0
    %v3524 = vsel %vm1774, %v3009, 0
    %3526 = vmatprep.subr.mxu0 0.0
    %3527 = vmatpush1.msra.mxu0 %v85
    %3528 = vmatprep.subr.mxu0 0.0
    %3529 = vmatpush1.msra.mxu0 0.0
    %3530 = vmatprep.subr.mxu0 0.0
    %3531 = vmatpush1.msra.mxu0 0.0
    %3532 = vmatprep.subr.mxu0 0.0
    %3533 = vmatpush1.msra.mxu0 0.0
    %3534 = vmatprep.subr.mxu0 0.0
    %3535 = vmatpush1.msra.mxu0 0.0
    %3536 = vmatprep.subr.mxu0 0.0
    %3537 = vmatpush1.msra.mxu0 0.0
    %3538 = vmatprep.subr.mxu0 0.0
    %3539 = vmatpush1.msra.mxu0 0.0
    %3540 = vmatprep.subr.mxu0 0.0
    %3541 = vmatpush1.msra.mxu0 0.0
    %3542 = vmatprep.subr.mxu0 0.0
    %3543 = vmatpush1.msra.mxu0 0.0
    %3544 = vmatprep.subr.mxu0 0.0
    %3545 = vmatpush1.msra.mxu0 0.0
    %3546 = vmatprep.subr.mxu0 0.0
    %3547 = vmatpush1.msra.mxu0 0.0
    %3548 = vmatprep.subr.mxu0 0.0
    %3549 = vmatpush1.msra.mxu0 0.0
    %3550 = vmatprep.subr.mxu0 0.0
    %3551 = vmatpush1.msra.mxu0 0.0
    %3552 = vmatprep.subr.mxu0 0.0
    %3553 = vmatpush1.msra.mxu0 0.0
    %3554 = vmatprep.subr.mxu0 0.0
    %3555 = vmatpush1.msra.mxu0 0.0
    %3556 = vmatprep.subr.mxu0 0.0
    %3557 = vmatpush1.msra.mxu0 0.0
    %3558 = vmatprep.subr.mxu0 0.0
    %3559 = vmatpush1.msra.mxu0 0.0
    %3560 = vmatprep.subr.mxu0 0.0
    %3561 = vmatpush1.msra.mxu0 0.0
    %3562 = vmatprep.subr.mxu0 0.0
    %3563 = vmatpush1.msra.mxu0 0.0
    %3564 = vmatprep.subr.mxu0 0.0
    %3565 = vmatpush1.msra.mxu0 0.0
    %3566 = vmatprep.subr.mxu0 0.0
    %3567 = vmatpush1.msra.mxu0 0.0
    %3568 = vmatprep.subr.mxu0 0.0
    %3569 = vmatpush1.msra.mxu0 0.0
    %3570 = vmatprep.subr.mxu0 0.0
    %3571 = vmatpush1.msra.mxu0 0.0
    %3572 = vmatprep.subr.mxu0 0.0
    %3573 = vmatpush1.msra.mxu0 0.0
    %3574 = vmatprep.subr.mxu0 0.0
    %3575 = vmatpush1.msra.mxu0 0.0
    %3576 = vmatprep.subr.mxu0 0.0
    %3577 = vmatpush1.msra.mxu0 0.0
    %3578 = vmatprep.subr.mxu0 0.0
    %3579 = vmatpush1.msra.mxu0 0.0
    %3580 = vmatprep.subr.mxu0 0.0
    %3581 = vmatpush1.msra.mxu0 0.0
    %3582 = vmatprep.subr.mxu0 0.0
    %3583 = vmatpush1.msra.mxu0 0.0
    %3584 = vmatprep.subr.mxu0 0.0
    %3585 = vmatpush1.msra.mxu0 0.0
    %3586 = vmatprep.subr.mxu0 0.0
    %3587 = vmatpush1.msra.mxu0 0.0
    %3588 = vmatprep.subr.mxu0 0.0
    %3589 = vmatpush1.msra.mxu0 0.0
    %3590 = vmatprep.mubr.f32.mxu0 0.0
    %3591 = vmatmul.mubr.f32.gmra.mrb[0].mxu0 %v3524
    %v3592 = vpop.f32.mrb[0].mxu0
    %v3593 = vadd.f32 0.0, %v3592
    %v3594 = vpop.f32.mrb[0].mxu0
    %3595 = vdwg.mxu0
    %v3597 = vsel %vm1774, %v3082, 0
    %3599 = vmatprep.subr.mxu0 0.0
    %3600 = vmatpush1.msra.mxu0 %v86
    %3601 = vmatprep.subr.mxu0 0.0
    %3602 = vmatpush1.msra.mxu0 0.0
    %3603 = vmatprep.subr.mxu0 0.0
    %3604 = vmatpush1.msra.mxu0 0.0
    %3605 = vmatprep.subr.mxu0 0.0
    %3606 = vmatpush1.msra.mxu0 0.0
    %3607 = vmatprep.subr.mxu0 0.0
    %3608 = vmatpush1.msra.mxu0 0.0
    %3609 = vmatprep.subr.mxu0 0.0
    %3610 = vmatpush1.msra.mxu0 0.0
    %3611 = vmatprep.subr.mxu0 0.0
    %3612 = vmatpush1.msra.mxu0 0.0
    %3613 = vmatprep.subr.mxu0 0.0
    %3614 = vmatpush1.msra.mxu0 0.0
    %3615 = vmatprep.subr.mxu0 0.0
    %3616 = vmatpush1.msra.mxu0 0.0
    %3617 = vmatprep.subr.mxu0 0.0
    %3618 = vmatpush1.msra.mxu0 0.0
    %3619 = vmatprep.subr.mxu0 0.0
    %3620 = vmatpush1.msra.mxu0 0.0
    %3621 = vmatprep.subr.mxu0 0.0
    %3622 = vmatpush1.msra.mxu0 0.0
    %3623 = vmatprep.subr.mxu0 0.0
    %3624 = vmatpush1.msra.mxu0 0.0
    %3625 = vmatprep.subr.mxu0 0.0
    %3626 = vmatpush1.msra.mxu0 0.0
    %3627 = vmatprep.subr.mxu0 0.0
    %3628 = vmatpush1.msra.mxu0 0.0
    %3629 = vmatprep.subr.mxu0 0.0
    %3630 = vmatpush1.msra.mxu0 0.0
    %3631 = vmatprep.subr.mxu0 0.0
    %3632 = vmatpush1.msra.mxu0 0.0
    %3633 = vmatprep.subr.mxu0 0.0
    %3634 = vmatpush1.msra.mxu0 0.0
    %3635 = vmatprep.subr.mxu0 0.0
    %3636 = vmatpush1.msra.mxu0 0.0
    %3637 = vmatprep.subr.mxu0 0.0
    %3638 = vmatpush1.msra.mxu0 0.0
    %3639 = vmatprep.subr.mxu0 0.0
    %3640 = vmatpush1.msra.mxu0 0.0
    %3641 = vmatprep.subr.mxu0 0.0
    %3642 = vmatpush1.msra.mxu0 0.0
    %3643 = vmatprep.subr.mxu0 0.0
    %3644 = vmatpush1.msra.mxu0 0.0
    %3645 = vmatprep.subr.mxu0 0.0
    %3646 = vmatpush1.msra.mxu0 0.0
    %3647 = vmatprep.subr.mxu0 0.0
    %3648 = vmatpush1.msra.mxu0 0.0
    %3649 = vmatprep.subr.mxu0 0.0
    %3650 = vmatpush1.msra.mxu0 0.0
    %3651 = vmatprep.subr.mxu0 0.0
    %3652 = vmatpush1.msra.mxu0 0.0
    %3653 = vmatprep.subr.mxu0 0.0
    %3654 = vmatpush1.msra.mxu0 0.0
    %3655 = vmatprep.subr.mxu0 0.0
    %3656 = vmatpush1.msra.mxu0 0.0
    %3657 = vmatprep.subr.mxu0 0.0
    %3658 = vmatpush1.msra.mxu0 0.0
    %3659 = vmatprep.subr.mxu0 0.0
    %3660 = vmatpush1.msra.mxu0 0.0
    %3661 = vmatprep.subr.mxu0 0.0
    %3662 = vmatpush1.msra.mxu0 0.0
    %3663 = vmatprep.mubr.f32.mxu0 0.0
    %3664 = vmatmul.mubr.f32.gmra.mrb[0].mxu0 %v3597
    %v3665 = vpop.f32.mrb[0].mxu0
    %v3666 = vadd.f32 0.0, %v3665
    %v3667 = vpop.f32.mrb[0].mxu0
    %3668 = vdwg.mxu0
    %v3669 = vsel %vm87, %v3155, 0.0
    %v3670 = vsel %vm87, %v3228, 0.0
    %v3671 = vadd.f32 %v3669, %v3670
    %v3672 = vsel %vm87, %v3301, 0.0
    %v3673 = vadd.f32 %v3671, %v3672
    %v3674 = vsel %vm87, %v3374, 0.0
    %v3675 = vadd.f32 %v3673, %v3674
    %v3676 = vsel %vm87, %v3447, 0.0
    %v3677 = vsel %vm87, %v3520, 0.0
    %v3678 = vadd.f32 %v3676, %v3677
    %v3679 = vsel %vm87, %v3593, 0.0
    %v3680 = vadd.f32 %v3678, %v3679
    %v3681 = vsel %vm87, %v3666, 0.0
    %v3682 = vadd.f32 %v3680, %v3681
    %v3683 = vadd.f32 %v3675, %v33
    %v3684 = vadd.f32 %v3682, %v34
    %v3685 = vsel %vm87, %v3683, 0.0
    %3686 = vadd.xlane.f32.xlu0 %v3685
    %v3687 = vpop.xlane.xlu0 %3686
    %v3688 = vsel %vm87, %v3684, 0.0
    %3689 = vadd.xlane.f32.xlu0 %v3688
    %v3690 = vpop.xlane.xlu0 %3689
    %v3691 = vrcp.pop 32.0
    %v3692 = vmul.f32 %v3687, %v3691
    %v3693 = vmul.f32 %v3690, %v3691
    %v3694 = vsub.f32 %v3683, %v3692
    %v3695 = vsub.f32 %v3684, %v3693
    %v3696 = vmul.f32 %v3694, %v3694
    %v3697 = vmul.f32 %v3695, %v3695
    %v3698 = vsel %vm87, %v3696, 0.0
    %3699 = vadd.xlane.f32.xlu0 %v3698
    %v3700 = vpop.xlane.xlu0 %3699
    %v3701 = vsel %vm87, %v3697, 0.0
    %3702 = vadd.xlane.f32.xlu0 %v3701
    %v3703 = vpop.xlane.xlu0 %3702
    %v3704 = vmul.f32 %v3700, %v3691
    %v3705 = vmul.f32 %v3703, %v3691
    %v3706 = vadd.f32 %v3704, 1e-05
    %v3707 = vadd.f32 %v3705, 1e-05
    %v3708 = vrsqrt.pop %v3706
    %v3709 = vrsqrt.pop %v3707
    %v3710 = vmul.f32 %v3694, %v3708
    %v3711 = vmul.f32 %v3695, %v3709
    %v3712 = vld [vmem:[%s6] sm:$0xff]
    %v3713 = vld [vmem:[%s6 + $0x8] sm:$0xff]
    %v3714 = vld [vmem:[%s6 + $0x10] sm:$0xff]
    %v3715 = vld [vmem:[%s6 + $0x18] sm:$0xff]
    %v3717 = vsel %vm87, %v3710, 0
    %v3720 = vsel %vm87, %v3711, 0
    %3722 = vmatprep.subr.mxu0 0.0
    %3723 = vmatpush1.msra.mxu0 %v3712
    %3724 = vmatprep.subr.mxu0 0.0
    %3725 = vmatpush1.msra.mxu0 %v3713
    %3726 = vmatprep.subr.mxu0 0.0
    %3727 = vmatpush1.msra.mxu0 %v3714
    %3728 = vmatprep.subr.mxu0 0.0
    %3729 = vmatpush1.msra.mxu0 %v3715
    %3730 = vmatprep.subr.mxu0 0.0
    %3731 = vmatpush1.msra.mxu0 0.0
    %3732 = vmatprep.subr.mxu0 0.0
    %3733 = vmatpush1.msra.mxu0 0.0
    %3734 = vmatprep.subr.mxu0 0.0
    %3735 = vmatpush1.msra.mxu0 0.0
    %3736 = vmatprep.subr.mxu0 0.0
    %3737 = vmatpush1.msra.mxu0 0.0
    %3738 = vmatprep.subr.mxu0 0.0
    %3739 = vmatpush1.msra.mxu0 0.0
    %3740 = vmatprep.subr.mxu0 0.0
    %3741 = vmatpush1.msra.mxu0 0.0
    %3742 = vmatprep.subr.mxu0 0.0
    %3743 = vmatpush1.msra.mxu0 0.0
    %3744 = vmatprep.subr.mxu0 0.0
    %3745 = vmatpush1.msra.mxu0 0.0
    %3746 = vmatprep.subr.mxu0 0.0
    %3747 = vmatpush1.msra.mxu0 0.0
    %3748 = vmatprep.subr.mxu0 0.0
    %3749 = vmatpush1.msra.mxu0 0.0
    %3750 = vmatprep.subr.mxu0 0.0
    %3751 = vmatpush1.msra.mxu0 0.0
    %3752 = vmatprep.subr.mxu0 0.0
    %3753 = vmatpush1.msra.mxu0 0.0
    %3754 = vmatprep.subr.mxu0 0.0
    %3755 = vmatpush1.msra.mxu0 0.0
    %3756 = vmatprep.subr.mxu0 0.0
    %3757 = vmatpush1.msra.mxu0 0.0
    %3758 = vmatprep.subr.mxu0 0.0
    %3759 = vmatpush1.msra.mxu0 0.0
    %3760 = vmatprep.subr.mxu0 0.0
    %3761 = vmatpush1.msra.mxu0 0.0
    %3762 = vmatprep.subr.mxu0 0.0
    %3763 = vmatpush1.msra.mxu0 0.0
    %3764 = vmatprep.subr.mxu0 0.0
    %3765 = vmatpush1.msra.mxu0 0.0
    %3766 = vmatprep.subr.mxu0 0.0
    %3767 = vmatpush1.msra.mxu0 0.0
    %3768 = vmatprep.subr.mxu0 0.0
    %3769 = vmatpush1.msra.mxu0 0.0
    %3770 = vmatprep.subr.mxu0 0.0
    %3771 = vmatpush1.msra.mxu0 0.0
    %3772 = vmatprep.subr.mxu0 0.0
    %3773 = vmatpush1.msra.mxu0 0.0
    %3774 = vmatprep.subr.mxu0 0.0
    %3775 = vmatpush1.msra.mxu0 0.0
    %3776 = vmatprep.subr.mxu0 0.0
    %3777 = vmatpush1.msra.mxu0 0.0
    %3778 = vmatprep.subr.mxu0 0.0
    %3779 = vmatpush1.msra.mxu0 0.0
    %3780 = vmatprep.subr.mxu0 0.0
    %3781 = vmatpush1.msra.mxu0 0.0
    %3782 = vmatprep.subr.mxu0 0.0
    %3783 = vmatpush1.msra.mxu0 0.0
    %3784 = vmatprep.subr.mxu0 0.0
    %3785 = vmatpush1.msra.mxu0 0.0
    %3786 = vmatprep.mubr.f32.mxu0 0.0
    %3787 = vmatmul.mubr.f32.gmra.mrb[0].mxu0 %v3717
    %v3788 = vpop.f32.mrb[0].mxu0
    %v3789 = vadd.f32 0.0, %v3788
    %v3790 = vpop.f32.mrb[0].mxu0
    %3791 = vmatprep.mubr.f32.mxu0 0.0
    %3792 = vmatmul.mubr.f32.gmra.mrb[0].mxu0 %v3720
    %v3793 = vpop.f32.mrb[0].mxu0
    %v3794 = vadd.f32 0.0, %v3793
    %v3795 = vpop.f32.mrb[0].mxu0
    %3796 = vdwg.mxu0
    %v3797 = vmax.f32 %v3789, 0.0
    %v3798 = vmax.f32 %v3794, 0.0
    %v3799 = vld [vmem:[%s7] sm:$0xff]
    %v3800 = vld [vmem:[%s7 + $0x8] sm:$0xff]
    %v3801 = vld [vmem:[%s7 + $0x10] sm:$0xff]
    %v3802 = vld [vmem:[%s7 + $0x18] sm:$0xff]
    %v3803 = vld [vmem:[%s7 + $0x20] sm:$0xff]
    %v3804 = vld [vmem:[%s7 + $0x28] sm:$0xff]
    %v3805 = vld [vmem:[%s7 + $0x30] sm:$0xff]
    %v3806 = vld [vmem:[%s7 + $0x38] sm:$0xff]
    %vm3807 = vcmask 523264
    %v3809 = vsel %vm3807, %v3797, 0
    %v3812 = vsel %vm3807, %v3798, 0
    %3814 = vmatprep.subr.mxu0 0.0
    %3815 = vmatpush1.msra.mxu0 %v3799
    %3816 = vmatprep.subr.mxu0 0.0
    %3817 = vmatpush1.msra.mxu0 %v3800
    %3818 = vmatprep.subr.mxu0 0.0
    %3819 = vmatpush1.msra.mxu0 %v3801
    %3820 = vmatprep.subr.mxu0 0.0
    %3821 = vmatpush1.msra.mxu0 %v3802
    %3822 = vmatprep.subr.mxu0 0.0
    %3823 = vmatpush1.msra.mxu0 %v3803
    %3824 = vmatprep.subr.mxu0 0.0
    %3825 = vmatpush1.msra.mxu0 %v3804
    %3826 = vmatprep.subr.mxu0 0.0
    %3827 = vmatpush1.msra.mxu0 %v3805
    %3828 = vmatprep.subr.mxu0 0.0
    %3829 = vmatpush1.msra.mxu0 %v3806
    %3830 = vmatprep.subr.mxu0 0.0
    %3831 = vmatpush1.msra.mxu0 0.0
    %3832 = vmatprep.subr.mxu0 0.0
    %3833 = vmatpush1.msra.mxu0 0.0
    %3834 = vmatprep.subr.mxu0 0.0
    %3835 = vmatpush1.msra.mxu0 0.0
    %3836 = vmatprep.subr.mxu0 0.0
    %3837 = vmatpush1.msra.mxu0 0.0
    %3838 = vmatprep.subr.mxu0 0.0
    %3839 = vmatpush1.msra.mxu0 0.0
    %3840 = vmatprep.subr.mxu0 0.0
    %3841 = vmatpush1.msra.mxu0 0.0
    %3842 = vmatprep.subr.mxu0 0.0
    %3843 = vmatpush1.msra.mxu0 0.0
    %3844 = vmatprep.subr.mxu0 0.0
    %3845 = vmatpush1.msra.mxu0 0.0
    %3846 = vmatprep.subr.mxu0 0.0
    %3847 = vmatpush1.msra.mxu0 0.0
    %3848 = vmatprep.subr.mxu0 0.0
    %3849 = vmatpush1.msra.mxu0 0.0
    %3850 = vmatprep.subr.mxu0 0.0
    %3851 = vmatpush1.msra.mxu0 0.0
    %3852 = vmatprep.subr.mxu0 0.0
    %3853 = vmatpush1.msra.mxu0 0.0
    %3854 = vmatprep.subr.mxu0 0.0
    %3855 = vmatpush1.msra.mxu0 0.0
    %3856 = vmatprep.subr.mxu0 0.0
    %3857 = vmatpush1.msra.mxu0 0.0
    %3858 = vmatprep.subr.mxu0 0.0
    %3859 = vmatpush1.msra.mxu0 0.0
    %3860 = vmatprep.subr.mxu0 0.0
    %3861 = vmatpush1.msra.mxu0 0.0
    %3862 = vmatprep.subr.mxu0 0.0
    %3863 = vmatpush1.msra.mxu0 0.0
    %3864 = vmatprep.subr.mxu0 0.0
    %3865 = vmatpush1.msra.mxu0 0.0
    %3866 = vmatprep.subr.mxu0 0.0
    %3867 = vmatpush1.msra.mxu0 0.0
    %3868 = vmatprep.subr.mxu0 0.0
    %3869 = vmatpush1.msra.mxu0 0.0
    %3870 = vmatprep.subr.mxu0 0.0
    %3871 = vmatpush1.msra.mxu0 0.0
    %3872 = vmatprep.subr.mxu0 0.0
    %3873 = vmatpush1.msra.mxu0 0.0
    %3874 = vmatprep.subr.mxu0 0.0
    %3875 = vmatpush1.msra.mxu0 0.0
    %3876 = vmatprep.subr.mxu0 0.0
    %3877 = vmatpush1.msra.mxu0 0.0
    %3878 = vmatprep.mubr.f32.mxu0 0.0
    %3879 = vmatmul.mubr.f32.gmra.mrb[0].mxu0 %v3809
    %v3880 = vpop.f32.mrb[0].mxu0
    %v3881 = vadd.f32 %v3710, %v3880
    %v3882 = vpop.f32.mrb[0].mxu0
    %3883 = vmatprep.mubr.f32.mxu0 0.0
    %3884 = vmatmul.mubr.f32.gmra.mrb[0].mxu0 %v3812
    %v3885 = vpop.f32.mrb[0].mxu0
    %v3886 = vadd.f32 %v3711, %v3885
    %v3887 = vpop.f32.mrb[0].mxu0
    %3888 = vdwg.mxu0
    %v3889 = vsel %vm87, %v3881, 0.0
    %3890 = vadd.xlane.f32.xlu0 %v3889
    %v3891 = vpop.xlane.xlu0 %3890
    %v3892 = vsel %vm87, %v3886, 0.0
    %3893 = vadd.xlane.f32.xlu0 %v3892
    %v3894 = vpop.xlane.xlu0 %3893
    %v3895 = vmul.f32 %v3891, %v3691
    %v3896 = vmul.f32 %v3894, %v3691
    %v3897 = vsub.f32 %v3881, %v3895
    %v3898 = vsub.f32 %v3886, %v3896
    %v3899 = vmul.f32 %v3897, %v3897
    %v3900 = vmul.f32 %v3898, %v3898
    %v3901 = vsel %vm87, %v3899, 0.0
    %3902 = vadd.xlane.f32.xlu0 %v3901
    %v3903 = vpop.xlane.xlu0 %3902
    %v3904 = vsel %vm87, %v3900, 0.0
    %3905 = vadd.xlane.f32.xlu0 %v3904
    %v3906 = vpop.xlane.xlu0 %3905
    %v3907 = vmul.f32 %v3903, %v3691
    %v3908 = vmul.f32 %v3906, %v3691
    %v3909 = vadd.f32 %v3907, 1e-05
    %v3910 = vadd.f32 %v3908, 1e-05
    %v3911 = vrsqrt.pop %v3909
    %v3912 = vrsqrt.pop %v3910
    %v3913 = vmul.f32 %v3897, %v3911
    %v3914 = vmul.f32 %v3898, %v3912
    %3915 = vst.msk [vmem:[#allocation2] sm:$0xff] %vm87, %v3913
    %3916 = vst.msk [vmem:[#allocation2 + $0x8] sm:$0xff] %vm87, %v3914
    // Predicated region
    $region34: #{tpu_custom_call.1} parent=1 // pred_check
      _
    $region35: #{tpu_custom_call.1} parent=1 // pred_check_branch
      %3918 = sbr.rel (0) target = $region37
    $region36: #{tpu_custom_call.1} parent=1 // pred_region
      %s3920 = ssub.s32 256, 256
      %3921 = vsyncadd [#allocation3], %s3920
      %s3922 = sshll.u32 [#allocation2], 4
      %s3923 = int_to_ptr.vmem [resolvable:$true] %s3922
      %3928 = dma.vmem_to_hbm [thread:$0]  %s3923, 256, %s8, [#allocation3], 128, 128, 8
    $region37: #{tpu_custom_call.1} parent=1 // pred_fallthru
      _
    // Predicated region
    $region38: #{tpu_custom_call.1} parent=1 // pred_check
      _
    $region39: #{tpu_custom_call.1} parent=1 // pred_check_branch
      %3930 = sbr.rel (0) target = $region41
    $region40: #{tpu_custom_call.1} parent=1 // pred_region
      %s3932 = ssub.s32 1024, 1024
      %3933 = vsyncadd [#allocation5], %s3932
      %s3934 = sshll.u32 [#allocation4], 4
      %s3935 = int_to_ptr.vmem [resolvable:$true] %s3934
      %3940 = dma.vmem_to_hbm [thread:$0]  %s3935, 1024, %s9, [#allocation5], 128, 128, 8
    $region41: #{tpu_custom_call.1} parent=1 // pred_fallthru
      _
    // Predicated region
    $region42: #{tpu_custom_call.1} parent=1 // pred_check
      _
    $region43: #{tpu_custom_call.1} parent=1 // pred_check_branch
      %3942 = sbr.rel (0) target = $region45
    $region44: #{tpu_custom_call.1} parent=1 // pred_region
      %3943 = dma.done [#allocation3], 256
    $region45: #{tpu_custom_call.1} parent=1 // pred_fallthru
      _
    // Predicated region
    $region46: #{tpu_custom_call.1} parent=1 // pred_check
      _
    $region47: #{tpu_custom_call.1} parent=1 // pred_check_branch
      %3945 = sbr.rel (0) target = $region49
    $region48: #{tpu_custom_call.1} parent=1 // pred_region
      %3946 = dma.done [#allocation5], 1024
    $region49: #{tpu_custom_call.1} parent=1 // pred_fallthru
      _
    %3947 = vsyncpa [#allocation3], 1
    %3948 = vsyncpa [#allocation5], 1

</llo_original>
